<compile_context>
chip_gen: v7x
topology: tpu7x:2x2x1
jax: 0.10.0
libtpu: 0.0.40
codegen_flags: <defaults>
</compile_context>

<pallas_src>
import functools
import math

import jax
import jax.numpy as jnp
from jax import lax
from jax.experimental import pallas as pl
from jax.experimental.pallas import tpu as pltpu


# ------------------------------ fused kernel --------------------------------

def _layer_norm(x, g, b, eps=1e-5):
    mu = jnp.mean(x, axis=-1, keepdims=True)
    xc = x - mu
    var = jnp.mean(xc * xc, axis=-1, keepdims=True)
    return xc * lax.rsqrt(var + eps) * g + b


def _fused_transformer_kernel(
    ids_ref,                                   # SMEM scalar-prefetch: (B*S,) i32
    emb_ref, pe_ref, mask_ref,
    inpw_ref, inpb_ref, outw_ref, outb_ref,
    ln1g_ref, ln1b_ref, ff1w_ref, ff1b_ref, ff2w_ref, ff2b_ref,
    ln2g_ref, ln2b_ref,
    d1w_ref, d1b_ref, d2w_ref, d2b_ref,
    out_ref,
    x_scr,
    *, B, S, H, Dh):
    """One grid step == one TransformerEncoderLayer (post-norm, ReLU FFN).
    Embedding+PE build the activation slab on step 0; decoder + output softmax
    run on the last step.  Activations stay VMEM-resident in `x_scr`."""
    l = pl.program_id(0)
    D = H * Dh
    N = B * S
    scale = 1.0 / math.sqrt(Dh)

    # ---- step 0: embedding gather + positional encoding (batch-major rows) --
    @pl.when(l == 0)
    def _():
        rows = []
        for b in range(B):
            for s in range(S):
                tok = ids_ref[b * S + s]                       # SMEM scalar
                rows.append(emb_ref[pl.ds(tok, 1), :] + pe_ref[pl.ds(s, 1), :])
        x_scr[...] = jnp.concatenate(rows, axis=0)             # (N, D) f32

    x = x_scr[...]                                             # (N, D) f32
    xb = x.astype(jnp.bfloat16)
    mbias = mask_ref[...]                                      # (B, S) f32

    # ---- multi-head self-attention ------------------------------------------
    # Fused QKV projection: one (N, D)@(D, 3D) bf16 matmul, f32 accumulate.
    qkv = jnp.dot(xb, inpw_ref[0],
                  preferred_element_type=jnp.float32) + inpb_ref[0]   # (N, 3D)

    # TODO(synk): replace the unrolled (h, b) loops with a batched einsum over a
    # (B, S, Dh) view if B*H grows (keeps trace size / vreg live ranges bounded).
    head_ctx = []
    for h in range(H):
        q_h = qkv[:, h * Dh:(h + 1) * Dh]                      # (N, Dh)
        k_h = qkv[:, D + h * Dh:D + (h + 1) * Dh]
        v_h = qkv[:, 2 * D + h * Dh:2 * D + (h + 1) * Dh]
        batch_ctx = []
        for b in range(B):
            rows = slice(b * S, (b + 1) * S)                   # sublane-aligned
            sc = lax.dot_general(q_h[rows], k_h[rows], (((1,), (1,)), ((), ())),
                                 preferred_element_type=jnp.float32) * scale
            sc = sc + mbias[b:b + 1, :]                        # (1,S) key bias
            sc = sc - jnp.max(sc, axis=-1, keepdims=True)
            p = jnp.exp(sc)
            p = p * pl.reciprocal(jnp.sum(p, axis=-1, keepdims=True), approx=True)
            batch_ctx.append(jnp.dot(p, v_h[rows],
                                     preferred_element_type=jnp.float32))
        head_ctx.append(jnp.concatenate(batch_ctx, axis=0))    # (N, Dh)
    ctx = jnp.concatenate(head_ctx, axis=1)                    # (N, D), heads on lanes

    # Fused output projection: single K=D matmul.
    attn = jnp.dot(ctx.astype(jnp.bfloat16), outw_ref[0],
                   preferred_element_type=jnp.float32) + outb_ref[0]

    # ---- residual + LayerNorm 1 (post-norm) ----------------------------------
    x = _layer_norm(x + attn, ln1g_ref[0], ln1b_ref[0])

    # ---- feed-forward (ReLU), bf16 weights, f32 accumulation ------------------
    ff = jnp.dot(x.astype(jnp.bfloat16), ff1w_ref[0],
                 preferred_element_type=jnp.float32) + ff1b_ref[0]
    ff = jnp.maximum(ff, 0.0)
    ff = jnp.dot(ff.astype(jnp.bfloat16), ff2w_ref[0],
                 preferred_element_type=jnp.float32) + ff2b_ref[0]

    # ---- residual + LayerNorm 2 ----------------------------------------------
    x = _layer_norm(x + ff, ln2g_ref[0], ln2b_ref[0])
    x_scr[...] = x

    # ---- decoder (Linear -> GELU -> Linear) + softmax on the last layer ------
    @pl.when(l == pl.num_programs(0) - 1)
    def _():
        h1 = jnp.dot(x.astype(jnp.bfloat16), d1w_ref[...],
                     preferred_element_type=jnp.float32) + d1b_ref[...]
        h1 = 0.5 * h1 * (1.0 + lax.erf(h1 * (1.0 / math.sqrt(2.0))))   # exact GELU
        logits = jnp.dot(h1.astype(jnp.bfloat16), d2w_ref[...],
                         preferred_element_type=jnp.float32) + d2b_ref[...]
        logits = logits - jnp.max(logits, axis=-1, keepdims=True)
        e = jnp.exp(logits)
        out_ref[...] = e / jnp.sum(e, axis=-1, keepdims=True)   # exact normalize


# ------------------------------- model glue ---------------------------------

def transformer_forward(params, src_ids, key_padding_mask):
    """src_ids: (S, B) int32; key_padding_mask: (B, S) bool (True = padding)."""
    S, B = src_ids.shape
    D = params["d_model"]
    H = params["nhead"]
    Dh = D // H
    L = params["num_layers"]
    F = params["ff1_w"].shape[-1]
    V = params["vocab"]
    Vpad = params["dec2_w"].shape[1]
    N = B * S

    # Batch-major flat token ids (row i = (i//S)-th sequence, (i%S)-th position);
    # scalar-prefetched to SMEM — the gather/PE/transposes all run in-kernel.
    ids = src_ids.T.reshape(N).astype(jnp.int32)
    pe = params["pe"][:S, 0, :]                                # (S, D) f32
    mask_bias = jnp.where(key_padding_mask, -1e30, 0.0).astype(jnp.float32)  # (B,S)

    in_specs = [
        pl.BlockSpec((params["emb"].shape[0], D), lambda l, ids: (0, 0)),   # emb
        pl.BlockSpec((S, D), lambda l, ids: (0, 0)),                        # pe
        pl.BlockSpec((B, S), lambda l, ids: (0, 0)),                        # mask bias
        pl.BlockSpec((1, D, 3 * D), lambda l, ids: (l, 0, 0)),              # in_proj_w
        pl.BlockSpec((1, 1, 3 * D), lambda l, ids: (l, 0, 0)),              # in_proj_b
        pl.BlockSpec((1, D, D), lambda l, ids: (l, 0, 0)),                  # out_proj_w
        pl.BlockSpec((1, 1, D), lambda l, ids: (l, 0, 0)),                  # out_proj_b
        pl.BlockSpec((1, 1, D), lambda l, ids: (l, 0, 0)),                  # ln1_g
        pl.BlockSpec((1, 1, D), lambda l, ids: (l, 0, 0)),                  # ln1_b
        pl.BlockSpec((1, D, F), lambda l, ids: (l, 0, 0)),                  # ff1_w
        pl.BlockSpec((1, 1, F), lambda l, ids: (l, 0, 0)),                  # ff1_b
        pl.BlockSpec((1, F, D), lambda l, ids: (l, 0, 0)),                  # ff2_w
        pl.BlockSpec((1, 1, D), lambda l, ids: (l, 0, 0)),                  # ff2_b
        pl.BlockSpec((1, 1, D), lambda l, ids: (l, 0, 0)),                  # ln2_g
        pl.BlockSpec((1, 1, D), lambda l, ids: (l, 0, 0)),                  # ln2_b
        pl.BlockSpec((D, D), lambda l, ids: (0, 0)),                        # dec1_w
        pl.BlockSpec((1, D), lambda l, ids: (0, 0)),                        # dec1_b
        pl.BlockSpec((D, Vpad), lambda l, ids: (0, 0)),                     # dec2_w
        pl.BlockSpec((1, Vpad), lambda l, ids: (0, 0)),                     # dec2_b
    ]

    fused = pl.pallas_call(
        functools.partial(_fused_transformer_kernel, B=B, S=S, H=H, Dh=Dh),
        out_shape=jax.ShapeDtypeStruct((N, Vpad), jnp.float32),    # lane-dense
        grid_spec=pltpu.PrefetchScalarGridSpec(
            num_scalar_prefetch=1,
            grid=(L,),
            in_specs=in_specs,
            out_specs=pl.BlockSpec((N, Vpad), lambda l, ids: (0, 0)),
            scratch_shapes=[pltpu.VMEM((N, D), jnp.float32)],      # carried acts
        ),
        compiler_params=pltpu.CompilerParams(
            dimension_semantics=("arbitrary",),    # layer axis carries state
            vmem_limit_bytes=32 * 1024 * 1024,     # fits v7x scoped VMEM
        ),
    )

    out_pad = fused(
        ids,
        params["emb"], pe, mask_bias,
        params["in_proj_w"], params["in_proj_b"],
        params["out_proj_w"], params["out_proj_b"],
        params["ln1_g"], params["ln1_b"],
        params["ff1_w"], params["ff1_b"],
        params["ff2_w"], params["ff2_b"],
        params["ln2_g"], params["ln2_b"],
        params["dec1_w"], params["dec1_b"],
        params["dec2_w"], params["dec2_b"],
    )

    # (B*S, Vpad) -> (S, B, V), dropping the vocab lane-padding.
    return out_pad[:, :V].reshape(B, S, V).transpose(1, 0, 2)


# ---------------------------- deterministic init -----------------------------

def make_positional_encoding(d_model, max_len):
    position = jnp.arange(max_len, dtype=jnp.float32)[:, None]
    div_term = jnp.exp(jnp.arange(0, d_model, 2, dtype=jnp.float32)
                       * (-math.log(10000.0) / d_model))
    pe = jnp.zeros((max_len, 1, d_model), dtype=jnp.float32)
    pe = pe.at[:, 0, 0::2].set(jnp.sin(position * div_term))
    pe = pe.at[:, 0, 1::2].set(jnp.cos(position * div_term))
    return pe


def init_params(key, vocab, d_model, nhead, num_layers, dim_ff, max_len=64):
    keys = iter(jax.random.split(key, 16 + 8 * num_layers))

    def w(shape, scale=0.02, dtype=jnp.bfloat16):
        return (scale * jax.random.normal(next(keys), shape)).astype(dtype)

    vpad = max(128, ((vocab + 127) // 128) * 128)
    dec2_w = jnp.zeros((d_model, vpad), jnp.bfloat16).at[:, :vocab].set(
        w((d_model, vocab)))
    # padded vocab lanes get a -1e30 bias -> zero softmax mass, exact real probs.
    dec2_b = jnp.full((1, vpad), -1e30, jnp.float32).at[0, :vocab].set(0.0)

    return {
        "vocab": vocab, "d_model": d_model, "nhead": nhead,
        "num_layers": num_layers,
        "emb": w((vocab, d_model), dtype=jnp.float32),
        "pe": make_positional_encoding(d_model, max_len),
        "dec1_w": w((d_model, d_model)),
        "dec1_b": jnp.zeros((1, d_model), jnp.float32),
        "dec2_w": dec2_w,
        "dec2_b": dec2_b,
        # Stacked per-layer weights (bf16), laid out for full-width matmuls:
        # in_proj (L, D, 3D) with columns [q | k | v] and head-contiguous Dh
        # blocks inside each; out_proj (L, D, D) with rows = concat-head dim.
        "in_proj_w": w((num_layers, d_model, 3 * d_model)),
        "in_proj_b": jnp.zeros((num_layers, 1, 3 * d_model), jnp.float32),
        "out_proj_w": w((num_layers, d_model, d_model)),
        "out_proj_b": jnp.zeros((num_layers, 1, d_model), jnp.float32),
        "ff1_w": w((num_layers, d_model, dim_ff)),
        "ff1_b": jnp.zeros((num_layers, 1, dim_ff), jnp.float32),
        "ff2_w": w((num_layers, dim_ff, d_model)),
        "ff2_b": jnp.zeros((num_layers, 1, d_model), jnp.float32),
        "ln1_g": jnp.ones((num_layers, 1, d_model), jnp.float32),
        "ln1_b": jnp.zeros((num_layers, 1, d_model), jnp.float32),
        "ln2_g": jnp.ones((num_layers, 1, d_model), jnp.float32),
        "ln2_b": jnp.zeros((num_layers, 1, d_model), jnp.float32),
    }


# ----------------------------------- main ------------------------------------

if __name__ == "__main__":
    S, B = 8, 2                  # seq, batch (seq-first like PyTorch)
    VOCAB = 32                   # len(words_ids) stand-in
    D_MODEL, NHEAD = 64, 4       # module defaults
    NUM_LAYERS = 2               # kept small
    DIM_FF = 2048                # nn.TransformerEncoderLayer default

    key = jax.random.PRNGKey(0)
    k_param, k_src = jax.random.split(key)

    params = init_params(k_param, VOCAB, D_MODEL, NHEAD, NUM_LAYERS, DIM_FF)

    src = jax.random.randint(k_src, (S, B), 0, VOCAB, dtype=jnp.int32)
    # src_key_padding_mask: (B, S) bool, True = padding position
    mask = jnp.zeros((B, S), dtype=bool).at[1, 6:].set(True)

    fwd = jax.jit(functools.partial(transformer_forward, params))
    out = jax.block_until_ready(fwd(src, mask))

    assert out.shape == (S, B, VOCAB), out.shape
    assert bool(jnp.all(jnp.isfinite(out)))
    row_sums = jnp.sum(out, axis=-1)
    assert bool(jnp.allclose(row_sums, 1.0, atol=1e-4)), "softmax rows must sum to 1"

    print("KERNEL_OK")
</pallas_src>

<mosaic_0001>
module attributes {stable_mosaic.version = 11 : i64} {
  func.func @_fused_transformer_kernel(%arg0: i32, %arg1: memref<16xi32, #tpu.memory_space<smem>>, %arg2: memref<32x64xf32, #tpu.memory_space<vmem>>, %arg3: memref<8x64xf32, #tpu.memory_space<vmem>>, %arg4: memref<2x8xf32, #tpu.memory_space<vmem>>, %arg5: memref<1x64x192xbf16, #tpu.memory_space<vmem>>, %arg6: memref<1x1x192xf32, #tpu.memory_space<vmem>>, %arg7: memref<1x64x64xbf16, #tpu.memory_space<vmem>>, %arg8: memref<1x1x64xf32, #tpu.memory_space<vmem>>, %arg9: memref<1x1x64xf32, #tpu.memory_space<vmem>>, %arg10: memref<1x1x64xf32, #tpu.memory_space<vmem>>, %arg11: memref<1x64x2048xbf16, #tpu.memory_space<vmem>>, %arg12: memref<1x1x2048xf32, #tpu.memory_space<vmem>>, %arg13: memref<1x2048x64xbf16, #tpu.memory_space<vmem>>, %arg14: memref<1x1x64xf32, #tpu.memory_space<vmem>>, %arg15: memref<1x1x64xf32, #tpu.memory_space<vmem>>, %arg16: memref<1x1x64xf32, #tpu.memory_space<vmem>>, %arg17: memref<64x64xbf16, #tpu.memory_space<vmem>>, %arg18: memref<1x64xf32, #tpu.memory_space<vmem>>, %arg19: memref<64x128xbf16, #tpu.memory_space<vmem>>, %arg20: memref<1x128xf32, #tpu.memory_space<vmem>>, %arg21: memref<16x128xf32, #tpu.memory_space<vmem>>, %arg22: memref<16x64xf32, #tpu.memory_space<vmem>>) attributes {dimension_semantics = [#tpu.dimension_semantics<arbitrary>], iteration_bounds = array<i64: 2>, scalar_prefetch = 1 : i64, scratch_operands = 1 : i64, tpu.core_type = #tpu.core_type<tc>, window_params = [{pipeline_mode = #tpu.pipeline_mode<synchronous>, transform_indices = @transform_0, window_bounds = array<i64: 32, 64>}, {pipeline_mode = #tpu.pipeline_mode<synchronous>, transform_indices = @transform_1, window_bounds = array<i64: 8, 64>}, {pipeline_mode = #tpu.pipeline_mode<synchronous>, transform_indices = @transform_2, window_bounds = array<i64: 2, 8>}, {transform_indices = @transform_3, window_bounds = array<i64: 1, 64, 192>}, {transform_indices = @transform_4, window_bounds = array<i64: 1, 1, 192>}, {transform_indices = @transform_5, window_bounds = array<i64: 1, 64, 64>}, {transform_indices = @transform_6, window_bounds = array<i64: 1, 1, 64>}, {transform_indices = @transform_7, window_bounds = array<i64: 1, 1, 64>}, {transform_indices = @transform_8, window_bounds = array<i64: 1, 1, 64>}, {transform_indices = @transform_9, window_bounds = array<i64: 1, 64, 2048>}, {transform_indices = @transform_10, window_bounds = array<i64: 1, 1, 2048>}, {transform_indices = @transform_11, window_bounds = array<i64: 1, 2048, 64>}, {transform_indices = @transform_12, window_bounds = array<i64: 1, 1, 64>}, {transform_indices = @transform_13, window_bounds = array<i64: 1, 1, 64>}, {transform_indices = @transform_14, window_bounds = array<i64: 1, 1, 64>}, {pipeline_mode = #tpu.pipeline_mode<synchronous>, transform_indices = @transform_15, window_bounds = array<i64: 64, 64>}, {pipeline_mode = #tpu.pipeline_mode<synchronous>, transform_indices = @transform_16, window_bounds = array<i64: 1, 64>}, {pipeline_mode = #tpu.pipeline_mode<synchronous>, transform_indices = @transform_17, window_bounds = array<i64: 64, 128>}, {pipeline_mode = #tpu.pipeline_mode<synchronous>, transform_indices = @transform_18, window_bounds = array<i64: 1, 128>}, {pipeline_mode = #tpu.pipeline_mode<synchronous>, transform_indices = @transform_19, window_bounds = array<i64: 16, 128>}]} {
    %c0_i32 = arith.constant 0 : i32
    %0 = arith.cmpi eq, %arg0, %c0_i32 : i32
    %1 = arith.extui %0 : i1 to i32
    %c0_i32_0 = arith.constant 0 : i32
    %2 = arith.cmpi ne, %1, %c0_i32_0 : i32
    scf.if %2 {
      %c0_97 = arith.constant 0 : index
      %270 = memref.load %arg1[%c0_97] : memref<16xi32, #tpu.memory_space<smem>>
      %271 = arith.index_cast %270 : i32 to index
      %c0_98 = arith.constant 0 : index
      %272 = vector.load %arg2[%271, %c0_98] : memref<32x64xf32, #tpu.memory_space<vmem>>, vector<1x64xf32>
      %c0_99 = arith.constant 0 : index
      %c0_100 = arith.constant 0 : index
      %273 = vector.load %arg3[%c0_99, %c0_100] : memref<8x64xf32, #tpu.memory_space<vmem>>, vector<1x64xf32>
      %274 = arith.addf %272, %273 : vector<1x64xf32>
      %c1 = arith.constant 1 : index
      %275 = memref.load %arg1[%c1] : memref<16xi32, #tpu.memory_space<smem>>
      %276 = arith.index_cast %275 : i32 to index
      %c0_101 = arith.constant 0 : index
      %277 = vector.load %arg2[%276, %c0_101] : memref<32x64xf32, #tpu.memory_space<vmem>>, vector<1x64xf32>
      %c1_102 = arith.constant 1 : index
      %c0_103 = arith.constant 0 : index
      %278 = vector.load %arg3[%c1_102, %c0_103] : memref<8x64xf32, #tpu.memory_space<vmem>>, vector<1x64xf32>
      %279 = arith.addf %277, %278 : vector<1x64xf32>
      %c2 = arith.constant 2 : index
      %280 = memref.load %arg1[%c2] : memref<16xi32, #tpu.memory_space<smem>>
      %281 = arith.index_cast %280 : i32 to index
      %c0_104 = arith.constant 0 : index
      %282 = vector.load %arg2[%281, %c0_104] : memref<32x64xf32, #tpu.memory_space<vmem>>, vector<1x64xf32>
      %c2_105 = arith.constant 2 : index
      %c0_106 = arith.constant 0 : index
      %283 = vector.load %arg3[%c2_105, %c0_106] : memref<8x64xf32, #tpu.memory_space<vmem>>, vector<1x64xf32>
      %284 = arith.addf %282, %283 : vector<1x64xf32>
      %c3 = arith.constant 3 : index
      %285 = memref.load %arg1[%c3] : memref<16xi32, #tpu.memory_space<smem>>
      %286 = arith.index_cast %285 : i32 to index
      %c0_107 = arith.constant 0 : index
      %287 = vector.load %arg2[%286, %c0_107] : memref<32x64xf32, #tpu.memory_space<vmem>>, vector<1x64xf32>
      %c3_108 = arith.constant 3 : index
      %c0_109 = arith.constant 0 : index
      %288 = vector.load %arg3[%c3_108, %c0_109] : memref<8x64xf32, #tpu.memory_space<vmem>>, vector<1x64xf32>
      %289 = arith.addf %287, %288 : vector<1x64xf32>
      %c4 = arith.constant 4 : index
      %290 = memref.load %arg1[%c4] : memref<16xi32, #tpu.memory_space<smem>>
      %291 = arith.index_cast %290 : i32 to index
      %c0_110 = arith.constant 0 : index
      %292 = vector.load %arg2[%291, %c0_110] : memref<32x64xf32, #tpu.memory_space<vmem>>, vector<1x64xf32>
      %c4_111 = arith.constant 4 : index
      %c0_112 = arith.constant 0 : index
      %293 = vector.load %arg3[%c4_111, %c0_112] : memref<8x64xf32, #tpu.memory_space<vmem>>, vector<1x64xf32>
      %294 = arith.addf %292, %293 : vector<1x64xf32>
      %c5 = arith.constant 5 : index
      %295 = memref.load %arg1[%c5] : memref<16xi32, #tpu.memory_space<smem>>
      %296 = arith.index_cast %295 : i32 to index
      %c0_113 = arith.constant 0 : index
      %297 = vector.load %arg2[%296, %c0_113] : memref<32x64xf32, #tpu.memory_space<vmem>>, vector<1x64xf32>
      %c5_114 = arith.constant 5 : index
      %c0_115 = arith.constant 0 : index
      %298 = vector.load %arg3[%c5_114, %c0_115] : memref<8x64xf32, #tpu.memory_space<vmem>>, vector<1x64xf32>
      %299 = arith.addf %297, %298 : vector<1x64xf32>
      %c6 = arith.constant 6 : index
      %300 = memref.load %arg1[%c6] : memref<16xi32, #tpu.memory_space<smem>>
      %301 = arith.index_cast %300 : i32 to index
      %c0_116 = arith.constant 0 : index
      %302 = vector.load %arg2[%301, %c0_116] : memref<32x64xf32, #tpu.memory_space<vmem>>, vector<1x64xf32>
      %c6_117 = arith.constant 6 : index
      %c0_118 = arith.constant 0 : index
      %303 = vector.load %arg3[%c6_117, %c0_118] : memref<8x64xf32, #tpu.memory_space<vmem>>, vector<1x64xf32>
      %304 = arith.addf %302, %303 : vector<1x64xf32>
      %c7 = arith.constant 7 : index
      %305 = memref.load %arg1[%c7] : memref<16xi32, #tpu.memory_space<smem>>
      %306 = arith.index_cast %305 : i32 to index
      %c0_119 = arith.constant 0 : index
      %307 = vector.load %arg2[%306, %c0_119] : memref<32x64xf32, #tpu.memory_space<vmem>>, vector<1x64xf32>
      %c7_120 = arith.constant 7 : index
      %c0_121 = arith.constant 0 : index
      %308 = vector.load %arg3[%c7_120, %c0_121] : memref<8x64xf32, #tpu.memory_space<vmem>>, vector<1x64xf32>
      %309 = arith.addf %307, %308 : vector<1x64xf32>
      %c8 = arith.constant 8 : index
      %310 = memref.load %arg1[%c8] : memref<16xi32, #tpu.memory_space<smem>>
      %311 = arith.index_cast %310 : i32 to index
      %c0_122 = arith.constant 0 : index
      %312 = vector.load %arg2[%311, %c0_122] : memref<32x64xf32, #tpu.memory_space<vmem>>, vector<1x64xf32>
      %c0_123 = arith.constant 0 : index
      %c0_124 = arith.constant 0 : index
      %313 = vector.load %arg3[%c0_123, %c0_124] : memref<8x64xf32, #tpu.memory_space<vmem>>, vector<1x64xf32>
      %314 = arith.addf %312, %313 : vector<1x64xf32>
      %c9 = arith.constant 9 : index
      %315 = memref.load %arg1[%c9] : memref<16xi32, #tpu.memory_space<smem>>
      %316 = arith.index_cast %315 : i32 to index
      %c0_125 = arith.constant 0 : index
      %317 = vector.load %arg2[%316, %c0_125] : memref<32x64xf32, #tpu.memory_space<vmem>>, vector<1x64xf32>
      %c1_126 = arith.constant 1 : index
      %c0_127 = arith.constant 0 : index
      %318 = vector.load %arg3[%c1_126, %c0_127] : memref<8x64xf32, #tpu.memory_space<vmem>>, vector<1x64xf32>
      %319 = arith.addf %317, %318 : vector<1x64xf32>
      %c10 = arith.constant 10 : index
      %320 = memref.load %arg1[%c10] : memref<16xi32, #tpu.memory_space<smem>>
      %321 = arith.index_cast %320 : i32 to index
      %c0_128 = arith.constant 0 : index
      %322 = vector.load %arg2[%321, %c0_128] : memref<32x64xf32, #tpu.memory_space<vmem>>, vector<1x64xf32>
      %c2_129 = arith.constant 2 : index
      %c0_130 = arith.constant 0 : index
      %323 = vector.load %arg3[%c2_129, %c0_130] : memref<8x64xf32, #tpu.memory_space<vmem>>, vector<1x64xf32>
      %324 = arith.addf %322, %323 : vector<1x64xf32>
      %c11 = arith.constant 11 : index
      %325 = memref.load %arg1[%c11] : memref<16xi32, #tpu.memory_space<smem>>
      %326 = arith.index_cast %325 : i32 to index
      %c0_131 = arith.constant 0 : index
      %327 = vector.load %arg2[%326, %c0_131] : memref<32x64xf32, #tpu.memory_space<vmem>>, vector<1x64xf32>
      %c3_132 = arith.constant 3 : index
      %c0_133 = arith.constant 0 : index
      %328 = vector.load %arg3[%c3_132, %c0_133] : memref<8x64xf32, #tpu.memory_space<vmem>>, vector<1x64xf32>
      %329 = arith.addf %327, %328 : vector<1x64xf32>
      %c12 = arith.constant 12 : index
      %330 = memref.load %arg1[%c12] : memref<16xi32, #tpu.memory_space<smem>>
      %331 = arith.index_cast %330 : i32 to index
      %c0_134 = arith.constant 0 : index
      %332 = vector.load %arg2[%331, %c0_134] : memref<32x64xf32, #tpu.memory_space<vmem>>, vector<1x64xf32>
      %c4_135 = arith.constant 4 : index
      %c0_136 = arith.constant 0 : index
      %333 = vector.load %arg3[%c4_135, %c0_136] : memref<8x64xf32, #tpu.memory_space<vmem>>, vector<1x64xf32>
      %334 = arith.addf %332, %333 : vector<1x64xf32>
      %c13 = arith.constant 13 : index
      %335 = memref.load %arg1[%c13] : memref<16xi32, #tpu.memory_space<smem>>
      %336 = arith.index_cast %335 : i32 to index
      %c0_137 = arith.constant 0 : index
      %337 = vector.load %arg2[%336, %c0_137] : memref<32x64xf32, #tpu.memory_space<vmem>>, vector<1x64xf32>
      %c5_138 = arith.constant 5 : index
      %c0_139 = arith.constant 0 : index
      %338 = vector.load %arg3[%c5_138, %c0_139] : memref<8x64xf32, #tpu.memory_space<vmem>>, vector<1x64xf32>
      %339 = arith.addf %337, %338 : vector<1x64xf32>
      %c14 = arith.constant 14 : index
      %340 = memref.load %arg1[%c14] : memref<16xi32, #tpu.memory_space<smem>>
      %341 = arith.index_cast %340 : i32 to index
      %c0_140 = arith.constant 0 : index
      %342 = vector.load %arg2[%341, %c0_140] : memref<32x64xf32, #tpu.memory_space<vmem>>, vector<1x64xf32>
      %c6_141 = arith.constant 6 : index
      %c0_142 = arith.constant 0 : index
      %343 = vector.load %arg3[%c6_141, %c0_142] : memref<8x64xf32, #tpu.memory_space<vmem>>, vector<1x64xf32>
      %344 = arith.addf %342, %343 : vector<1x64xf32>
      %c15 = arith.constant 15 : index
      %345 = memref.load %arg1[%c15] : memref<16xi32, #tpu.memory_space<smem>>
      %346 = arith.index_cast %345 : i32 to index
      %c0_143 = arith.constant 0 : index
      %347 = vector.load %arg2[%346, %c0_143] : memref<32x64xf32, #tpu.memory_space<vmem>>, vector<1x64xf32>
      %c7_144 = arith.constant 7 : index
      %c0_145 = arith.constant 0 : index
      %348 = vector.load %arg3[%c7_144, %c0_145] : memref<8x64xf32, #tpu.memory_space<vmem>>, vector<1x64xf32>
      %349 = arith.addf %347, %348 : vector<1x64xf32>
      %350 = tpu.concatenate %274, %279, %284, %289, %294, %299, %304, %309, %314, %319, %324, %329, %334, %339, %344, %349 in 0 : vector<1x64xf32>, vector<1x64xf32>, vector<1x64xf32>, vector<1x64xf32>, vector<1x64xf32>, vector<1x64xf32>, vector<1x64xf32>, vector<1x64xf32>, vector<1x64xf32>, vector<1x64xf32>, vector<1x64xf32>, vector<1x64xf32>, vector<1x64xf32>, vector<1x64xf32>, vector<1x64xf32>, vector<1x64xf32> -> vector<16x64xf32>
      %c0_146 = arith.constant 0 : index
      %c0_147 = arith.constant 0 : index
      %351 = vector.load %arg22[%c0_146, %c0_147] : memref<16x64xf32, #tpu.memory_space<vmem>>, vector<16x64xf32>
      tpu.vector_store %arg22[%c0_146, %c0_147], %350 {strides = array<i32>} : memref<16x64xf32, #tpu.memory_space<vmem>>, vector<16x64xf32>,
    } else {
    }
    %c0 = arith.constant 0 : index
    %c0_1 = arith.constant 0 : index
    %3 = vector.load %arg22[%c0, %c0_1] : memref<16x64xf32, #tpu.memory_space<vmem>>, vector<16x64xf32>
    %4 = arith.truncf %3 : vector<16x64xf32> to vector<16x64xbf16>
    %c0_2 = arith.constant 0 : index
    %c0_3 = arith.constant 0 : index
    %5 = vector.load %arg4[%c0_2, %c0_3] : memref<2x8xf32, #tpu.memory_space<vmem>>, vector<2x8xf32>
    %c0_4 = arith.constant 0 : index
    %c0_5 = arith.constant 0 : index
    %c0_6 = arith.constant 0 : index
    %6 = vector.load %arg5[%c0_4, %c0_5, %c0_6] : memref<1x64x192xbf16, #tpu.memory_space<vmem>>, vector<1x64x192xbf16>
    %7 = vector.shape_cast %6 : vector<1x64x192xbf16> to vector<64x192xbf16>
    %cst = arith.constant dense<0.000000e+00> : vector<16x192xf32>
    %8 = tpu.matmul %4, %7, %cst {dimension_numbers = #tpu.dot_dimension_numbers<[1], [0], [0], [1], [0, 0, 1, 1], [], []>} : vector<16x64xbf16>, vector<64x192xbf16>, vector<16x192xf32> -> vector<16x192xf32>
    %c0_7 = arith.constant 0 : index
    %c0_8 = arith.constant 0 : index
    %c0_9 = arith.constant 0 : index
    %9 = vector.load %arg6[%c0_7, %c0_8, %c0_9] : memref<1x1x192xf32, #tpu.memory_space<vmem>>, vector<1x1x192xf32>
    %10 = vector.shape_cast %9 : vector<1x1x192xf32> to vector<1x192xf32>
    %11 = vector.broadcast %10 : vector<1x192xf32> to vector<16x192xf32>
    %12 = arith.addf %8, %11 : vector<16x192xf32>
    %13 = vector.extract_strided_slice %12 {offsets = [0, 0], sizes = [16, 16], strides = [1, 1]} : vector<16x192xf32> to vector<16x16xf32>
    %14 = vector.extract_strided_slice %12 {offsets = [0, 64], sizes = [16, 16], strides = [1, 1]} : vector<16x192xf32> to vector<16x16xf32>
    %15 = vector.extract_strided_slice %12 {offsets = [0, 128], sizes = [16, 16], strides = [1, 1]} : vector<16x192xf32> to vector<16x16xf32>
    %16 = vector.extract_strided_slice %13 {offsets = [0, 0], sizes = [8, 16], strides = [1, 1]} : vector<16x16xf32> to vector<8x16xf32>
    %17 = vector.extract_strided_slice %14 {offsets = [0, 0], sizes = [8, 16], strides = [1, 1]} : vector<16x16xf32> to vector<8x16xf32>
    %cst_10 = arith.constant dense<0.000000e+00> : vector<8x8xf32>
    %18 = tpu.matmul %16, %17, %cst_10 {dimension_numbers = #tpu.dot_dimension_numbers<[1], [1], [0], [0], [0, 0, 1, 0], [], []>} : vector<8x16xf32>, vector<8x16xf32>, vector<8x8xf32> -> vector<8x8xf32>
    %cst_11 = arith.constant 2.500000e-01 : f32
    %19 = vector.broadcast %cst_11 : f32 to vector<8x8xf32>
    %20 = arith.mulf %18, %19 : vector<8x8xf32>
    %21 = vector.extract_strided_slice %5 {offsets = [0, 0], sizes = [1, 8], strides = [1, 1]} : vector<2x8xf32> to vector<1x8xf32>
    %22 = vector.broadcast %21 : vector<1x8xf32> to vector<8x8xf32>
    %23 = arith.addf %20, %22 : vector<8x8xf32>
    %cst_12 = arith.constant dense<0xFF800000> : vector<8xf32>
    %24 = vector.multi_reduction <maximumf>, %23, %cst_12 [1] : vector<8x8xf32> to vector<8xf32>
    %25 = vector.shape_cast %24 : vector<8xf32> to vector<8x1xf32>
    %26 = vector.broadcast %25 : vector<8x1xf32> to vector<8x8xf32>
    %27 = arith.subf %23, %26 : vector<8x8xf32>
    %28 = math.exp %27 : vector<8x8xf32>
    %cst_13 = arith.constant dense<0.000000e+00> : vector<8xf32>
    %29 = vector.multi_reduction <add>, %28, %cst_13 [1] : vector<8x8xf32> to vector<8xf32>
    %30 = vector.shape_cast %29 : vector<8xf32> to vector<8x1xf32>
    %31 = tpu.reciprocal %30 {approx = true} : vector<8x1xf32> -> vector<8x1xf32>
    %32 = vector.broadcast %31 : vector<8x1xf32> to vector<8x8xf32>
    %33 = arith.mulf %28, %32 : vector<8x8xf32>
    %34 = vector.extract_strided_slice %15 {offsets = [0, 0], sizes = [8, 16], strides = [1, 1]} : vector<16x16xf32> to vector<8x16xf32>
    %cst_14 = arith.constant dense<0.000000e+00> : vector<8x16xf32>
    %35 = tpu.matmul %33, %34, %cst_14 {dimension_numbers = #tpu.dot_dimension_numbers<[1], [0], [0], [1], [0, 0, 1, 1], [], []>} : vector<8x8xf32>, vector<8x16xf32>, vector<8x16xf32> -> vector<8x16xf32>
    %36 = vector.extract_strided_slice %13 {offsets = [8, 0], sizes = [8, 16], strides = [1, 1]} : vector<16x16xf32> to vector<8x16xf32>
    %37 = vector.extract_strided_slice %14 {offsets = [8, 0], sizes = [8, 16], strides = [1, 1]} : vector<16x16xf32> to vector<8x16xf32>
    %cst_15 = arith.constant dense<0.000000e+00> : vector<8x8xf32>
    %38 = tpu.matmul %36, %37, %cst_15 {dimension_numbers = #tpu.dot_dimension_numbers<[1], [1], [0], [0], [0, 0, 1, 0], [], []>} : vector<8x16xf32>, vector<8x16xf32>, vector<8x8xf32> -> vector<8x8xf32>
    %cst_16 = arith.constant 2.500000e-01 : f32
    %39 = vector.broadcast %cst_16 : f32 to vector<8x8xf32>
    %40 = arith.mulf %38, %39 : vector<8x8xf32>
    %41 = vector.extract_strided_slice %5 {offsets = [1, 0], sizes = [1, 8], strides = [1, 1]} : vector<2x8xf32> to vector<1x8xf32>
    %42 = vector.broadcast %41 : vector<1x8xf32> to vector<8x8xf32>
    %43 = arith.addf %40, %42 : vector<8x8xf32>
    %cst_17 = arith.constant dense<0xFF800000> : vector<8xf32>
    %44 = vector.multi_reduction <maximumf>, %43, %cst_17 [1] : vector<8x8xf32> to vector<8xf32>
    %45 = vector.shape_cast %44 : vector<8xf32> to vector<8x1xf32>
    %46 = vector.broadcast %45 : vector<8x1xf32> to vector<8x8xf32>
    %47 = arith.subf %43, %46 : vector<8x8xf32>
    %48 = math.exp %47 : vector<8x8xf32>
    %cst_18 = arith.constant dense<0.000000e+00> : vector<8xf32>
    %49 = vector.multi_reduction <add>, %48, %cst_18 [1] : vector<8x8xf32> to vector<8xf32>
    %50 = vector.shape_cast %49 : vector<8xf32> to vector<8x1xf32>
    %51 = tpu.reciprocal %50 {approx = true} : vector<8x1xf32> -> vector<8x1xf32>
    %52 = vector.broadcast %51 : vector<8x1xf32> to vector<8x8xf32>
    %53 = arith.mulf %48, %52 : vector<8x8xf32>
    %54 = vector.extract_strided_slice %15 {offsets = [8, 0], sizes = [8, 16], strides = [1, 1]} : vector<16x16xf32> to vector<8x16xf32>
    %cst_19 = arith.constant dense<0.000000e+00> : vector<8x16xf32>
    %55 = tpu.matmul %53, %54, %cst_19 {dimension_numbers = #tpu.dot_dimension_numbers<[1], [0], [0], [1], [0, 0, 1, 1], [], []>} : vector<8x8xf32>, vector<8x16xf32>, vector<8x16xf32> -> vector<8x16xf32>
    %56 = tpu.concatenate %35, %55 in 0 : vector<8x16xf32>, vector<8x16xf32> -> vector<16x16xf32>
    %57 = vector.extract_strided_slice %12 {offsets = [0, 16], sizes = [16, 16], strides = [1, 1]} : vector<16x192xf32> to vector<16x16xf32>
    %58 = vector.extract_strided_slice %12 {offsets = [0, 80], sizes = [16, 16], strides = [1, 1]} : vector<16x192xf32> to vector<16x16xf32>
    %59 = vector.extract_strided_slice %12 {offsets = [0, 144], sizes = [16, 16], strides = [1, 1]} : vector<16x192xf32> to vector<16x16xf32>
    %60 = vector.extract_strided_slice %57 {offsets = [0, 0], sizes = [8, 16], strides = [1, 1]} : vector<16x16xf32> to vector<8x16xf32>
    %61 = vector.extract_strided_slice %58 {offsets = [0, 0], sizes = [8, 16], strides = [1, 1]} : vector<16x16xf32> to vector<8x16xf32>
    %cst_20 = arith.constant dense<0.000000e+00> : vector<8x8xf32>
    %62 = tpu.matmul %60, %61, %cst_20 {dimension_numbers = #tpu.dot_dimension_numbers<[1], [1], [0], [0], [0, 0, 1, 0], [], []>} : vector<8x16xf32>, vector<8x16xf32>, vector<8x8xf32> -> vector<8x8xf32>
    %cst_21 = arith.constant 2.500000e-01 : f32
    %63 = vector.broadcast %cst_21 : f32 to vector<8x8xf32>
    %64 = arith.mulf %62, %63 : vector<8x8xf32>
    %65 = vector.extract_strided_slice %5 {offsets = [0, 0], sizes = [1, 8], strides = [1, 1]} : vector<2x8xf32> to vector<1x8xf32>
    %66 = vector.broadcast %65 : vector<1x8xf32> to vector<8x8xf32>
    %67 = arith.addf %64, %66 : vector<8x8xf32>
    %cst_22 = arith.constant dense<0xFF800000> : vector<8xf32>
    %68 = vector.multi_reduction <maximumf>, %67, %cst_22 [1] : vector<8x8xf32> to vector<8xf32>
    %69 = vector.shape_cast %68 : vector<8xf32> to vector<8x1xf32>
    %70 = vector.broadcast %69 : vector<8x1xf32> to vector<8x8xf32>
    %71 = arith.subf %67, %70 : vector<8x8xf32>
    %72 = math.exp %71 : vector<8x8xf32>
    %cst_23 = arith.constant dense<0.000000e+00> : vector<8xf32>
    %73 = vector.multi_reduction <add>, %72, %cst_23 [1] : vector<8x8xf32> to vector<8xf32>
    %74 = vector.shape_cast %73 : vector<8xf32> to vector<8x1xf32>
    %75 = tpu.reciprocal %74 {approx = true} : vector<8x1xf32> -> vector<8x1xf32>
    %76 = vector.broadcast %75 : vector<8x1xf32> to vector<8x8xf32>
    %77 = arith.mulf %72, %76 : vector<8x8xf32>
    %78 = vector.extract_strided_slice %59 {offsets = [0, 0], sizes = [8, 16], strides = [1, 1]} : vector<16x16xf32> to vector<8x16xf32>
    %cst_24 = arith.constant dense<0.000000e+00> : vector<8x16xf32>
    %79 = tpu.matmul %77, %78, %cst_24 {dimension_numbers = #tpu.dot_dimension_numbers<[1], [0], [0], [1], [0, 0, 1, 1], [], []>} : vector<8x8xf32>, vector<8x16xf32>, vector<8x16xf32> -> vector<8x16xf32>
    %80 = vector.extract_strided_slice %57 {offsets = [8, 0], sizes = [8, 16], strides = [1, 1]} : vector<16x16xf32> to vector<8x16xf32>
    %81 = vector.extract_strided_slice %58 {offsets = [8, 0], sizes = [8, 16], strides = [1, 1]} : vector<16x16xf32> to vector<8x16xf32>
    %cst_25 = arith.constant dense<0.000000e+00> : vector<8x8xf32>
    %82 = tpu.matmul %80, %81, %cst_25 {dimension_numbers = #tpu.dot_dimension_numbers<[1], [1], [0], [0], [0, 0, 1, 0], [], []>} : vector<8x16xf32>, vector<8x16xf32>, vector<8x8xf32> -> vector<8x8xf32>
    %cst_26 = arith.constant 2.500000e-01 : f32
    %83 = vector.broadcast %cst_26 : f32 to vector<8x8xf32>
    %84 = arith.mulf %82, %83 : vector<8x8xf32>
    %85 = vector.extract_strided_slice %5 {offsets = [1, 0], sizes = [1, 8], strides = [1, 1]} : vector<2x8xf32> to vector<1x8xf32>
    %86 = vector.broadcast %85 : vector<1x8xf32> to vector<8x8xf32>
    %87 = arith.addf %84, %86 : vector<8x8xf32>
    %cst_27 = arith.constant dense<0xFF800000> : vector<8xf32>
    %88 = vector.multi_reduction <maximumf>, %87, %cst_27 [1] : vector<8x8xf32> to vector<8xf32>
    %89 = vector.shape_cast %88 : vector<8xf32> to vector<8x1xf32>
    %90 = vector.broadcast %89 : vector<8x1xf32> to vector<8x8xf32>
    %91 = arith.subf %87, %90 : vector<8x8xf32>
    %92 = math.exp %91 : vector<8x8xf32>
    %cst_28 = arith.constant dense<0.000000e+00> : vector<8xf32>
    %93 = vector.multi_reduction <add>, %92, %cst_28 [1] : vector<8x8xf32> to vector<8xf32>
    %94 = vector.shape_cast %93 : vector<8xf32> to vector<8x1xf32>
    %95 = tpu.reciprocal %94 {approx = true} : vector<8x1xf32> -> vector<8x1xf32>
    %96 = vector.broadcast %95 : vector<8x1xf32> to vector<8x8xf32>
    %97 = arith.mulf %92, %96 : vector<8x8xf32>
    %98 = vector.extract_strided_slice %59 {offsets = [8, 0], sizes = [8, 16], strides = [1, 1]} : vector<16x16xf32> to vector<8x16xf32>
    %cst_29 = arith.constant dense<0.000000e+00> : vector<8x16xf32>
    %99 = tpu.matmul %97, %98, %cst_29 {dimension_numbers = #tpu.dot_dimension_numbers<[1], [0], [0], [1], [0, 0, 1, 1], [], []>} : vector<8x8xf32>, vector<8x16xf32>, vector<8x16xf32> -> vector<8x16xf32>
    %100 = tpu.concatenate %79, %99 in 0 : vector<8x16xf32>, vector<8x16xf32> -> vector<16x16xf32>
    %101 = vector.extract_strided_slice %12 {offsets = [0, 32], sizes = [16, 16], strides = [1, 1]} : vector<16x192xf32> to vector<16x16xf32>
    %102 = vector.extract_strided_slice %12 {offsets = [0, 96], sizes = [16, 16], strides = [1, 1]} : vector<16x192xf32> to vector<16x16xf32>
    %103 = vector.extract_strided_slice %12 {offsets = [0, 160], sizes = [16, 16], strides = [1, 1]} : vector<16x192xf32> to vector<16x16xf32>
    %104 = vector.extract_strided_slice %101 {offsets = [0, 0], sizes = [8, 16], strides = [1, 1]} : vector<16x16xf32> to vector<8x16xf32>
    %105 = vector.extract_strided_slice %102 {offsets = [0, 0], sizes = [8, 16], strides = [1, 1]} : vector<16x16xf32> to vector<8x16xf32>
    %cst_30 = arith.constant dense<0.000000e+00> : vector<8x8xf32>
    %106 = tpu.matmul %104, %105, %cst_30 {dimension_numbers = #tpu.dot_dimension_numbers<[1], [1], [0], [0], [0, 0, 1, 0], [], []>} : vector<8x16xf32>, vector<8x16xf32>, vector<8x8xf32> -> vector<8x8xf32>
    %cst_31 = arith.constant 2.500000e-01 : f32
    %107 = vector.broadcast %cst_31 : f32 to vector<8x8xf32>
    %108 = arith.mulf %106, %107 : vector<8x8xf32>
    %109 = vector.extract_strided_slice %5 {offsets = [0, 0], sizes = [1, 8], strides = [1, 1]} : vector<2x8xf32> to vector<1x8xf32>
    %110 = vector.broadcast %109 : vector<1x8xf32> to vector<8x8xf32>
    %111 = arith.addf %108, %110 : vector<8x8xf32>
    %cst_32 = arith.constant dense<0xFF800000> : vector<8xf32>
    %112 = vector.multi_reduction <maximumf>, %111, %cst_32 [1] : vector<8x8xf32> to vector<8xf32>
    %113 = vector.shape_cast %112 : vector<8xf32> to vector<8x1xf32>
    %114 = vector.broadcast %113 : vector<8x1xf32> to vector<8x8xf32>
    %115 = arith.subf %111, %114 : vector<8x8xf32>
    %116 = math.exp %115 : vector<8x8xf32>
    %cst_33 = arith.constant dense<0.000000e+00> : vector<8xf32>
    %117 = vector.multi_reduction <add>, %116, %cst_33 [1] : vector<8x8xf32> to vector<8xf32>
    %118 = vector.shape_cast %117 : vector<8xf32> to vector<8x1xf32>
    %119 = tpu.reciprocal %118 {approx = true} : vector<8x1xf32> -> vector<8x1xf32>
    %120 = vector.broadcast %119 : vector<8x1xf32> to vector<8x8xf32>
    %121 = arith.mulf %116, %120 : vector<8x8xf32>
    %122 = vector.extract_strided_slice %103 {offsets = [0, 0], sizes = [8, 16], strides = [1, 1]} : vector<16x16xf32> to vector<8x16xf32>
    %cst_34 = arith.constant dense<0.000000e+00> : vector<8x16xf32>
    %123 = tpu.matmul %121, %122, %cst_34 {dimension_numbers = #tpu.dot_dimension_numbers<[1], [0], [0], [1], [0, 0, 1, 1], [], []>} : vector<8x8xf32>, vector<8x16xf32>, vector<8x16xf32> -> vector<8x16xf32>
    %124 = vector.extract_strided_slice %101 {offsets = [8, 0], sizes = [8, 16], strides = [1, 1]} : vector<16x16xf32> to vector<8x16xf32>
    %125 = vector.extract_strided_slice %102 {offsets = [8, 0], sizes = [8, 16], strides = [1, 1]} : vector<16x16xf32> to vector<8x16xf32>
    %cst_35 = arith.constant dense<0.000000e+00> : vector<8x8xf32>
    %126 = tpu.matmul %124, %125, %cst_35 {dimension_numbers = #tpu.dot_dimension_numbers<[1], [1], [0], [0], [0, 0, 1, 0], [], []>} : vector<8x16xf32>, vector<8x16xf32>, vector<8x8xf32> -> vector<8x8xf32>
    %cst_36 = arith.constant 2.500000e-01 : f32
    %127 = vector.broadcast %cst_36 : f32 to vector<8x8xf32>
    %128 = arith.mulf %126, %127 : vector<8x8xf32>
    %129 = vector.extract_strided_slice %5 {offsets = [1, 0], sizes = [1, 8], strides = [1, 1]} : vector<2x8xf32> to vector<1x8xf32>
    %130 = vector.broadcast %129 : vector<1x8xf32> to vector<8x8xf32>
    %131 = arith.addf %128, %130 : vector<8x8xf32>
    %cst_37 = arith.constant dense<0xFF800000> : vector<8xf32>
    %132 = vector.multi_reduction <maximumf>, %131, %cst_37 [1] : vector<8x8xf32> to vector<8xf32>
    %133 = vector.shape_cast %132 : vector<8xf32> to vector<8x1xf32>
    %134 = vector.broadcast %133 : vector<8x1xf32> to vector<8x8xf32>
    %135 = arith.subf %131, %134 : vector<8x8xf32>
    %136 = math.exp %135 : vector<8x8xf32>
    %cst_38 = arith.constant dense<0.000000e+00> : vector<8xf32>
    %137 = vector.multi_reduction <add>, %136, %cst_38 [1] : vector<8x8xf32> to vector<8xf32>
    %138 = vector.shape_cast %137 : vector<8xf32> to vector<8x1xf32>
    %139 = tpu.reciprocal %138 {approx = true} : vector<8x1xf32> -> vector<8x1xf32>
    %140 = vector.broadcast %139 : vector<8x1xf32> to vector<8x8xf32>
    %141 = arith.mulf %136, %140 : vector<8x8xf32>
    %142 = vector.extract_strided_slice %103 {offsets = [8, 0], sizes = [8, 16], strides = [1, 1]} : vector<16x16xf32> to vector<8x16xf32>
    %cst_39 = arith.constant dense<0.000000e+00> : vector<8x16xf32>
    %143 = tpu.matmul %141, %142, %cst_39 {dimension_numbers = #tpu.dot_dimension_numbers<[1], [0], [0], [1], [0, 0, 1, 1], [], []>} : vector<8x8xf32>, vector<8x16xf32>, vector<8x16xf32> -> vector<8x16xf32>
    %144 = tpu.concatenate %123, %143 in 0 : vector<8x16xf32>, vector<8x16xf32> -> vector<16x16xf32>
    %145 = vector.extract_strided_slice %12 {offsets = [0, 48], sizes = [16, 16], strides = [1, 1]} : vector<16x192xf32> to vector<16x16xf32>
    %146 = vector.extract_strided_slice %12 {offsets = [0, 112], sizes = [16, 16], strides = [1, 1]} : vector<16x192xf32> to vector<16x16xf32>
    %147 = vector.extract_strided_slice %12 {offsets = [0, 176], sizes = [16, 16], strides = [1, 1]} : vector<16x192xf32> to vector<16x16xf32>
    %148 = vector.extract_strided_slice %145 {offsets = [0, 0], sizes = [8, 16], strides = [1, 1]} : vector<16x16xf32> to vector<8x16xf32>
    %149 = vector.extract_strided_slice %146 {offsets = [0, 0], sizes = [8, 16], strides = [1, 1]} : vector<16x16xf32> to vector<8x16xf32>
    %cst_40 = arith.constant dense<0.000000e+00> : vector<8x8xf32>
    %150 = tpu.matmul %148, %149, %cst_40 {dimension_numbers = #tpu.dot_dimension_numbers<[1], [1], [0], [0], [0, 0, 1, 0], [], []>} : vector<8x16xf32>, vector<8x16xf32>, vector<8x8xf32> -> vector<8x8xf32>
    %cst_41 = arith.constant 2.500000e-01 : f32
    %151 = vector.broadcast %cst_41 : f32 to vector<8x8xf32>
    %152 = arith.mulf %150, %151 : vector<8x8xf32>
    %153 = vector.extract_strided_slice %5 {offsets = [0, 0], sizes = [1, 8], strides = [1, 1]} : vector<2x8xf32> to vector<1x8xf32>
    %154 = vector.broadcast %153 : vector<1x8xf32> to vector<8x8xf32>
    %155 = arith.addf %152, %154 : vector<8x8xf32>
    %cst_42 = arith.constant dense<0xFF800000> : vector<8xf32>
    %156 = vector.multi_reduction <maximumf>, %155, %cst_42 [1] : vector<8x8xf32> to vector<8xf32>
    %157 = vector.shape_cast %156 : vector<8xf32> to vector<8x1xf32>
    %158 = vector.broadcast %157 : vector<8x1xf32> to vector<8x8xf32>
    %159 = arith.subf %155, %158 : vector<8x8xf32>
    %160 = math.exp %159 : vector<8x8xf32>
    %cst_43 = arith.constant dense<0.000000e+00> : vector<8xf32>
    %161 = vector.multi_reduction <add>, %160, %cst_43 [1] : vector<8x8xf32> to vector<8xf32>
    %162 = vector.shape_cast %161 : vector<8xf32> to vector<8x1xf32>
    %163 = tpu.reciprocal %162 {approx = true} : vector<8x1xf32> -> vector<8x1xf32>
    %164 = vector.broadcast %163 : vector<8x1xf32> to vector<8x8xf32>
    %165 = arith.mulf %160, %164 : vector<8x8xf32>
    %166 = vector.extract_strided_slice %147 {offsets = [0, 0], sizes = [8, 16], strides = [1, 1]} : vector<16x16xf32> to vector<8x16xf32>
    %cst_44 = arith.constant dense<0.000000e+00> : vector<8x16xf32>
    %167 = tpu.matmul %165, %166, %cst_44 {dimension_numbers = #tpu.dot_dimension_numbers<[1], [0], [0], [1], [0, 0, 1, 1], [], []>} : vector<8x8xf32>, vector<8x16xf32>, vector<8x16xf32> -> vector<8x16xf32>
    %168 = vector.extract_strided_slice %145 {offsets = [8, 0], sizes = [8, 16], strides = [1, 1]} : vector<16x16xf32> to vector<8x16xf32>
    %169 = vector.extract_strided_slice %146 {offsets = [8, 0], sizes = [8, 16], strides = [1, 1]} : vector<16x16xf32> to vector<8x16xf32>
    %cst_45 = arith.constant dense<0.000000e+00> : vector<8x8xf32>
    %170 = tpu.matmul %168, %169, %cst_45 {dimension_numbers = #tpu.dot_dimension_numbers<[1], [1], [0], [0], [0, 0, 1, 0], [], []>} : vector<8x16xf32>, vector<8x16xf32>, vector<8x8xf32> -> vector<8x8xf32>
    %cst_46 = arith.constant 2.500000e-01 : f32
    %171 = vector.broadcast %cst_46 : f32 to vector<8x8xf32>
    %172 = arith.mulf %170, %171 : vector<8x8xf32>
    %173 = vector.extract_strided_slice %5 {offsets = [1, 0], sizes = [1, 8], strides = [1, 1]} : vector<2x8xf32> to vector<1x8xf32>
    %174 = vector.broadcast %173 : vector<1x8xf32> to vector<8x8xf32>
    %175 = arith.addf %172, %174 : vector<8x8xf32>
    %cst_47 = arith.constant dense<0xFF800000> : vector<8xf32>
    %176 = vector.multi_reduction <maximumf>, %175, %cst_47 [1] : vector<8x8xf32> to vector<8xf32>
    %177 = vector.shape_cast %176 : vector<8xf32> to vector<8x1xf32>
    %178 = vector.broadcast %177 : vector<8x1xf32> to vector<8x8xf32>
    %179 = arith.subf %175, %178 : vector<8x8xf32>
    %180 = math.exp %179 : vector<8x8xf32>
    %cst_48 = arith.constant dense<0.000000e+00> : vector<8xf32>
    %181 = vector.multi_reduction <add>, %180, %cst_48 [1] : vector<8x8xf32> to vector<8xf32>
    %182 = vector.shape_cast %181 : vector<8xf32> to vector<8x1xf32>
    %183 = tpu.reciprocal %182 {approx = true} : vector<8x1xf32> -> vector<8x1xf32>
    %184 = vector.broadcast %183 : vector<8x1xf32> to vector<8x8xf32>
    %185 = arith.mulf %180, %184 : vector<8x8xf32>
    %186 = vector.extract_strided_slice %147 {offsets = [8, 0], sizes = [8, 16], strides = [1, 1]} : vector<16x16xf32> to vector<8x16xf32>
    %cst_49 = arith.constant dense<0.000000e+00> : vector<8x16xf32>
    %187 = tpu.matmul %185, %186, %cst_49 {dimension_numbers = #tpu.dot_dimension_numbers<[1], [0], [0], [1], [0, 0, 1, 1], [], []>} : vector<8x8xf32>, vector<8x16xf32>, vector<8x16xf32> -> vector<8x16xf32>
    %188 = tpu.concatenate %167, %187 in 0 : vector<8x16xf32>, vector<8x16xf32> -> vector<16x16xf32>
    %189 = tpu.concatenate %56, %100, %144, %188 in 1 : vector<16x16xf32>, vector<16x16xf32>, vector<16x16xf32>, vector<16x16xf32> -> vector<16x64xf32>
    %190 = arith.truncf %189 : vector<16x64xf32> to vector<16x64xbf16>
    %c0_50 = arith.constant 0 : index
    %c0_51 = arith.constant 0 : index
    %c0_52 = arith.constant 0 : index
    %191 = vector.load %arg7[%c0_50, %c0_51, %c0_52] : memref<1x64x64xbf16, #tpu.memory_space<vmem>>, vector<1x64x64xbf16>
    %192 = vector.shape_cast %191 : vector<1x64x64xbf16> to vector<64x64xbf16>
    %cst_53 = arith.constant dense<0.000000e+00> : vector<16x64xf32>
    %193 = tpu.matmul %190, %192, %cst_53 {dimension_numbers = #tpu.dot_dimension_numbers<[1], [0], [0], [1], [0, 0, 1, 1], [], []>} : vector<16x64xbf16>, vector<64x64xbf16>, vector<16x64xf32> -> vector<16x64xf32>
    %c0_54 = arith.constant 0 : index
    %c0_55 = arith.constant 0 : index
    %c0_56 = arith.constant 0 : index
    %194 = vector.load %arg8[%c0_54, %c0_55, %c0_56] : memref<1x1x64xf32, #tpu.memory_space<vmem>>, vector<1x1x64xf32>
    %195 = vector.shape_cast %194 : vector<1x1x64xf32> to vector<1x64xf32>
    %196 = vector.broadcast %195 : vector<1x64xf32> to vector<16x64xf32>
    %197 = arith.addf %193, %196 : vector<16x64xf32>
    %198 = arith.addf %3, %197 : vector<16x64xf32>
    %c0_57 = arith.constant 0 : index
    %c0_58 = arith.constant 0 : index
    %c0_59 = arith.constant 0 : index
    %199 = vector.load %arg9[%c0_57, %c0_58, %c0_59] : memref<1x1x64xf32, #tpu.memory_space<vmem>>, vector<1x1x64xf32>
    %200 = vector.shape_cast %199 : vector<1x1x64xf32> to vector<1x64xf32>
    %c0_60 = arith.constant 0 : index
    %c0_61 = arith.constant 0 : index
    %c0_62 = arith.constant 0 : index
    %201 = vector.load %arg10[%c0_60, %c0_61, %c0_62] : memref<1x1x64xf32, #tpu.memory_space<vmem>>, vector<1x1x64xf32>
    %202 = vector.shape_cast %201 : vector<1x1x64xf32> to vector<1x64xf32>
    %cst_63 = arith.constant dense<0.000000e+00> : vector<16xf32>
    %203 = vector.multi_reduction <add>, %198, %cst_63 [1] : vector<16x64xf32> to vector<16xf32>
    %204 = vector.shape_cast %203 : vector<16xf32> to vector<16x1xf32>
    %cst_64 = arith.constant 6.400000e+01 : f32
    %205 = vector.broadcast %cst_64 : f32 to vector<16x1xf32>
    %206 = arith.divf %204, %205 : vector<16x1xf32>
    %207 = vector.broadcast %206 : vector<16x1xf32> to vector<16x64xf32>
    %208 = arith.subf %198, %207 : vector<16x64xf32>
    %209 = arith.mulf %208, %208 : vector<16x64xf32>
    %cst_65 = arith.constant dense<0.000000e+00> : vector<16xf32>
    %210 = vector.multi_reduction <add>, %209, %cst_65 [1] : vector<16x64xf32> to vector<16xf32>
    %211 = vector.shape_cast %210 : vector<16xf32> to vector<16x1xf32>
    %cst_66 = arith.constant 6.400000e+01 : f32
    %212 = vector.broadcast %cst_66 : f32 to vector<16x1xf32>
    %213 = arith.divf %211, %212 : vector<16x1xf32>
    %cst_67 = arith.constant 9.99999974E-6 : f32
    %214 = vector.broadcast %cst_67 : f32 to vector<16x1xf32>
    %215 = arith.addf %213, %214 : vector<16x1xf32>
    %216 = math.rsqrt %215 : vector<16x1xf32>
    %217 = vector.broadcast %216 : vector<16x1xf32> to vector<16x64xf32>
    %218 = arith.mulf %208, %217 : vector<16x64xf32>
    %219 = vector.broadcast %200 : vector<1x64xf32> to vector<16x64xf32>
    %220 = arith.mulf %218, %219 : vector<16x64xf32>
    %221 = vector.broadcast %202 : vector<1x64xf32> to vector<16x64xf32>
    %222 = arith.addf %220, %221 : vector<16x64xf32>
    %223 = arith.truncf %222 : vector<16x64xf32> to vector<16x64xbf16>
    %c0_68 = arith.constant 0 : index
    %c0_69 = arith.constant 0 : index
    %c0_70 = arith.constant 0 : index
    %224 = vector.load %arg11[%c0_68, %c0_69, %c0_70] : memref<1x64x2048xbf16, #tpu.memory_space<vmem>>, vector<1x64x2048xbf16>
    %225 = vector.shape_cast %224 : vector<1x64x2048xbf16> to vector<64x2048xbf16>
    %cst_71 = arith.constant dense<0.000000e+00> : vector<16x2048xf32>
    %226 = tpu.matmul %223, %225, %cst_71 {dimension_numbers = #tpu.dot_dimension_numbers<[1], [0], [0], [1], [0, 0, 1, 1], [], []>} : vector<16x64xbf16>, vector<64x2048xbf16>, vector<16x2048xf32> -> vector<16x2048xf32>
    %c0_72 = arith.constant 0 : index
    %c0_73 = arith.constant 0 : index
    %c0_74 = arith.constant 0 : index
    %227 = vector.load %arg12[%c0_72, %c0_73, %c0_74] : memref<1x1x2048xf32, #tpu.memory_space<vmem>>, vector<1x1x2048xf32>
    %228 = vector.shape_cast %227 : vector<1x1x2048xf32> to vector<1x2048xf32>
    %229 = vector.broadcast %228 : vector<1x2048xf32> to vector<16x2048xf32>
    %230 = arith.addf %226, %229 : vector<16x2048xf32>
    %cst_75 = arith.constant 0.000000e+00 : f32
    %231 = vector.broadcast %cst_75 : f32 to vector<16x2048xf32>
    %232 = arith.maximumf %230, %231 : vector<16x2048xf32>
    %233 = arith.truncf %232 : vector<16x2048xf32> to vector<16x2048xbf16>
    %c0_76 = arith.constant 0 : index
    %c0_77 = arith.constant 0 : index
    %c0_78 = arith.constant 0 : index
    %234 = vector.load %arg13[%c0_76, %c0_77, %c0_78] : memref<1x2048x64xbf16, #tpu.memory_space<vmem>>, vector<1x2048x64xbf16>
    %235 = vector.shape_cast %234 : vector<1x2048x64xbf16> to vector<2048x64xbf16>
    %cst_79 = arith.constant dense<0.000000e+00> : vector<16x64xf32>
    %236 = tpu.matmul %233, %235, %cst_79 {dimension_numbers = #tpu.dot_dimension_numbers<[1], [0], [0], [1], [0, 0, 1, 1], [], []>} : vector<16x2048xbf16>, vector<2048x64xbf16>, vector<16x64xf32> -> vector<16x64xf32>
    %c0_80 = arith.constant 0 : index
    %c0_81 = arith.constant 0 : index
    %c0_82 = arith.constant 0 : index
    %237 = vector.load %arg14[%c0_80, %c0_81, %c0_82] : memref<1x1x64xf32, #tpu.memory_space<vmem>>, vector<1x1x64xf32>
    %238 = vector.shape_cast %237 : vector<1x1x64xf32> to vector<1x64xf32>
    %239 = vector.broadcast %238 : vector<1x64xf32> to vector<16x64xf32>
    %240 = arith.addf %236, %239 : vector<16x64xf32>
    %241 = arith.addf %222, %240 : vector<16x64xf32>
    %c0_83 = arith.constant 0 : index
    %c0_84 = arith.constant 0 : index
    %c0_85 = arith.constant 0 : index
    %242 = vector.load %arg15[%c0_83, %c0_84, %c0_85] : memref<1x1x64xf32, #tpu.memory_space<vmem>>, vector<1x1x64xf32>
    %243 = vector.shape_cast %242 : vector<1x1x64xf32> to vector<1x64xf32>
    %c0_86 = arith.constant 0 : index
    %c0_87 = arith.constant 0 : index
    %c0_88 = arith.constant 0 : index
    %244 = vector.load %arg16[%c0_86, %c0_87, %c0_88] : memref<1x1x64xf32, #tpu.memory_space<vmem>>, vector<1x1x64xf32>
    %245 = vector.shape_cast %244 : vector<1x1x64xf32> to vector<1x64xf32>
    %cst_89 = arith.constant dense<0.000000e+00> : vector<16xf32>
    %246 = vector.multi_reduction <add>, %241, %cst_89 [1] : vector<16x64xf32> to vector<16xf32>
    %247 = vector.shape_cast %246 : vector<16xf32> to vector<16x1xf32>
    %cst_90 = arith.constant 6.400000e+01 : f32
    %248 = vector.broadcast %cst_90 : f32 to vector<16x1xf32>
    %249 = arith.divf %247, %248 : vector<16x1xf32>
    %250 = vector.broadcast %249 : vector<16x1xf32> to vector<16x64xf32>
    %251 = arith.subf %241, %250 : vector<16x64xf32>
    %252 = arith.mulf %251, %251 : vector<16x64xf32>
    %cst_91 = arith.constant dense<0.000000e+00> : vector<16xf32>
    %253 = vector.multi_reduction <add>, %252, %cst_91 [1] : vector<16x64xf32> to vector<16xf32>
    %254 = vector.shape_cast %253 : vector<16xf32> to vector<16x1xf32>
    %cst_92 = arith.constant 6.400000e+01 : f32
    %255 = vector.broadcast %cst_92 : f32 to vector<16x1xf32>
    %256 = arith.divf %254, %255 : vector<16x1xf32>
    %cst_93 = arith.constant 9.99999974E-6 : f32
    %257 = vector.broadcast %cst_93 : f32 to vector<16x1xf32>
    %258 = arith.addf %256, %257 : vector<16x1xf32>
    %259 = math.rsqrt %258 : vector<16x1xf32>
    %260 = vector.broadcast %259 : vector<16x1xf32> to vector<16x64xf32>
    %261 = arith.mulf %251, %260 : vector<16x64xf32>
    %262 = vector.broadcast %243 : vector<1x64xf32> to vector<16x64xf32>
    %263 = arith.mulf %261, %262 : vector<16x64xf32>
    %264 = vector.broadcast %245 : vector<1x64xf32> to vector<16x64xf32>
    %265 = arith.addf %263, %264 : vector<16x64xf32>
    %c0_94 = arith.constant 0 : index
    %c0_95 = arith.constant 0 : index
    %266 = vector.load %arg22[%c0_94, %c0_95] : memref<16x64xf32, #tpu.memory_space<vmem>>, vector<16x64xf32>
    tpu.vector_store %arg22[%c0_94, %c0_95], %265 {strides = array<i32>} : memref<16x64xf32, #tpu.memory_space<vmem>>, vector<16x64xf32>,
    %c1_i32 = arith.constant 1 : i32
    %267 = arith.cmpi eq, %arg0, %c1_i32 : i32
    %268 = arith.extui %267 : i1 to i32
    %c0_i32_96 = arith.constant 0 : i32
    %269 = arith.cmpi ne, %268, %c0_i32_96 : i32
    scf.if %269 {
      %270 = arith.truncf %265 : vector<16x64xf32> to vector<16x64xbf16>
      %c0_97 = arith.constant 0 : index
      %c0_98 = arith.constant 0 : index
      %271 = vector.load %arg17[%c0_97, %c0_98] : memref<64x64xbf16, #tpu.memory_space<vmem>>, vector<64x64xbf16>
      %cst_99 = arith.constant dense<0.000000e+00> : vector<16x64xf32>
      %272 = tpu.matmul %270, %271, %cst_99 {dimension_numbers = #tpu.dot_dimension_numbers<[1], [0], [0], [1], [0, 0, 1, 1], [], []>} : vector<16x64xbf16>, vector<64x64xbf16>, vector<16x64xf32> -> vector<16x64xf32>
      %c0_100 = arith.constant 0 : index
      %c0_101 = arith.constant 0 : index
      %273 = vector.load %arg18[%c0_100, %c0_101] : memref<1x64xf32, #tpu.memory_space<vmem>>, vector<1x64xf32>
      %274 = vector.broadcast %273 : vector<1x64xf32> to vector<16x64xf32>
      %275 = arith.addf %272, %274 : vector<16x64xf32>
      %cst_102 = arith.constant 5.000000e-01 : f32
      %276 = vector.broadcast %cst_102 : f32 to vector<16x64xf32>
      %277 = arith.mulf %276, %275 : vector<16x64xf32>
      %cst_103 = arith.constant 0.707106769 : f32
      %278 = vector.broadcast %cst_103 : f32 to vector<16x64xf32>
      %279 = arith.mulf %275, %278 : vector<16x64xf32>
      %280 = math.erf %279 : vector<16x64xf32>
      %cst_104 = arith.constant 1.000000e+00 : f32
      %281 = vector.broadcast %cst_104 : f32 to vector<16x64xf32>
      %282 = arith.addf %281, %280 : vector<16x64xf32>
      %283 = arith.mulf %277, %282 : vector<16x64xf32>
      %284 = arith.truncf %283 : vector<16x64xf32> to vector<16x64xbf16>
      %c0_105 = arith.constant 0 : index
      %c0_106 = arith.constant 0 : index
      %285 = vector.load %arg19[%c0_105, %c0_106] : memref<64x128xbf16, #tpu.memory_space<vmem>>, vector<64x128xbf16>
      %cst_107 = arith.constant dense<0.000000e+00> : vector<16x128xf32>
      %286 = tpu.matmul %284, %285, %cst_107 {dimension_numbers = #tpu.dot_dimension_numbers<[1], [0], [0], [1], [0, 0, 1, 1], [], []>} : vector<16x64xbf16>, vector<64x128xbf16>, vector<16x128xf32> -> vector<16x128xf32>
      %c0_108 = arith.constant 0 : index
      %c0_109 = arith.constant 0 : index
      %287 = vector.load %arg20[%c0_108, %c0_109] : memref<1x128xf32, #tpu.memory_space<vmem>>, vector<1x128xf32>
      %288 = vector.broadcast %287 : vector<1x128xf32> to vector<16x128xf32>
      %289 = arith.addf %286, %288 : vector<16x128xf32>
      %cst_110 = arith.constant dense<0xFF800000> : vector<16xf32>
      %290 = vector.multi_reduction <maximumf>, %289, %cst_110 [1] : vector<16x128xf32> to vector<16xf32>
      %291 = vector.shape_cast %290 : vector<16xf32> to vector<16x1xf32>
      %292 = vector.broadcast %291 : vector<16x1xf32> to vector<16x128xf32>
      %293 = arith.subf %289, %292 : vector<16x128xf32>
      %294 = math.exp %293 : vector<16x128xf32>
      %cst_111 = arith.constant dense<0.000000e+00> : vector<16xf32>
      %295 = vector.multi_reduction <add>, %294, %cst_111 [1] : vector<16x128xf32> to vector<16xf32>
      %296 = vector.shape_cast %295 : vector<16xf32> to vector<16x1xf32>
      %297 = vector.broadcast %296 : vector<16x1xf32> to vector<16x128xf32>
      %298 = arith.divf %294, %297 : vector<16x128xf32>
      %c0_112 = arith.constant 0 : index
      %c0_113 = arith.constant 0 : index
      %299 = vector.load %arg21[%c0_112, %c0_113] : memref<16x128xf32, #tpu.memory_space<vmem>>, vector<16x128xf32>
      tpu.vector_store %arg21[%c0_112, %c0_113], %298 {strides = array<i32>} : memref<16x128xf32, #tpu.memory_space<vmem>>, vector<16x128xf32>,
    } else {
    }
    return
  }
  func.func @transform_0(%arg0: i32, %arg1: memref<16xi32, #tpu.memory_space<smem>>) -> (i32, i32) {
    %c0_i32 = arith.constant 0 : i32
    %c0_i32_0 = arith.constant 0 : i32
    %c0_i32_1 = arith.constant 0 : i32
    return %c0_i32, %c0_i32_0 : i32, i32
  }
  func.func @transform_1(%arg0: i32, %arg1: memref<16xi32, #tpu.memory_space<smem>>) -> (i32, i32) {
    %c0_i32 = arith.constant 0 : i32
    %c0_i32_0 = arith.constant 0 : i32
    %c0_i32_1 = arith.constant 0 : i32
    return %c0_i32, %c0_i32_0 : i32, i32
  }
  func.func @transform_2(%arg0: i32, %arg1: memref<16xi32, #tpu.memory_space<smem>>) -> (i32, i32) {
    %c0_i32 = arith.constant 0 : i32
    %c0_i32_0 = arith.constant 0 : i32
    %c0_i32_1 = arith.constant 0 : i32
    return %c0_i32, %c0_i32_0 : i32, i32
  }
  func.func @transform_3(%arg0: i32, %arg1: memref<16xi32, #tpu.memory_space<smem>>) -> (i32, i32, i32) {
    %c0_i32 = arith.constant 0 : i32
    %c0_i32_0 = arith.constant 0 : i32
    %c0_i32_1 = arith.constant 0 : i32
    return %arg0, %c0_i32, %c0_i32_0 : i32, i32, i32
  }
  func.func @transform_4(%arg0: i32, %arg1: memref<16xi32, #tpu.memory_space<smem>>) -> (i32, i32, i32) {
    %c0_i32 = arith.constant 0 : i32
    %c0_i32_0 = arith.constant 0 : i32
    %c0_i32_1 = arith.constant 0 : i32
    return %arg0, %c0_i32, %c0_i32_0 : i32, i32, i32
  }
  func.func @transform_5(%arg0: i32, %arg1: memref<16xi32, #tpu.memory_space<smem>>) -> (i32, i32, i32) {
    %c0_i32 = arith.constant 0 : i32
    %c0_i32_0 = arith.constant 0 : i32
    %c0_i32_1 = arith.constant 0 : i32
    return %arg0, %c0_i32, %c0_i32_0 : i32, i32, i32
  }
  func.func @transform_6(%arg0: i32, %arg1: memref<16xi32, #tpu.memory_space<smem>>) -> (i32, i32, i32) {
    %c0_i32 = arith.constant 0 : i32
    %c0_i32_0 = arith.constant 0 : i32
    %c0_i32_1 = arith.constant 0 : i32
    return %arg0, %c0_i32, %c0_i32_0 : i32, i32, i32
  }
  func.func @transform_7(%arg0: i32, %arg1: memref<16xi32, #tpu.memory_space<smem>>) -> (i32, i32, i32) {
    %c0_i32 = arith.constant 0 : i32
    %c0_i32_0 = arith.constant 0 : i32
    %c0_i32_1 = arith.constant 0 : i32
    return %arg0, %c0_i32, %c0_i32_0 : i32, i32, i32
  }
  func.func @transform_8(%arg0: i32, %arg1: memref<16xi32, #tpu.memory_space<smem>>) -> (i32, i32, i32) {
    %c0_i32 = arith.constant 0 : i32
    %c0_i32_0 = arith.constant 0 : i32
    %c0_i32_1 = arith.constant 0 : i32
    return %arg0, %c0_i32, %c0_i32_0 : i32, i32, i32
  }
  func.func @transform_9(%arg0: i32, %arg1: memref<16xi32, #tpu.memory_space<smem>>) -> (i32, i32, i32) {
    %c0_i32 = arith.constant 0 : i32
    %c0_i32_0 = arith.constant 0 : i32
    %c0_i32_1 = arith.constant 0 : i32
    return %arg0, %c0_i32, %c0_i32_0 : i32, i32, i32
  }
  func.func @transform_10(%arg0: i32, %arg1: memref<16xi32, #tpu.memory_space<smem>>) -> (i32, i32, i32) {
    %c0_i32 = arith.constant 0 : i32
    %c0_i32_0 = arith.constant 0 : i32
    %c0_i32_1 = arith.constant 0 : i32
    return %arg0, %c0_i32, %c0_i32_0 : i32, i32, i32
  }
  func.func @transform_11(%arg0: i32, %arg1: memref<16xi32, #tpu.memory_space<smem>>) -> (i32, i32, i32) {
    %c0_i32 = arith.constant 0 : i32
    %c0_i32_0 = arith.constant 0 : i32
    %c0_i32_1 = arith.constant 0 : i32
    return %arg0, %c0_i32, %c0_i32_0 : i32, i32, i32
  }
  func.func @transform_12(%arg0: i32, %arg1: memref<16xi32, #tpu.memory_space<smem>>) -> (i32, i32, i32) {
    %c0_i32 = arith.constant 0 : i32
    %c0_i32_0 = arith.constant 0 : i32
    %c0_i32_1 = arith.constant 0 : i32
    return %arg0, %c0_i32, %c0_i32_0 : i32, i32, i32
  }
  func.func @transform_13(%arg0: i32, %arg1: memref<16xi32, #tpu.memory_space<smem>>) -> (i32, i32, i32) {
    %c0_i32 = arith.constant 0 : i32
    %c0_i32_0 = arith.constant 0 : i32
    %c0_i32_1 = arith.constant 0 : i32
    return %arg0, %c0_i32, %c0_i32_0 : i32, i32, i32
  }
  func.func @transform_14(%arg0: i32, %arg1: memref<16xi32, #tpu.memory_space<smem>>) -> (i32, i32, i32) {
    %c0_i32 = arith.constant 0 : i32
    %c0_i32_0 = arith.constant 0 : i32
    %c0_i32_1 = arith.constant 0 : i32
    return %arg0, %c0_i32, %c0_i32_0 : i32, i32, i32
  }
  func.func @transform_15(%arg0: i32, %arg1: memref<16xi32, #tpu.memory_space<smem>>) -> (i32, i32) {
    %c0_i32 = arith.constant 0 : i32
    %c0_i32_0 = arith.constant 0 : i32
    %c0_i32_1 = arith.constant 0 : i32
    return %c0_i32, %c0_i32_0 : i32, i32
  }
  func.func @transform_16(%arg0: i32, %arg1: memref<16xi32, #tpu.memory_space<smem>>) -> (i32, i32) {
    %c0_i32 = arith.constant 0 : i32
    %c0_i32_0 = arith.constant 0 : i32
    %c0_i32_1 = arith.constant 0 : i32
    return %c0_i32, %c0_i32_0 : i32, i32
  }
  func.func @transform_17(%arg0: i32, %arg1: memref<16xi32, #tpu.memory_space<smem>>) -> (i32, i32) {
    %c0_i32 = arith.constant 0 : i32
    %c0_i32_0 = arith.constant 0 : i32
    %c0_i32_1 = arith.constant 0 : i32
    return %c0_i32, %c0_i32_0 : i32, i32
  }
  func.func @transform_18(%arg0: i32, %arg1: memref<16xi32, #tpu.memory_space<smem>>) -> (i32, i32) {
    %c0_i32 = arith.constant 0 : i32
    %c0_i32_0 = arith.constant 0 : i32
    %c0_i32_1 = arith.constant 0 : i32
    return %c0_i32, %c0_i32_0 : i32, i32
  }
  func.func @transform_19(%arg0: i32, %arg1: memref<16xi32, #tpu.memory_space<smem>>) -> (i32, i32) {
    %c0_i32 = arith.constant 0 : i32
    %c0_i32_0 = arith.constant 0 : i32
    %c0_i32_1 = arith.constant 0 : i32
    return %c0_i32, %c0_i32_0 : i32, i32
  }
}

</mosaic_0001>

<llo_original>
// kernel: transformer_forward.1
$region0: #{transformer_forward.1}
  #allocation0 [shape = 'u32[]', space=smem, size = 0x4, offset = 0x4, fixed_abs, tag = 'smem constant byte address 0x4 - core index']
  #allocation1 [shape = 'u32[144,128]{1,0:T(1,128)}', space=vmem, size = 0x12000, scoped, tag = 'internal scratch']
  #allocation2 [shape = 'f32[16,64]{1,0:T(8,128)}', space=vmem, size = 0x2000, scoped, tag = 'scratch operand']
  #allocation3 [shape = 's32[1]{0}', space=sflag, size = 0x4, scoped, tag = 'scoped memory for transformer_forward.1']
  #allocation4 [shape = 'u8[512]{0}', space=smem, size = 0x200, scoped, tag = 'prefetched SMEM operand 0']
  %s0 = inlined_call_operand.vmem [shape: s32[16], index: 0, kind: input, shape index: {}]
  %s1 = inlined_call_operand.vmem [shape: f32[32,64], index: 1, kind: input, shape index: {}]
  %s2 = inlined_call_operand.vmem [shape: f32[8,64], index: 2, kind: input, shape index: {}]
  %s3 = inlined_call_operand.vmem [shape: f32[2,8], index: 3, kind: input, shape index: {}]
  %s4 = inlined_call_operand.vmem [shape: bf16[2,64,192], index: 4, kind: input, shape index: {}]
  %s5 = inlined_call_operand.vmem [shape: f32[2,1,192], index: 5, kind: input, shape index: {}]
  %s6 = inlined_call_operand.vmem [shape: bf16[2,64,64], index: 6, kind: input, shape index: {}]
  %s7 = inlined_call_operand.vmem [shape: f32[2,1,64], index: 7, kind: input, shape index: {}, may-alias: {7,9,13,15}]
  %s8 = inlined_call_operand.vmem [shape: f32[2,1,64], index: 8, kind: input, shape index: {}, may-alias: {8,14}]
  %s9 = inlined_call_operand.vmem [shape: f32[2,1,64], index: 9, kind: input, shape index: {}, may-alias: {7,9,13,15}]
  %s10 = inlined_call_operand.vmem [shape: bf16[2,64,2048], index: 10, kind: input, shape index: {}]
  %s11 = inlined_call_operand.vmem [shape: f32[2,1,2048], index: 11, kind: input, shape index: {}]
  %s12 = inlined_call_operand.vmem [shape: bf16[2,2048,64], index: 12, kind: input, shape index: {}]
  %s13 = inlined_call_operand.vmem [shape: f32[2,1,64], index: 13, kind: input, shape index: {}, may-alias: {7,9,13,15}]
  %s14 = inlined_call_operand.vmem [shape: f32[2,1,64], index: 14, kind: input, shape index: {}, may-alias: {8,14}]
  %s15 = inlined_call_operand.vmem [shape: f32[2,1,64], index: 15, kind: input, shape index: {}, may-alias: {7,9,13,15}]
  %s16 = inlined_call_operand.vmem [shape: bf16[64,64], index: 16, kind: input, shape index: {}]
  %s17 = inlined_call_operand.vmem [shape: f32[1,64], index: 17, kind: input, shape index: {}]
  %s18 = inlined_call_operand.vmem [shape: bf16[64,128], index: 18, kind: input, shape index: {}]
  %s19 = inlined_call_operand.vmem [shape: f32[1,128], index: 19, kind: input, shape index: {}]
  %s20 = inlined_call_operand.vmem [shape: f32[16,128], index: 20, kind: output, shape index: {}]
  %s21 = sld [smem:[#allocation0]]
  $region117: #{transformer_forward.1} parent=0
    _
  %s23 = ssub.s32 1, %s21
  %s24 = scalar_select 0, %s23, %s21
  %s25 = sshll.u32 %s0, 4
  %s26 = int_to_ptr.vmem [resolvable:$true] %s25
  %28 = dma.vmem_to_smem %s26, 16, [#allocation4], [#allocation3]
  %29 = dma.done [#allocation3], 16
  %30 = sfence
  loop: start=0, step=1, limit=4
  $region2: #{transformer_forward.1} parent=0 // loop_pre_header
    _
  $region3: #{transformer_forward.1} parent=0 // loop_header
    %s32 = sphi 0, %s36
    %p33 = scmp.ge.s32.totalorder %s32, 4
    %s40 = sphi 0, %s40
    %s42 = sphi 0, %s40
    %s43 = sphi 0, %s42
    %s57 = sphi 0, %s43
    %s61 = sphi 0, %s61
    %s63 = sphi 0, %s61
    %s64 = sphi 0, %s63
    %s78 = sphi 0, %s64
    %s82 = sphi 0, %s82
    %s84 = sphi 0, %s82
    %s85 = sphi 0, %s84
    %s99 = sphi 0, %s85
    %s105 = sphi 0, %s107
    %s108 = sphi 0, %s105
    %s109 = sphi 0, %s108
    %s125 = sphi 0, %s109
    %s131 = sphi 0, %s133
    %s134 = sphi 0, %s131
    %s135 = sphi 0, %s134
    %s151 = sphi 0, %s135
    %s157 = sphi 0, %s159
    %s160 = sphi 0, %s157
    %s161 = sphi 0, %s160
    %s177 = sphi 0, %s161
    %s183 = sphi 0, %s185
    %s186 = sphi 0, %s183
    %s187 = sphi 0, %s186
    %s203 = sphi 0, %s187
    %s209 = sphi 0, %s211
    %s212 = sphi 0, %s209
    %s213 = sphi 0, %s212
    %s229 = sphi 0, %s213
    %s235 = sphi 0, %s237
    %s238 = sphi 0, %s235
    %s239 = sphi 0, %s238
    %s255 = sphi 0, %s239
    %s261 = sphi 0, %s263
    %s264 = sphi 0, %s261
    %s265 = sphi 0, %s264
    %s281 = sphi 0, %s265
    %s287 = sphi 0, %s289
    %s290 = sphi 0, %s287
    %s291 = sphi 0, %s290
    %s307 = sphi 0, %s291
    %s313 = sphi 0, %s315
    %s316 = sphi 0, %s313
    %s317 = sphi 0, %s316
    %s333 = sphi 0, %s317
    %s339 = sphi 0, %s341
    %s342 = sphi 0, %s339
    %s343 = sphi 0, %s342
    %s359 = sphi 0, %s343
    %s365 = sphi 0, %s367
    %s368 = sphi 0, %s365
    %s369 = sphi 0, %s368
    %s385 = sphi 0, %s369
    %s391 = sphi 0, %s393
    %s394 = sphi 0, %s391
    %s395 = sphi 0, %s394
    %s411 = sphi 0, %s395
    %s415 = sphi 0, %s415
    %s417 = sphi 0, %s415
    %s418 = sphi 0, %s417
    %s432 = sphi 0, %s418
    %s436 = sphi 0, %s436
    %s438 = sphi 0, %s436
    %s439 = sphi 0, %s438
    %s453 = sphi 0, %s439
    %s457 = sphi 0, %s457
    %s459 = sphi 0, %s457
    %s460 = sphi 0, %s459
    %s474 = sphi 0, %s460
    %s478 = sphi 0, %s478
    %s480 = sphi 0, %s478
    %s481 = sphi 0, %s480
    %s495 = sphi 0, %s481
    %s499 = sphi 0, %s499
    %s501 = sphi 0, %s499
    %s502 = sphi 0, %s501
    %s516 = sphi 0, %s502
  $region4: #{transformer_forward.1} parent=0 // loop_header_branch
    %35 = sbr.rel (%p33) target = $region8
  $region5: #{transformer_forward.1} parent=0 // loop_body
    %s37 = ssub.s32 %s32, 1
    %s38 = ssub.s32 %s32, 2
    %s39 = sadd.s32 %s32, 1
    %s41 = sadd.s32 %s40, 1
    %p44 = scmp.eq.s32.totalorder %s32, 1
    %p45 = scmp.ne.s32.totalorder %s40, %s42
    %p46 = scmp.eq.s32.totalorder %s32, 0
    %p47 = por %p45, %p46
    %p48 = scmp.ne.s32.totalorder %s40, %s42
    %p49 = scmp.eq.s32.totalorder %s37, 1
    %p50 = por %p48, %p49
    %p51 = scmp.ne.s32.totalorder %s42, %s43
    %p52 = scmp.eq.s32.totalorder %s37, 0
    %p53 = por %p51, %p52
    %p54 = scmp.ne.s32.totalorder %s42, %s43
    %p55 = scmp.eq.s32.totalorder %s38, 1
    %p56 = por %p54, %p55
    %p58 = scmp.ne.s32.totalorder %s43, %s57
    %p59 = scmp.eq.s32.totalorder %s38, 0
    %p60 = por %p58, %p59
    %s62 = sadd.s32 %s61, 1
    %p65 = scmp.eq.s32.totalorder %s32, 1
    %p66 = scmp.ne.s32.totalorder %s61, %s63
    %p67 = scmp.eq.s32.totalorder %s32, 0
    %p68 = por %p66, %p67
    %p69 = scmp.ne.s32.totalorder %s61, %s63
    %p70 = scmp.eq.s32.totalorder %s37, 1
    %p71 = por %p69, %p70
    %p72 = scmp.ne.s32.totalorder %s63, %s64
    %p73 = scmp.eq.s32.totalorder %s37, 0
    %p74 = por %p72, %p73
    %p75 = scmp.ne.s32.totalorder %s63, %s64
    %p76 = scmp.eq.s32.totalorder %s38, 1
    %p77 = por %p75, %p76
    %p79 = scmp.ne.s32.totalorder %s64, %s78
    %p80 = scmp.eq.s32.totalorder %s38, 0
    %p81 = por %p79, %p80
    %s83 = sadd.s32 %s82, 1
    %p86 = scmp.eq.s32.totalorder %s32, 1
    %p87 = scmp.ne.s32.totalorder %s82, %s84
    %p88 = scmp.eq.s32.totalorder %s32, 0
    %p89 = por %p87, %p88
    %p90 = scmp.ne.s32.totalorder %s82, %s84
    %p91 = scmp.eq.s32.totalorder %s37, 1
    %p92 = por %p90, %p91
    %p93 = scmp.ne.s32.totalorder %s84, %s85
    %p94 = scmp.eq.s32.totalorder %s37, 0
    %p95 = por %p93, %p94
    %p96 = scmp.ne.s32.totalorder %s84, %s85
    %p97 = scmp.eq.s32.totalorder %s38, 1
    %p98 = por %p96, %p97
    %p100 = scmp.ne.s32.totalorder %s85, %s99
    %p101 = scmp.eq.s32.totalorder %s38, 0
    %p102 = por %p100, %p101
    %s103 = ssub.s32 %s32, %s39
    %p104 = scmp.eq.s32.totalorder %s103, 0
    %s106 = sadd.s32 %s105, 1
    %s107 = scalar_select %p104, %s105, %s106
    %p110 = pneg %p104
    %p111 = scmp.eq.s32.totalorder %s32, 1
    %p112 = por %p110, %p111
    %p113 = scmp.ne.s32.totalorder %s105, %s108
    %p114 = scmp.eq.s32.totalorder %s32, 0
    %p115 = por %p113, %p114
    %p116 = scmp.ne.s32.totalorder %s105, %s108
    %p117 = scmp.eq.s32.totalorder %s37, 1
    %p118 = por %p116, %p117
    %p119 = scmp.ne.s32.totalorder %s108, %s109
    %p120 = scmp.eq.s32.totalorder %s37, 0
    %p121 = por %p119, %p120
    %p122 = scmp.ne.s32.totalorder %s108, %s109
    %p123 = scmp.eq.s32.totalorder %s38, 1
    %p124 = por %p122, %p123
    %p126 = scmp.ne.s32.totalorder %s109, %s125
    %p127 = scmp.eq.s32.totalorder %s38, 0
    %p128 = por %p126, %p127
    %s129 = ssub.s32 %s32, %s39
    %p130 = scmp.eq.s32.totalorder %s129, 0
    %s132 = sadd.s32 %s131, 1
    %s133 = scalar_select %p130, %s131, %s132
    %p136 = pneg %p130
    %p137 = scmp.eq.s32.totalorder %s32, 1
    %p138 = por %p136, %p137
    %p139 = scmp.ne.s32.totalorder %s131, %s134
    %p140 = scmp.eq.s32.totalorder %s32, 0
    %p141 = por %p139, %p140
    %p142 = scmp.ne.s32.totalorder %s131, %s134
    %p143 = scmp.eq.s32.totalorder %s37, 1
    %p144 = por %p142, %p143
    %p145 = scmp.ne.s32.totalorder %s134, %s135
    %p146 = scmp.eq.s32.totalorder %s37, 0
    %p147 = por %p145, %p146
    %p148 = scmp.ne.s32.totalorder %s134, %s135
    %p149 = scmp.eq.s32.totalorder %s38, 1
    %p150 = por %p148, %p149
    %p152 = scmp.ne.s32.totalorder %s135, %s151
    %p153 = scmp.eq.s32.totalorder %s38, 0
    %p154 = por %p152, %p153
    %s155 = ssub.s32 %s32, %s39
    %p156 = scmp.eq.s32.totalorder %s155, 0
    %s158 = sadd.s32 %s157, 1
    %s159 = scalar_select %p156, %s157, %s158
    %p162 = pneg %p156
    %p163 = scmp.eq.s32.totalorder %s32, 1
    %p164 = por %p162, %p163
    %p165 = scmp.ne.s32.totalorder %s157, %s160
    %p166 = scmp.eq.s32.totalorder %s32, 0
    %p167 = por %p165, %p166
    %p168 = scmp.ne.s32.totalorder %s157, %s160
    %p169 = scmp.eq.s32.totalorder %s37, 1
    %p170 = por %p168, %p169
    %p171 = scmp.ne.s32.totalorder %s160, %s161
    %p172 = scmp.eq.s32.totalorder %s37, 0
    %p173 = por %p171, %p172
    %p174 = scmp.ne.s32.totalorder %s160, %s161
    %p175 = scmp.eq.s32.totalorder %s38, 1
    %p176 = por %p174, %p175
    %p178 = scmp.ne.s32.totalorder %s161, %s177
    %p179 = scmp.eq.s32.totalorder %s38, 0
    %p180 = por %p178, %p179
    %s181 = ssub.s32 %s32, %s39
    %p182 = scmp.eq.s32.totalorder %s181, 0
    %s184 = sadd.s32 %s183, 1
    %s185 = scalar_select %p182, %s183, %s184
    %p188 = pneg %p182
    %p189 = scmp.eq.s32.totalorder %s32, 1
    %p190 = por %p188, %p189
    %p191 = scmp.ne.s32.totalorder %s183, %s186
    %p192 = scmp.eq.s32.totalorder %s32, 0
    %p193 = por %p191, %p192
    %p194 = scmp.ne.s32.totalorder %s183, %s186
    %p195 = scmp.eq.s32.totalorder %s37, 1
    %p196 = por %p194, %p195
    %p197 = scmp.ne.s32.totalorder %s186, %s187
    %p198 = scmp.eq.s32.totalorder %s37, 0
    %p199 = por %p197, %p198
    %p200 = scmp.ne.s32.totalorder %s186, %s187
    %p201 = scmp.eq.s32.totalorder %s38, 1
    %p202 = por %p200, %p201
    %p204 = scmp.ne.s32.totalorder %s187, %s203
    %p205 = scmp.eq.s32.totalorder %s38, 0
    %p206 = por %p204, %p205
    %s207 = ssub.s32 %s32, %s39
    %p208 = scmp.eq.s32.totalorder %s207, 0
    %s210 = sadd.s32 %s209, 1
    %s211 = scalar_select %p208, %s209, %s210
    %p214 = pneg %p208
    %p215 = scmp.eq.s32.totalorder %s32, 1
    %p216 = por %p214, %p215
    %p217 = scmp.ne.s32.totalorder %s209, %s212
    %p218 = scmp.eq.s32.totalorder %s32, 0
    %p219 = por %p217, %p218
    %p220 = scmp.ne.s32.totalorder %s209, %s212
    %p221 = scmp.eq.s32.totalorder %s37, 1
    %p222 = por %p220, %p221
    %p223 = scmp.ne.s32.totalorder %s212, %s213
    %p224 = scmp.eq.s32.totalorder %s37, 0
    %p225 = por %p223, %p224
    %p226 = scmp.ne.s32.totalorder %s212, %s213
    %p227 = scmp.eq.s32.totalorder %s38, 1
    %p228 = por %p226, %p227
    %p230 = scmp.ne.s32.totalorder %s213, %s229
    %p231 = scmp.eq.s32.totalorder %s38, 0
    %p232 = por %p230, %p231
    %s233 = ssub.s32 %s32, %s39
    %p234 = scmp.eq.s32.totalorder %s233, 0
    %s236 = sadd.s32 %s235, 1
    %s237 = scalar_select %p234, %s235, %s236
    %p240 = pneg %p234
    %p241 = scmp.eq.s32.totalorder %s32, 1
    %p242 = por %p240, %p241
    %p243 = scmp.ne.s32.totalorder %s235, %s238
    %p244 = scmp.eq.s32.totalorder %s32, 0
    %p245 = por %p243, %p244
    %p246 = scmp.ne.s32.totalorder %s235, %s238
    %p247 = scmp.eq.s32.totalorder %s37, 1
    %p248 = por %p246, %p247
    %p249 = scmp.ne.s32.totalorder %s238, %s239
    %p250 = scmp.eq.s32.totalorder %s37, 0
    %p251 = por %p249, %p250
    %p252 = scmp.ne.s32.totalorder %s238, %s239
    %p253 = scmp.eq.s32.totalorder %s38, 1
    %p254 = por %p252, %p253
    %p256 = scmp.ne.s32.totalorder %s239, %s255
    %p257 = scmp.eq.s32.totalorder %s38, 0
    %p258 = por %p256, %p257
    %s259 = ssub.s32 %s32, %s39
    %p260 = scmp.eq.s32.totalorder %s259, 0
    %s262 = sadd.s32 %s261, 1
    %s263 = scalar_select %p260, %s261, %s262
    %p266 = pneg %p260
    %p267 = scmp.eq.s32.totalorder %s32, 1
    %p268 = por %p266, %p267
    %p269 = scmp.ne.s32.totalorder %s261, %s264
    %p270 = scmp.eq.s32.totalorder %s32, 0
    %p271 = por %p269, %p270
    %p272 = scmp.ne.s32.totalorder %s261, %s264
    %p273 = scmp.eq.s32.totalorder %s37, 1
    %p274 = por %p272, %p273
    %p275 = scmp.ne.s32.totalorder %s264, %s265
    %p276 = scmp.eq.s32.totalorder %s37, 0
    %p277 = por %p275, %p276
    %p278 = scmp.ne.s32.totalorder %s264, %s265
    %p279 = scmp.eq.s32.totalorder %s38, 1
    %p280 = por %p278, %p279
    %p282 = scmp.ne.s32.totalorder %s265, %s281
    %p283 = scmp.eq.s32.totalorder %s38, 0
    %p284 = por %p282, %p283
    %s285 = ssub.s32 %s32, %s39
    %p286 = scmp.eq.s32.totalorder %s285, 0
    %s288 = sadd.s32 %s287, 1
    %s289 = scalar_select %p286, %s287, %s288
    %p292 = pneg %p286
    %p293 = scmp.eq.s32.totalorder %s32, 1
    %p294 = por %p292, %p293
    %p295 = scmp.ne.s32.totalorder %s287, %s290
    %p296 = scmp.eq.s32.totalorder %s32, 0
    %p297 = por %p295, %p296
    %p298 = scmp.ne.s32.totalorder %s287, %s290
    %p299 = scmp.eq.s32.totalorder %s37, 1
    %p300 = por %p298, %p299
    %p301 = scmp.ne.s32.totalorder %s290, %s291
    %p302 = scmp.eq.s32.totalorder %s37, 0
    %p303 = por %p301, %p302
    %p304 = scmp.ne.s32.totalorder %s290, %s291
    %p305 = scmp.eq.s32.totalorder %s38, 1
    %p306 = por %p304, %p305
    %p308 = scmp.ne.s32.totalorder %s291, %s307
    %p309 = scmp.eq.s32.totalorder %s38, 0
    %p310 = por %p308, %p309
    %s311 = ssub.s32 %s32, %s39
    %p312 = scmp.eq.s32.totalorder %s311, 0
    %s314 = sadd.s32 %s313, 1
    %s315 = scalar_select %p312, %s313, %s314
    %p318 = pneg %p312
    %p319 = scmp.eq.s32.totalorder %s32, 1
    %p320 = por %p318, %p319
    %p321 = scmp.ne.s32.totalorder %s313, %s316
    %p322 = scmp.eq.s32.totalorder %s32, 0
    %p323 = por %p321, %p322
    %p324 = scmp.ne.s32.totalorder %s313, %s316
    %p325 = scmp.eq.s32.totalorder %s37, 1
    %p326 = por %p324, %p325
    %p327 = scmp.ne.s32.totalorder %s316, %s317
    %p328 = scmp.eq.s32.totalorder %s37, 0
    %p329 = por %p327, %p328
    %p330 = scmp.ne.s32.totalorder %s316, %s317
    %p331 = scmp.eq.s32.totalorder %s38, 1
    %p332 = por %p330, %p331
    %p334 = scmp.ne.s32.totalorder %s317, %s333
    %p335 = scmp.eq.s32.totalorder %s38, 0
    %p336 = por %p334, %p335
    %s337 = ssub.s32 %s32, %s39
    %p338 = scmp.eq.s32.totalorder %s337, 0
    %s340 = sadd.s32 %s339, 1
    %s341 = scalar_select %p338, %s339, %s340
    %p344 = pneg %p338
    %p345 = scmp.eq.s32.totalorder %s32, 1
    %p346 = por %p344, %p345
    %p347 = scmp.ne.s32.totalorder %s339, %s342
    %p348 = scmp.eq.s32.totalorder %s32, 0
    %p349 = por %p347, %p348
    %p350 = scmp.ne.s32.totalorder %s339, %s342
    %p351 = scmp.eq.s32.totalorder %s37, 1
    %p352 = por %p350, %p351
    %p353 = scmp.ne.s32.totalorder %s342, %s343
    %p354 = scmp.eq.s32.totalorder %s37, 0
    %p355 = por %p353, %p354
    %p356 = scmp.ne.s32.totalorder %s342, %s343
    %p357 = scmp.eq.s32.totalorder %s38, 1
    %p358 = por %p356, %p357
    %p360 = scmp.ne.s32.totalorder %s343, %s359
    %p361 = scmp.eq.s32.totalorder %s38, 0
    %p362 = por %p360, %p361
    %s363 = ssub.s32 %s32, %s39
    %p364 = scmp.eq.s32.totalorder %s363, 0
    %s366 = sadd.s32 %s365, 1
    %s367 = scalar_select %p364, %s365, %s366
    %p370 = pneg %p364
    %p371 = scmp.eq.s32.totalorder %s32, 1
    %p372 = por %p370, %p371
    %p373 = scmp.ne.s32.totalorder %s365, %s368
    %p374 = scmp.eq.s32.totalorder %s32, 0
    %p375 = por %p373, %p374
    %p376 = scmp.ne.s32.totalorder %s365, %s368
    %p377 = scmp.eq.s32.totalorder %s37, 1
    %p378 = por %p376, %p377
    %p379 = scmp.ne.s32.totalorder %s368, %s369
    %p380 = scmp.eq.s32.totalorder %s37, 0
    %p381 = por %p379, %p380
    %p382 = scmp.ne.s32.totalorder %s368, %s369
    %p383 = scmp.eq.s32.totalorder %s38, 1
    %p384 = por %p382, %p383
    %p386 = scmp.ne.s32.totalorder %s369, %s385
    %p387 = scmp.eq.s32.totalorder %s38, 0
    %p388 = por %p386, %p387
    %s389 = ssub.s32 %s32, %s39
    %p390 = scmp.eq.s32.totalorder %s389, 0
    %s392 = sadd.s32 %s391, 1
    %s393 = scalar_select %p390, %s391, %s392
    %p396 = pneg %p390
    %p397 = scmp.eq.s32.totalorder %s32, 1
    %p398 = por %p396, %p397
    %p399 = scmp.ne.s32.totalorder %s391, %s394
    %p400 = scmp.eq.s32.totalorder %s32, 0
    %p401 = por %p399, %p400
    %p402 = scmp.ne.s32.totalorder %s391, %s394
    %p403 = scmp.eq.s32.totalorder %s37, 1
    %p404 = por %p402, %p403
    %p405 = scmp.ne.s32.totalorder %s394, %s395
    %p406 = scmp.eq.s32.totalorder %s37, 0
    %p407 = por %p405, %p406
    %p408 = scmp.ne.s32.totalorder %s394, %s395
    %p409 = scmp.eq.s32.totalorder %s38, 1
    %p410 = por %p408, %p409
    %p412 = scmp.ne.s32.totalorder %s395, %s411
    %p413 = scmp.eq.s32.totalorder %s38, 0
    %p414 = por %p412, %p413
    %s416 = sadd.s32 %s415, 1
    %p419 = scmp.eq.s32.totalorder %s32, 1
    %p420 = scmp.ne.s32.totalorder %s415, %s417
    %p421 = scmp.eq.s32.totalorder %s32, 0
    %p422 = por %p420, %p421
    %p423 = scmp.ne.s32.totalorder %s415, %s417
    %p424 = scmp.eq.s32.totalorder %s37, 1
    %p425 = por %p423, %p424
    %p426 = scmp.ne.s32.totalorder %s417, %s418
    %p427 = scmp.eq.s32.totalorder %s37, 0
    %p428 = por %p426, %p427
    %p429 = scmp.ne.s32.totalorder %s417, %s418
    %p430 = scmp.eq.s32.totalorder %s38, 1
    %p431 = por %p429, %p430
    %p433 = scmp.ne.s32.totalorder %s418, %s432
    %p434 = scmp.eq.s32.totalorder %s38, 0
    %p435 = por %p433, %p434
    %s437 = sadd.s32 %s436, 1
    %p440 = scmp.eq.s32.totalorder %s32, 1
    %p441 = scmp.ne.s32.totalorder %s436, %s438
    %p442 = scmp.eq.s32.totalorder %s32, 0
    %p443 = por %p441, %p442
    %p444 = scmp.ne.s32.totalorder %s436, %s438
    %p445 = scmp.eq.s32.totalorder %s37, 1
    %p446 = por %p444, %p445
    %p447 = scmp.ne.s32.totalorder %s438, %s439
    %p448 = scmp.eq.s32.totalorder %s37, 0
    %p449 = por %p447, %p448
    %p450 = scmp.ne.s32.totalorder %s438, %s439
    %p451 = scmp.eq.s32.totalorder %s38, 1
    %p452 = por %p450, %p451
    %p454 = scmp.ne.s32.totalorder %s439, %s453
    %p455 = scmp.eq.s32.totalorder %s38, 0
    %p456 = por %p454, %p455
    %s458 = sadd.s32 %s457, 1
    %p461 = scmp.eq.s32.totalorder %s32, 1
    %p462 = scmp.ne.s32.totalorder %s457, %s459
    %p463 = scmp.eq.s32.totalorder %s32, 0
    %p464 = por %p462, %p463
    %p465 = scmp.ne.s32.totalorder %s457, %s459
    %p466 = scmp.eq.s32.totalorder %s37, 1
    %p467 = por %p465, %p466
    %p468 = scmp.ne.s32.totalorder %s459, %s460
    %p469 = scmp.eq.s32.totalorder %s37, 0
    %p470 = por %p468, %p469
    %p471 = scmp.ne.s32.totalorder %s459, %s460
    %p472 = scmp.eq.s32.totalorder %s38, 1
    %p473 = por %p471, %p472
    %p475 = scmp.ne.s32.totalorder %s460, %s474
    %p476 = scmp.eq.s32.totalorder %s38, 0
    %p477 = por %p475, %p476
    %s479 = sadd.s32 %s478, 1
    %p482 = scmp.eq.s32.totalorder %s32, 1
    %p483 = scmp.ne.s32.totalorder %s478, %s480
    %p484 = scmp.eq.s32.totalorder %s32, 0
    %p485 = por %p483, %p484
    %p486 = scmp.ne.s32.totalorder %s478, %s480
    %p487 = scmp.eq.s32.totalorder %s37, 1
    %p488 = por %p486, %p487
    %p489 = scmp.ne.s32.totalorder %s480, %s481
    %p490 = scmp.eq.s32.totalorder %s37, 0
    %p491 = por %p489, %p490
    %p492 = scmp.ne.s32.totalorder %s480, %s481
    %p493 = scmp.eq.s32.totalorder %s38, 1
    %p494 = por %p492, %p493
    %p496 = scmp.ne.s32.totalorder %s481, %s495
    %p497 = scmp.eq.s32.totalorder %s38, 0
    %p498 = por %p496, %p497
    %s500 = sadd.s32 %s499, 1
    %p503 = scmp.eq.s32.totalorder %s32, 1
    %p504 = scmp.ne.s32.totalorder %s499, %s501
    %p505 = scmp.eq.s32.totalorder %s32, 0
    %p506 = por %p504, %p505
    %p507 = scmp.ne.s32.totalorder %s499, %s501
    %p508 = scmp.eq.s32.totalorder %s37, 1
    %p509 = por %p507, %p508
    %p510 = scmp.ne.s32.totalorder %s501, %s502
    %p511 = scmp.eq.s32.totalorder %s37, 0
    %p512 = por %p510, %p511
    %p513 = scmp.ne.s32.totalorder %s501, %s502
    %p514 = scmp.eq.s32.totalorder %s38, 1
    %p515 = por %p513, %p514
    %p517 = scmp.ne.s32.totalorder %s502, %s516
    %p518 = scmp.eq.s32.totalorder %s38, 0
    %p519 = por %p517, %p518
    %p520 = scmp.le.s32.totalorder 1, %s32
    %p521 = scmp.lt.s32.totalorder %s32, 3
    %p522 = pnand %p520, %p521
    %p523 = pneg %p522
    // Predicated region
    $region9: #{transformer_forward.1} parent=5 // pred_check
      _
    $region10: #{transformer_forward.1} parent=5 // pred_check_branch
      %525 = sbr.rel (%p522) target = $region12
    $region11: #{transformer_forward.1} parent=5 // pred_region
      %s526 = ssub.s32 %s32, 1
      // Predicated region
      $region13: #{transformer_forward.1} parent=11 // pred_check
        %p527 = pneg %p53
      $region14: #{transformer_forward.1} parent=11 // pred_check_branch
        %529 = sbr.rel (%p527) target = $region16
      $region15: #{transformer_forward.1} parent=11 // pred_region
        _
      $region16: #{transformer_forward.1} parent=11 // pred_fallthru
        _
      // Predicated region
      $region17: #{transformer_forward.1} parent=11 // pred_check
        %p530 = pneg %p74
      $region18: #{transformer_forward.1} parent=11 // pred_check_branch
        %532 = sbr.rel (%p530) target = $region20
      $region19: #{transformer_forward.1} parent=11 // pred_region
        _
      $region20: #{transformer_forward.1} parent=11 // pred_fallthru
        _
      // Predicated region
      $region21: #{transformer_forward.1} parent=11 // pred_check
        %p533 = pneg %p95
      $region22: #{transformer_forward.1} parent=11 // pred_check_branch
        %535 = sbr.rel (%p533) target = $region24
      $region23: #{transformer_forward.1} parent=11 // pred_region
        _
      $region24: #{transformer_forward.1} parent=11 // pred_fallthru
        _
      // Predicated region
      $region25: #{transformer_forward.1} parent=11 // pred_check
        %p536 = pneg %p428
      $region26: #{transformer_forward.1} parent=11 // pred_check_branch
        %538 = sbr.rel (%p536) target = $region28
      $region27: #{transformer_forward.1} parent=11 // pred_region
        _
      $region28: #{transformer_forward.1} parent=11 // pred_fallthru
        _
      // Predicated region
      $region29: #{transformer_forward.1} parent=11 // pred_check
        %p539 = pneg %p449
      $region30: #{transformer_forward.1} parent=11 // pred_check_branch
        %541 = sbr.rel (%p539) target = $region32
      $region31: #{transformer_forward.1} parent=11 // pred_region
        _
      $region32: #{transformer_forward.1} parent=11 // pred_fallthru
        _
      // Predicated region
      $region33: #{transformer_forward.1} parent=11 // pred_check
        %p542 = pneg %p470
      $region34: #{transformer_forward.1} parent=11 // pred_check_branch
        %544 = sbr.rel (%p542) target = $region36
      $region35: #{transformer_forward.1} parent=11 // pred_region
        _
      $region36: #{transformer_forward.1} parent=11 // pred_fallthru
        _
      // Predicated region
      $region37: #{transformer_forward.1} parent=11 // pred_check
        %p545 = pneg %p491
      $region38: #{transformer_forward.1} parent=11 // pred_check_branch
        %547 = sbr.rel (%p545) target = $region40
      $region39: #{transformer_forward.1} parent=11 // pred_region
        _
      $region40: #{transformer_forward.1} parent=11 // pred_fallthru
        _
    $region12: #{transformer_forward.1} parent=5 // pred_fallthru
      _
    %p548 = scmp.lt.s32.totalorder %s32, 2
    // Predicated region
    $region41: #{transformer_forward.1} parent=5 // pred_check
      %p549 = pneg %p548
    $region42: #{transformer_forward.1} parent=5 // pred_check_branch
      %551 = sbr.rel (%p549) target = $region44
    $region43: #{transformer_forward.1} parent=5 // pred_region
      // Predicated region
      $region45: #{transformer_forward.1} parent=43 // pred_check
        %p552 = pneg %p115
      $region46: #{transformer_forward.1} parent=43 // pred_check_branch
        %554 = sbr.rel (%p552) target = $region48
      $region47: #{transformer_forward.1} parent=43 // pred_region
        %p555 = scmp.lt.s32.totalorder %s32, 1
        %s556 = scalar_select %p555, %s32, 1
        %s557 = smul.addr %s556, 16
        %s558 = smul.addr %s557, 4
        %s559 = scalar_lea.vmem %s4, %s558
      $region48: #{transformer_forward.1} parent=43 // pred_fallthru
        _
      // Predicated region
      $region49: #{transformer_forward.1} parent=43 // pred_check
        %p560 = pneg %p141
      $region50: #{transformer_forward.1} parent=43 // pred_check_branch
        %562 = sbr.rel (%p560) target = $region52
      $region51: #{transformer_forward.1} parent=43 // pred_region
        %p563 = scmp.lt.s32.totalorder %s32, 1
        %s564 = scalar_select %p563, %s32, 1
        %s565 = smul.addr %s564, 2
        %s566 = scalar_lea.vmem %s5, %s565
      $region52: #{transformer_forward.1} parent=43 // pred_fallthru
        _
      // Predicated region
      $region53: #{transformer_forward.1} parent=43 // pred_check
        %p567 = pneg %p167
      $region54: #{transformer_forward.1} parent=43 // pred_check_branch
        %569 = sbr.rel (%p567) target = $region56
      $region55: #{transformer_forward.1} parent=43 // pred_region
        %p570 = scmp.lt.s32.totalorder %s32, 1
        %s571 = scalar_select %p570, %s32, 1
        %s572 = smul.addr %s571, 8
        %s573 = smul.addr %s572, 4
        %s574 = scalar_lea.vmem %s6, %s573
      $region56: #{transformer_forward.1} parent=43 // pred_fallthru
        _
      // Predicated region
      $region57: #{transformer_forward.1} parent=43 // pred_check
        %p575 = pneg %p193
      $region58: #{transformer_forward.1} parent=43 // pred_check_branch
        %577 = sbr.rel (%p575) target = $region60
      $region59: #{transformer_forward.1} parent=43 // pred_region
        %p578 = scmp.lt.s32.totalorder %s32, 1
        %s579 = scalar_select %p578, %s32, 1
        %s580 = scalar_lea.vmem %s7, %s579
      $region60: #{transformer_forward.1} parent=43 // pred_fallthru
        _
      // Predicated region
      $region61: #{transformer_forward.1} parent=43 // pred_check
        %p581 = pneg %p219
      $region62: #{transformer_forward.1} parent=43 // pred_check_branch
        %583 = sbr.rel (%p581) target = $region64
      $region63: #{transformer_forward.1} parent=43 // pred_region
        %p584 = scmp.lt.s32.totalorder %s32, 1
        %s585 = scalar_select %p584, %s32, 1
        %s586 = scalar_lea.vmem %s8, %s585
      $region64: #{transformer_forward.1} parent=43 // pred_fallthru
        _
      // Predicated region
      $region65: #{transformer_forward.1} parent=43 // pred_check
        %p587 = pneg %p245
      $region66: #{transformer_forward.1} parent=43 // pred_check_branch
        %589 = sbr.rel (%p587) target = $region68
      $region67: #{transformer_forward.1} parent=43 // pred_region
        %p590 = scmp.lt.s32.totalorder %s32, 1
        %s591 = scalar_select %p590, %s32, 1
        %s592 = scalar_lea.vmem %s9, %s591
      $region68: #{transformer_forward.1} parent=43 // pred_fallthru
        _
      // Predicated region
      $region69: #{transformer_forward.1} parent=43 // pred_check
        %p593 = pneg %p271
      $region70: #{transformer_forward.1} parent=43 // pred_check_branch
        %595 = sbr.rel (%p593) target = $region72
      $region71: #{transformer_forward.1} parent=43 // pred_region
        %p596 = scmp.lt.s32.totalorder %s32, 1
        %s597 = scalar_select %p596, %s32, 1
        %s598 = smul.addr %s597, 128
        %s599 = smul.addr %s598, 4
        %s600 = scalar_lea.vmem %s10, %s599
      $region72: #{transformer_forward.1} parent=43 // pred_fallthru
        _
      // Predicated region
      $region73: #{transformer_forward.1} parent=43 // pred_check
        %p601 = pneg %p297
      $region74: #{transformer_forward.1} parent=43 // pred_check_branch
        %603 = sbr.rel (%p601) target = $region76
      $region75: #{transformer_forward.1} parent=43 // pred_region
        %p604 = scmp.lt.s32.totalorder %s32, 1
        %s605 = scalar_select %p604, %s32, 1
        %s606 = smul.addr %s605, 16
        %s607 = scalar_lea.vmem %s11, %s606
      $region76: #{transformer_forward.1} parent=43 // pred_fallthru
        _
      // Predicated region
      $region77: #{transformer_forward.1} parent=43 // pred_check
        %p608 = pneg %p323
      $region78: #{transformer_forward.1} parent=43 // pred_check_branch
        %610 = sbr.rel (%p608) target = $region80
      $region79: #{transformer_forward.1} parent=43 // pred_region
        %p611 = scmp.lt.s32.totalorder %s32, 1
        %s612 = scalar_select %p611, %s32, 1
        %s613 = smul.addr %s612, 256
        %s614 = smul.addr %s613, 4
        %s615 = scalar_lea.vmem %s12, %s614
      $region80: #{transformer_forward.1} parent=43 // pred_fallthru
        _
      // Predicated region
      $region81: #{transformer_forward.1} parent=43 // pred_check
        %p616 = pneg %p349
      $region82: #{transformer_forward.1} parent=43 // pred_check_branch
        %618 = sbr.rel (%p616) target = $region84
      $region83: #{transformer_forward.1} parent=43 // pred_region
        %p619 = scmp.lt.s32.totalorder %s32, 1
        %s620 = scalar_select %p619, %s32, 1
        %s621 = scalar_lea.vmem %s13, %s620
      $region84: #{transformer_forward.1} parent=43 // pred_fallthru
        _
      // Predicated region
      $region85: #{transformer_forward.1} parent=43 // pred_check
        %p622 = pneg %p375
      $region86: #{transformer_forward.1} parent=43 // pred_check_branch
        %624 = sbr.rel (%p622) target = $region88
      $region87: #{transformer_forward.1} parent=43 // pred_region
        %p625 = scmp.lt.s32.totalorder %s32, 1
        %s626 = scalar_select %p625, %s32, 1
        %s627 = scalar_lea.vmem %s14, %s626
      $region88: #{transformer_forward.1} parent=43 // pred_fallthru
        _
      // Predicated region
      $region89: #{transformer_forward.1} parent=43 // pred_check
        %p628 = pneg %p401
      $region90: #{transformer_forward.1} parent=43 // pred_check_branch
        %630 = sbr.rel (%p628) target = $region92
      $region91: #{transformer_forward.1} parent=43 // pred_region
        %p631 = scmp.lt.s32.totalorder %s32, 1
        %s632 = scalar_select %p631, %s32, 1
        %s633 = scalar_lea.vmem %s15, %s632
      $region92: #{transformer_forward.1} parent=43 // pred_fallthru
        _
    $region44: #{transformer_forward.1} parent=5 // pred_fallthru
      _
    %p634 = scmp.le.s32.totalorder 1, %s32
    %p635 = scmp.lt.s32.totalorder %s32, 3
    %p636 = pnand %p634, %p635
    %p637 = pneg %p636
    // Predicated region
    $region93: #{transformer_forward.1} parent=5 // pred_check
      _
    $region94: #{transformer_forward.1} parent=5 // pred_check_branch
      %639 = sbr.rel (%p636) target = $region96
    $region95: #{transformer_forward.1} parent=5 // pred_region
      %s640 = ssub.s32 %s32, 1
      %p641 = pneg %p53
      %p642 = pneg %p50
      %p643 = pneg %p74
      %p644 = pneg %p71
      %p645 = pneg %p95
      %p646 = pneg %p92
      %p647 = scmp.lt.s32.totalorder %s37, 1
      %s648 = scalar_select %p647, %s37, 1
      %s649 = smul.addr %s648, 16
      %s650 = smul.addr %s649, 4
      %s651 = scalar_lea.vmem %s4, %s650
      %p652 = pneg %p121
      %p653 = pneg %p118
      %p654 = scmp.lt.s32.totalorder %s37, 1
      %s655 = scalar_select %p654, %s37, 1
      %s656 = smul.addr %s655, 2
      %s657 = scalar_lea.vmem %s5, %s656
      %p658 = pneg %p147
      %p659 = pneg %p144
      %p660 = scmp.lt.s32.totalorder %s37, 1
      %s661 = scalar_select %p660, %s37, 1
      %s662 = smul.addr %s661, 8
      %s663 = smul.addr %s662, 4
      %s664 = scalar_lea.vmem %s6, %s663
      %p665 = pneg %p173
      %p666 = pneg %p170
      %p667 = scmp.lt.s32.totalorder %s37, 1
      %s668 = scalar_select %p667, %s37, 1
      %s669 = scalar_lea.vmem %s7, %s668
      %p670 = pneg %p199
      %p671 = pneg %p196
      %p672 = scmp.lt.s32.totalorder %s37, 1
      %s673 = scalar_select %p672, %s37, 1
      %s674 = scalar_lea.vmem %s8, %s673
      %p675 = pneg %p225
      %p676 = pneg %p222
      %p677 = scmp.lt.s32.totalorder %s37, 1
      %s678 = scalar_select %p677, %s37, 1
      %s679 = scalar_lea.vmem %s9, %s678
      %p680 = pneg %p251
      %p681 = pneg %p248
      %p682 = scmp.lt.s32.totalorder %s37, 1
      %s683 = scalar_select %p682, %s37, 1
      %s684 = smul.addr %s683, 128
      %s685 = smul.addr %s684, 4
      %s686 = scalar_lea.vmem %s10, %s685
      %p687 = pneg %p277
      %p688 = pneg %p274
      %p689 = scmp.lt.s32.totalorder %s37, 1
      %s690 = scalar_select %p689, %s37, 1
      %s691 = smul.addr %s690, 16
      %s692 = scalar_lea.vmem %s11, %s691
      %p693 = pneg %p303
      %p694 = pneg %p300
      %p695 = scmp.lt.s32.totalorder %s37, 1
      %s696 = scalar_select %p695, %s37, 1
      %s697 = smul.addr %s696, 256
      %s698 = smul.addr %s697, 4
      %s699 = scalar_lea.vmem %s12, %s698
      %p700 = pneg %p329
      %p701 = pneg %p326
      %p702 = scmp.lt.s32.totalorder %s37, 1
      %s703 = scalar_select %p702, %s37, 1
      %s704 = scalar_lea.vmem %s13, %s703
      %p705 = pneg %p355
      %p706 = pneg %p352
      %p707 = scmp.lt.s32.totalorder %s37, 1
      %s708 = scalar_select %p707, %s37, 1
      %s709 = scalar_lea.vmem %s14, %s708
      %p710 = pneg %p381
      %p711 = pneg %p378
      %p712 = scmp.lt.s32.totalorder %s37, 1
      %s713 = scalar_select %p712, %s37, 1
      %s714 = scalar_lea.vmem %s15, %s713
      %p715 = pneg %p407
      %p716 = pneg %p404
      %p717 = pneg %p428
      %p718 = pneg %p425
      %p719 = pneg %p449
      %p720 = pneg %p446
      %p721 = pneg %p470
      %p722 = pneg %p467
      %p723 = pneg %p491
      %p724 = pneg %p488
      %p725 = pneg %p512
      %p726 = pneg %p509
      %p727 = scmp.lt.s32.totalorder %s37, 1
      %s728 = scalar_select %p727, %s37, 1
      %s729 = smul.addr %s728, 16
      %s730 = smul.addr %s729, 4
      %s731 = scalar_lea.vmem %s4, %s730
      %p732 = scmp.lt.s32.totalorder %s37, 1
      %s733 = scalar_select %p732, %s37, 1
      %s734 = smul.addr %s733, 2
      %s735 = scalar_lea.vmem %s5, %s734
      %p736 = scmp.lt.s32.totalorder %s37, 1
      %s737 = scalar_select %p736, %s37, 1
      %s738 = smul.addr %s737, 8
      %s739 = smul.addr %s738, 4
      %s740 = scalar_lea.vmem %s6, %s739
      %p741 = scmp.lt.s32.totalorder %s37, 1
      %s742 = scalar_select %p741, %s37, 1
      %s743 = scalar_lea.vmem %s7, %s742
      %p744 = scmp.lt.s32.totalorder %s37, 1
      %s745 = scalar_select %p744, %s37, 1
      %s746 = scalar_lea.vmem %s8, %s745
      %p747 = scmp.lt.s32.totalorder %s37, 1
      %s748 = scalar_select %p747, %s37, 1
      %s749 = scalar_lea.vmem %s9, %s748
      %p750 = scmp.lt.s32.totalorder %s37, 1
      %s751 = scalar_select %p750, %s37, 1
      %s752 = smul.addr %s751, 128
      %s753 = smul.addr %s752, 4
      %s754 = scalar_lea.vmem %s10, %s753
      %p755 = scmp.lt.s32.totalorder %s37, 1
      %s756 = scalar_select %p755, %s37, 1
      %s757 = smul.addr %s756, 16
      %s758 = scalar_lea.vmem %s11, %s757
      %p759 = scmp.lt.s32.totalorder %s37, 1
      %s760 = scalar_select %p759, %s37, 1
      %s761 = smul.addr %s760, 256
      %s762 = smul.addr %s761, 4
      %s763 = scalar_lea.vmem %s12, %s762
      %p764 = scmp.lt.s32.totalorder %s37, 1
      %s765 = scalar_select %p764, %s37, 1
      %s766 = scalar_lea.vmem %s13, %s765
      %p767 = scmp.lt.s32.totalorder %s37, 1
      %s768 = scalar_select %p767, %s37, 1
      %s769 = scalar_lea.vmem %s14, %s768
      %p770 = scmp.lt.s32.totalorder %s37, 1
      %s771 = scalar_select %p770, %s37, 1
      %s772 = scalar_lea.vmem %s15, %s771
      %p774 = scmp.eq.s32.totalorder %s37, 0
      // Predicated region
      $region97: #{transformer_forward.1} parent=95 // pred_check
        %p775 = pneg %p774
      $region98: #{transformer_forward.1} parent=95 // pred_check_branch
        %777 = sbr.rel (%p775) target = $region100
      $region99: #{transformer_forward.1} parent=95 // pred_region
        %s778 = sld [smem:[#allocation4]]
        %s779 = scalar_lea.vmem %s1, %s778
        %v780 = vld [vmem:[%s779] sm:$0x1]
        %v781 = vld [vmem:[%s2] sm:$0x1]
        %v782 = vadd.f32 %v780, %v781
        %s783 = sld [smem:[#allocation4 + $0x1]]
        %s784 = scalar_lea.vmem %s1, %s783
        %v785 = vld [vmem:[%s784] sm:$0x1]
        %v786 = vld [vmem:[%s2 + $0x1] sm:$0x1]
        %v787 = vadd.f32 %v785, %v786
        %s788 = sld [smem:[#allocation4 + $0x2]]
        %s789 = scalar_lea.vmem %s1, %s788
        %v790 = vld [vmem:[%s789] sm:$0x1]
        %v791 = vld [vmem:[%s2 + $0x2] sm:$0x1]
        %v792 = vadd.f32 %v790, %v791
        %s793 = sld [smem:[#allocation4 + $0x3]]
        %s794 = scalar_lea.vmem %s1, %s793
        %v795 = vld [vmem:[%s794] sm:$0x1]
        %v796 = vld [vmem:[%s2 + $0x3] sm:$0x1]
        %v797 = vadd.f32 %v795, %v796
        %s798 = sld [smem:[#allocation4 + $0x4]]
        %s799 = scalar_lea.vmem %s1, %s798
        %v800 = vld [vmem:[%s799] sm:$0x1]
        %v801 = vld [vmem:[%s2 + $0x4] sm:$0x1]
        %v802 = vadd.f32 %v800, %v801
        %s803 = sld [smem:[#allocation4 + $0x5]]
        %s804 = scalar_lea.vmem %s1, %s803
        %v805 = vld [vmem:[%s804] sm:$0x1]
        %v806 = vld [vmem:[%s2 + $0x5] sm:$0x1]
        %v807 = vadd.f32 %v805, %v806
        %s808 = sld [smem:[#allocation4 + $0x6]]
        %s809 = scalar_lea.vmem %s1, %s808
        %v810 = vld [vmem:[%s809] sm:$0x1]
        %v811 = vld [vmem:[%s2 + $0x6] sm:$0x1]
        %v812 = vadd.f32 %v810, %v811
        %s813 = sld [smem:[#allocation4 + $0x7]]
        %s814 = scalar_lea.vmem %s1, %s813
        %v815 = vld [vmem:[%s814] sm:$0x1]
        %v816 = vld [vmem:[%s2 + $0x7] sm:$0x1]
        %v817 = vadd.f32 %v815, %v816
        %s818 = sld [smem:[#allocation4 + $0x8]]
        %s819 = scalar_lea.vmem %s1, %s818
        %v820 = vld [vmem:[%s819] sm:$0x1]
        %v821 = vadd.f32 %v820, %v781
        %s822 = sld [smem:[#allocation4 + $0x9]]
        %s823 = scalar_lea.vmem %s1, %s822
        %v824 = vld [vmem:[%s823] sm:$0x1]
        %v825 = vadd.f32 %v824, %v786
        %s826 = sld [smem:[#allocation4 + $0xa]]
        %s827 = scalar_lea.vmem %s1, %s826
        %v828 = vld [vmem:[%s827] sm:$0x1]
        %v829 = vadd.f32 %v828, %v791
        %s830 = sld [smem:[#allocation4 + $0xb]]
        %s831 = scalar_lea.vmem %s1, %s830
        %v832 = vld [vmem:[%s831] sm:$0x1]
        %v833 = vadd.f32 %v832, %v796
        %s834 = sld [smem:[#allocation4 + $0xc]]
        %s835 = scalar_lea.vmem %s1, %s834
        %v836 = vld [vmem:[%s835] sm:$0x1]
        %v837 = vadd.f32 %v836, %v801
        %s838 = sld [smem:[#allocation4 + $0xd]]
        %s839 = scalar_lea.vmem %s1, %s838
        %v840 = vld [vmem:[%s839] sm:$0x1]
        %v841 = vadd.f32 %v840, %v806
        %s842 = sld [smem:[#allocation4 + $0xe]]
        %s843 = scalar_lea.vmem %s1, %s842
        %v844 = vld [vmem:[%s843] sm:$0x1]
        %v845 = vadd.f32 %v844, %v811
        %s846 = sld [smem:[#allocation4 + $0xf]]
        %s847 = scalar_lea.vmem %s1, %s846
        %v848 = vld [vmem:[%s847] sm:$0x1]
        %v849 = vadd.f32 %v848, %v816
        %v851 = vrot.slane %v787, 7
        %v854 = vrot.slane %v792, 6
        %v857 = vrot.slane %v797, 5
        %v860 = vrot.slane %v802, 4
        %v863 = vrot.slane %v807, 3
        %v866 = vrot.slane %v812, 2
        %v869 = vrot.slane %v817, 1
        %v872 = vrot.slane %v825, 7
        %v875 = vrot.slane %v829, 6
        %v878 = vrot.slane %v833, 5
        %v881 = vrot.slane %v837, 4
        %v884 = vrot.slane %v841, 3
        %v887 = vrot.slane %v845, 2
        %v890 = vrot.slane %v849, 1
        %vm892 = vcmask 1040384
        %v893 = vsel %vm892, %v782, %v851
        %vm894 = vcmask 1041408
        %v895 = vsel %vm894, %v893, %v854
        %vm896 = vcmask 1042432
        %v897 = vsel %vm896, %v895, %v857
        %vm898 = vcmask 1043456
        %v899 = vsel %vm898, %v897, %v860
        %vm900 = vcmask 1044480
        %v901 = vsel %vm900, %v899, %v863
        %vm902 = vcmask 1045504
        %v903 = vsel %vm902, %v901, %v866
        %vm904 = vcmask 1046528
        %v905 = vsel %vm904, %v903, %v869
        %v906 = vsel %vm892, %v821, %v872
        %v907 = vsel %vm894, %v906, %v875
        %v908 = vsel %vm896, %v907, %v878
        %v909 = vsel %vm898, %v908, %v881
        %v910 = vsel %vm900, %v909, %v884
        %v911 = vsel %vm902, %v910, %v887
        %v912 = vsel %vm904, %v911, %v890
        %vm913 = vcmask 523264
        %914 = vst.msk [vmem:[#allocation2] sm:$0xff] %vm913, %v905
        %915 = vst.msk [vmem:[#allocation2 + $0x8] sm:$0xff] %vm913, %v912
      $region100: #{transformer_forward.1} parent=95 // pred_fallthru
        _
      %v916 = vld [vmem:[#allocation2] sm:$0xff]
      %v917 = vld [vmem:[#allocation2 + $0x8] sm:$0xff]
      %v918 = vpack.c.bf16 %v917, %v916
      %v919 = vld [vmem:[%s3] sm:$0x3]
      %v920 = vld [vmem:[%s731] sm:$0xff]
      %v921 = vld [vmem:[%s731 + $0x8] sm:$0xff]
      %v922 = vld [vmem:[%s731 + $0x10] sm:$0xff]
      %v923 = vld [vmem:[%s731 + $0x18] sm:$0xff]
      %v924 = vld [vmem:[%s731 + $0x20] sm:$0xff]
      %v925 = vld [vmem:[%s731 + $0x28] sm:$0xff]
      %v926 = vld [vmem:[%s731 + $0x30] sm:$0xff]
      %v927 = vld [vmem:[%s731 + $0x38] sm:$0xff]
      %v928 = vld [vmem:[%s735] sm:$0x3]
      %v930 = vlaneseq
      %v931 = vshrl.u32 %v930, 7
      %v932 = vsub.s32 0, %v931
      %v933 = vrot.slane %v928, %v932
      %v934 = vlaneseq
      %v935 = vshrl.u32 %v934, 7
      %v936 = vsub.s32 1, %v935
      %v937 = vrot.slane %v928, %v936
      %v948 = vunpack.c.l.b16 %v920
      %v949 = vunpack.c.h.b16 %v920
      %v950 = vunpack.c.l.b16 %v921
      %v951 = vunpack.c.h.b16 %v921
      %v952 = vunpack.c.l.b16 %v922
      %v953 = vunpack.c.h.b16 %v922
      %v954 = vunpack.c.l.b16 %v923
      %v955 = vunpack.c.h.b16 %v923
      %v956 = vunpack.c.l.b16 %v924
      %v957 = vunpack.c.h.b16 %v924
      %v958 = vunpack.c.l.b16 %v925
      %v959 = vunpack.c.h.b16 %v925
      %v960 = vunpack.c.l.b16 %v926
      %v961 = vunpack.c.h.b16 %v926
      %v962 = vunpack.c.l.b16 %v927
      %v963 = vunpack.c.h.b16 %v927
      %v964 = vpack.c.b16 %v950, %v948
      %v965 = vpack.c.b16 %v951, %v949
      %v966 = vpack.c.b16 %v954, %v952
      %v967 = vpack.c.b16 %v955, %v953
      %v968 = vpack.c.b16 %v958, %v956
      %v969 = vpack.c.b16 %v959, %v957
      %v970 = vpack.c.b16 %v962, %v960
      %v971 = vpack.c.b16 %v963, %v961
      %vm980 = vcmask 523264
      %v982 = vsel %vm980, %v918, 0
      %984 = vmatprep.subr.bf16.mxu0 %v965
      %985 = vmatpush1.bf16.msra.mxu0 %v964
      %986 = vmatprep.subr.bf16.mxu0 %v967
      %987 = vmatpush1.bf16.msra.mxu0 %v966
      %988 = vmatprep.subr.bf16.mxu0 %v969
      %989 = vmatpush1.bf16.msra.mxu0 %v968
      %990 = vmatprep.subr.bf16.mxu0 %v971
      %991 = vmatpush1.bf16.msra.mxu0 %v970
      %992 = vmatprep.subr.bf16.mxu0 0
      %993 = vmatpush1.bf16.msra.mxu0 0
      %994 = vmatprep.subr.bf16.mxu0 0
      %995 = vmatpush1.bf16.msra.mxu0 0
      %996 = vmatprep.subr.bf16.mxu0 0
      %997 = vmatpush1.bf16.msra.mxu0 0
      %998 = vmatprep.subr.bf16.mxu0 0
      %999 = vmatpush1.bf16.msra.mxu0 0
      %1000 = vmatprep.subr.bf16.mxu0 0
      %1001 = vmatpush1.bf16.msra.mxu0 0
      %1002 = vmatprep.subr.bf16.mxu0 0
      %1003 = vmatpush1.bf16.msra.mxu0 0
      %1004 = vmatprep.subr.bf16.mxu0 0
      %1005 = vmatpush1.bf16.msra.mxu0 0
      %1006 = vmatprep.subr.bf16.mxu0 0
      %1007 = vmatpush1.bf16.msra.mxu0 0
      %1008 = vmatprep.subr.bf16.mxu0 0
      %1009 = vmatpush1.bf16.msra.mxu0 0
      %1010 = vmatprep.subr.bf16.mxu0 0
      %1011 = vmatpush1.bf16.msra.mxu0 0
      %1012 = vmatprep.subr.bf16.mxu0 0
      %1013 = vmatpush1.bf16.msra.mxu0 0
      %1014 = vmatprep.subr.bf16.mxu0 0
      %1015 = vmatpush1.bf16.msra.mxu0 0
      %1016 = vmatprep.mubr.bf16.mxu0 0
      %1017 = vmatmul.mubr.bf16.gmra.mrb[0].mxu0 %v982
      %v1018 = vpop.f32.mrb[0].mxu0
      %v1019 = vadd.f32 %v933, %v1018
      %v1020 = vpop.f32.mrb[0].mxu0
      %v1021 = vadd.f32 %v937, %v1020
      %v1022 = vpop.f32.mrb[0].mxu0
      %v1023 = vadd.f32 %v933, %v1022
      %v1024 = vpop.f32.mrb[0].mxu0
      %v1025 = vadd.f32 %v937, %v1024
      %1026 = vdwg.mxu0
      %1028 = vrot.lane.b32.xlu0 %v1019, 64
      %v1029 = vpop.permute.xlu0 %1028
      %vm1030 = vcmask 130048
      %v1031 = vsel %vm1030, %v1019, 0
      %v1033 = vsel %vm1030, %v1029, 0
      %1035 = vmatprep.subr.mxu0 0.0
      %1036 = vmatpush1.xpose.msra.mxu0 %v1033
      %1037 = vmatprep.subr.mxu0 0.0
      %1038 = vmatpush1.xpose.msra.mxu0 0.0
      %1039 = vmatprep.subr.mxu0 0.0
      %1040 = vmatpush1.xpose.msra.mxu0 0.0
      %1041 = vmatprep.subr.mxu0 0.0
      %1042 = vmatpush1.xpose.msra.mxu0 0.0
      %1043 = vmatprep.subr.mxu0 0.0
      %1044 = vmatpush1.xpose.msra.mxu0 0.0
      %1045 = vmatprep.subr.mxu0 0.0
      %1046 = vmatpush1.xpose.msra.mxu0 0.0
      %1047 = vmatprep.subr.mxu0 0.0
      %1048 = vmatpush1.xpose.msra.mxu0 0.0
      %1049 = vmatprep.subr.mxu0 0.0
      %1050 = vmatpush1.xpose.msra.mxu0 0.0
      %1051 = vmatprep.subr.mxu0 0.0
      %1052 = vmatpush1.xpose.msra.mxu0 0.0
      %1053 = vmatprep.subr.mxu0 0.0
      %1054 = vmatpush1.xpose.msra.mxu0 0.0
      %1055 = vmatprep.subr.mxu0 0.0
      %1056 = vmatpush1.xpose.msra.mxu0 0.0
      %1057 = vmatprep.subr.mxu0 0.0
      %1058 = vmatpush1.xpose.msra.mxu0 0.0
      %1059 = vmatprep.subr.mxu0 0.0
      %1060 = vmatpush1.xpose.msra.mxu0 0.0
      %1061 = vmatprep.subr.mxu0 0.0
      %1062 = vmatpush1.xpose.msra.mxu0 0.0
      %1063 = vmatprep.subr.mxu0 0.0
      %1064 = vmatpush1.xpose.msra.mxu0 0.0
      %1065 = vmatprep.subr.mxu0 0.0
      %1066 = vmatpush1.xpose.msra.mxu0 0.0
      %1067 = vmatprep.subr.mxu0 0.0
      %1068 = vmatpush1.xpose.msra.mxu0 0.0
      %1069 = vmatprep.subr.mxu0 0.0
      %1070 = vmatpush1.xpose.msra.mxu0 0.0
      %1071 = vmatprep.subr.mxu0 0.0
      %1072 = vmatpush1.xpose.msra.mxu0 0.0
      %1073 = vmatprep.subr.mxu0 0.0
      %1074 = vmatpush1.xpose.msra.mxu0 0.0
      %1075 = vmatprep.subr.mxu0 0.0
      %1076 = vmatpush1.xpose.msra.mxu0 0.0
      %1077 = vmatprep.subr.mxu0 0.0
      %1078 = vmatpush1.xpose.msra.mxu0 0.0
      %1079 = vmatprep.subr.mxu0 0.0
      %1080 = vmatpush1.xpose.msra.mxu0 0.0
      %1081 = vmatprep.subr.mxu0 0.0
      %1082 = vmatpush1.xpose.msra.mxu0 0.0
      %1083 = vmatprep.subr.mxu0 0.0
      %1084 = vmatpush1.xpose.msra.mxu0 0.0
      %1085 = vmatprep.subr.mxu0 0.0
      %1086 = vmatpush1.xpose.msra.mxu0 0.0
      %1087 = vmatprep.subr.mxu0 0.0
      %1088 = vmatpush1.xpose.msra.mxu0 0.0
      %1089 = vmatprep.subr.mxu0 0.0
      %1090 = vmatpush1.xpose.msra.mxu0 0.0
      %1091 = vmatprep.subr.mxu0 0.0
      %1092 = vmatpush1.xpose.msra.mxu0 0.0
      %1093 = vmatprep.subr.mxu0 0.0
      %1094 = vmatpush1.xpose.msra.mxu0 0.0
      %1095 = vmatprep.subr.mxu0 0.0
      %1096 = vmatpush1.xpose.msra.mxu0 0.0
      %1097 = vmatprep.subr.mxu0 0.0
      %1098 = vmatpush1.xpose.msra.mxu0 0.0
      %1099 = vmatprep.mubr.f32.mxu0 0.0
      %1100 = vmatmul.mubr.f32.gmra.mrb[0].mxu0 %v1031
      %v1101 = vpop.f32.mrb[0].mxu0
      %v1102 = vadd.f32 0.0, %v1101
      %v1103 = vpop.f32.mrb[0].mxu0
      %1104 = vdwg.mxu0
      %v1105 = vmul.f32 %v1102, 0.25
      %v1106 = vlaneseq
      %v1107 = vshrl.u32 %v1106, 7
      %v1108 = vsub.s32 0, %v1107
      %v1109 = vrot.slane %v919, %v1108
      %v1110 = vadd.f32 %v1105, %v1109
      %vm1111 = vcmask 64512
      %v1112 = vsel %vm1111, %v1110, -inf
      %1113 = vmax.xlane.f32.xlu0 %v1112
      %v1114 = vpop.xlane.xlu0 %1113
      %v1115 = vsub.f32 %v1110, %v1114
      %v1116 = vmul.f32 %v1115, 1.442695
      %v1117 = vpow.pop %v1116
      %v1118 = vsel %vm1111, %v1117, 0.0
      %1119 = vadd.xlane.f32.xlu0 %v1118
      %v1120 = vpop.xlane.xlu0 %1119
      %v1121 = vrcp.pop %v1120
      %v1122 = vmul.f32 %v1117, %v1121
      %v1124 = vsel %vm1111, %v1122, 0
      %1126 = vmatprep.subr.mxu0 0.0
      %1127 = vmatpush1.msra.mxu0 %v1021
      %1128 = vmatprep.subr.mxu0 0.0
      %1129 = vmatpush1.msra.mxu0 0.0
      %1130 = vmatprep.subr.mxu0 0.0
      %1131 = vmatpush1.msra.mxu0 0.0
      %1132 = vmatprep.subr.mxu0 0.0
      %1133 = vmatpush1.msra.mxu0 0.0
      %1134 = vmatprep.subr.mxu0 0.0
      %1135 = vmatpush1.msra.mxu0 0.0
      %1136 = vmatprep.subr.mxu0 0.0
      %1137 = vmatpush1.msra.mxu0 0.0
      %1138 = vmatprep.subr.mxu0 0.0
      %1139 = vmatpush1.msra.mxu0 0.0
      %1140 = vmatprep.subr.mxu0 0.0
      %1141 = vmatpush1.msra.mxu0 0.0
      %1142 = vmatprep.subr.mxu0 0.0
      %1143 = vmatpush1.msra.mxu0 0.0
      %1144 = vmatprep.subr.mxu0 0.0
      %1145 = vmatpush1.msra.mxu0 0.0
      %1146 = vmatprep.subr.mxu0 0.0
      %1147 = vmatpush1.msra.mxu0 0.0
      %1148 = vmatprep.subr.mxu0 0.0
      %1149 = vmatpush1.msra.mxu0 0.0
      %1150 = vmatprep.subr.mxu0 0.0
      %1151 = vmatpush1.msra.mxu0 0.0
      %1152 = vmatprep.subr.mxu0 0.0
      %1153 = vmatpush1.msra.mxu0 0.0
      %1154 = vmatprep.subr.mxu0 0.0
      %1155 = vmatpush1.msra.mxu0 0.0
      %1156 = vmatprep.subr.mxu0 0.0
      %1157 = vmatpush1.msra.mxu0 0.0
      %1158 = vmatprep.subr.mxu0 0.0
      %1159 = vmatpush1.msra.mxu0 0.0
      %1160 = vmatprep.subr.mxu0 0.0
      %1161 = vmatpush1.msra.mxu0 0.0
      %1162 = vmatprep.subr.mxu0 0.0
      %1163 = vmatpush1.msra.mxu0 0.0
      %1164 = vmatprep.subr.mxu0 0.0
      %1165 = vmatpush1.msra.mxu0 0.0
      %1166 = vmatprep.subr.mxu0 0.0
      %1167 = vmatpush1.msra.mxu0 0.0
      %1168 = vmatprep.subr.mxu0 0.0
      %1169 = vmatpush1.msra.mxu0 0.0
      %1170 = vmatprep.subr.mxu0 0.0
      %1171 = vmatpush1.msra.mxu0 0.0
      %1172 = vmatprep.subr.mxu0 0.0
      %1173 = vmatpush1.msra.mxu0 0.0
      %1174 = vmatprep.subr.mxu0 0.0
      %1175 = vmatpush1.msra.mxu0 0.0
      %1176 = vmatprep.subr.mxu0 0.0
      %1177 = vmatpush1.msra.mxu0 0.0
      %1178 = vmatprep.subr.mxu0 0.0
      %1179 = vmatpush1.msra.mxu0 0.0
      %1180 = vmatprep.subr.mxu0 0.0
      %1181 = vmatpush1.msra.mxu0 0.0
      %1182 = vmatprep.subr.mxu0 0.0
      %1183 = vmatpush1.msra.mxu0 0.0
      %1184 = vmatprep.subr.mxu0 0.0
      %1185 = vmatpush1.msra.mxu0 0.0
      %1186 = vmatprep.subr.mxu0 0.0
      %1187 = vmatpush1.msra.mxu0 0.0
      %1188 = vmatprep.subr.mxu0 0.0
      %1189 = vmatpush1.msra.mxu0 0.0
      %1190 = vmatprep.mubr.f32.mxu0 0.0
      %1191 = vmatmul.mubr.f32.gmra.mrb[0].mxu0 %v1124
      %v1192 = vpop.f32.mrb[0].mxu0
      %v1193 = vadd.f32 0.0, %v1192
      %v1194 = vpop.f32.mrb[0].mxu0
      %1195 = vdwg.mxu0
      %1197 = vrot.lane.b32.xlu0 %v1023, 64
      %v1198 = vpop.permute.xlu0 %1197
      %v1199 = vsel %vm1030, %v1023, 0
      %v1201 = vsel %vm1030, %v1198, 0
      %1203 = vmatprep.subr.mxu0 0.0
      %1204 = vmatpush1.xpose.msra.mxu0 %v1201
      %1205 = vmatprep.subr.mxu0 0.0
      %1206 = vmatpush1.xpose.msra.mxu0 0.0
      %1207 = vmatprep.subr.mxu0 0.0
      %1208 = vmatpush1.xpose.msra.mxu0 0.0
      %1209 = vmatprep.subr.mxu0 0.0
      %1210 = vmatpush1.xpose.msra.mxu0 0.0
      %1211 = vmatprep.subr.mxu0 0.0
      %1212 = vmatpush1.xpose.msra.mxu0 0.0
      %1213 = vmatprep.subr.mxu0 0.0
      %1214 = vmatpush1.xpose.msra.mxu0 0.0
      %1215 = vmatprep.subr.mxu0 0.0
      %1216 = vmatpush1.xpose.msra.mxu0 0.0
      %1217 = vmatprep.subr.mxu0 0.0
      %1218 = vmatpush1.xpose.msra.mxu0 0.0
      %1219 = vmatprep.subr.mxu0 0.0
      %1220 = vmatpush1.xpose.msra.mxu0 0.0
      %1221 = vmatprep.subr.mxu0 0.0
      %1222 = vmatpush1.xpose.msra.mxu0 0.0
      %1223 = vmatprep.subr.mxu0 0.0
      %1224 = vmatpush1.xpose.msra.mxu0 0.0
      %1225 = vmatprep.subr.mxu0 0.0
      %1226 = vmatpush1.xpose.msra.mxu0 0.0
      %1227 = vmatprep.subr.mxu0 0.0
      %1228 = vmatpush1.xpose.msra.mxu0 0.0
      %1229 = vmatprep.subr.mxu0 0.0
      %1230 = vmatpush1.xpose.msra.mxu0 0.0
      %1231 = vmatprep.subr.mxu0 0.0
      %1232 = vmatpush1.xpose.msra.mxu0 0.0
      %1233 = vmatprep.subr.mxu0 0.0
      %1234 = vmatpush1.xpose.msra.mxu0 0.0
      %1235 = vmatprep.subr.mxu0 0.0
      %1236 = vmatpush1.xpose.msra.mxu0 0.0
      %1237 = vmatprep.subr.mxu0 0.0
      %1238 = vmatpush1.xpose.msra.mxu0 0.0
      %1239 = vmatprep.subr.mxu0 0.0
      %1240 = vmatpush1.xpose.msra.mxu0 0.0
      %1241 = vmatprep.subr.mxu0 0.0
      %1242 = vmatpush1.xpose.msra.mxu0 0.0
      %1243 = vmatprep.subr.mxu0 0.0
      %1244 = vmatpush1.xpose.msra.mxu0 0.0
      %1245 = vmatprep.subr.mxu0 0.0
      %1246 = vmatpush1.xpose.msra.mxu0 0.0
      %1247 = vmatprep.subr.mxu0 0.0
      %1248 = vmatpush1.xpose.msra.mxu0 0.0
      %1249 = vmatprep.subr.mxu0 0.0
      %1250 = vmatpush1.xpose.msra.mxu0 0.0
      %1251 = vmatprep.subr.mxu0 0.0
      %1252 = vmatpush1.xpose.msra.mxu0 0.0
      %1253 = vmatprep.subr.mxu0 0.0
      %1254 = vmatpush1.xpose.msra.mxu0 0.0
      %1255 = vmatprep.subr.mxu0 0.0
      %1256 = vmatpush1.xpose.msra.mxu0 0.0
      %1257 = vmatprep.subr.mxu0 0.0
      %1258 = vmatpush1.xpose.msra.mxu0 0.0
      %1259 = vmatprep.subr.mxu0 0.0
      %1260 = vmatpush1.xpose.msra.mxu0 0.0
      %1261 = vmatprep.subr.mxu0 0.0
      %1262 = vmatpush1.xpose.msra.mxu0 0.0
      %1263 = vmatprep.subr.mxu0 0.0
      %1264 = vmatpush1.xpose.msra.mxu0 0.0
      %1265 = vmatprep.subr.mxu0 0.0
      %1266 = vmatpush1.xpose.msra.mxu0 0.0
      %1267 = vmatprep.mubr.f32.mxu0 0.0
      %1268 = vmatmul.mubr.f32.gmra.mrb[0].mxu0 %v1199
      %v1269 = vpop.f32.mrb[0].mxu0
      %v1270 = vadd.f32 0.0, %v1269
      %v1271 = vpop.f32.mrb[0].mxu0
      %1272 = vdwg.mxu0
      %v1273 = vmul.f32 %v1270, 0.25
      %v1274 = vlaneseq
      %v1275 = vshrl.u32 %v1274, 7
      %v1276 = vsub.s32 1, %v1275
      %v1277 = vrot.slane %v919, %v1276
      %v1278 = vadd.f32 %v1273, %v1277
      %v1279 = vsel %vm1111, %v1278, -inf
      %1280 = vmax.xlane.f32.xlu0 %v1279
      %v1281 = vpop.xlane.xlu0 %1280
      %v1282 = vsub.f32 %v1278, %v1281
      %v1283 = vmul.f32 %v1282, 1.442695
      %v1284 = vpow.pop %v1283
      %v1285 = vsel %vm1111, %v1284, 0.0
      %1286 = vadd.xlane.f32.xlu0 %v1285
      %v1287 = vpop.xlane.xlu0 %1286
      %v1288 = vrcp.pop %v1287
      %v1289 = vmul.f32 %v1284, %v1288
      %v1291 = vsel %vm1111, %v1289, 0
      %1293 = vmatprep.subr.mxu0 0.0
      %1294 = vmatpush1.msra.mxu0 %v1025
      %1295 = vmatprep.subr.mxu0 0.0
      %1296 = vmatpush1.msra.mxu0 0.0
      %1297 = vmatprep.subr.mxu0 0.0
      %1298 = vmatpush1.msra.mxu0 0.0
      %1299 = vmatprep.subr.mxu0 0.0
      %1300 = vmatpush1.msra.mxu0 0.0
      %1301 = vmatprep.subr.mxu0 0.0
      %1302 = vmatpush1.msra.mxu0 0.0
      %1303 = vmatprep.subr.mxu0 0.0
      %1304 = vmatpush1.msra.mxu0 0.0
      %1305 = vmatprep.subr.mxu0 0.0
      %1306 = vmatpush1.msra.mxu0 0.0
      %1307 = vmatprep.subr.mxu0 0.0
      %1308 = vmatpush1.msra.mxu0 0.0
      %1309 = vmatprep.subr.mxu0 0.0
      %1310 = vmatpush1.msra.mxu0 0.0
      %1311 = vmatprep.subr.mxu0 0.0
      %1312 = vmatpush1.msra.mxu0 0.0
      %1313 = vmatprep.subr.mxu0 0.0
      %1314 = vmatpush1.msra.mxu0 0.0
      %1315 = vmatprep.subr.mxu0 0.0
      %1316 = vmatpush1.msra.mxu0 0.0
      %1317 = vmatprep.subr.mxu0 0.0
      %1318 = vmatpush1.msra.mxu0 0.0
      %1319 = vmatprep.subr.mxu0 0.0
      %1320 = vmatpush1.msra.mxu0 0.0
      %1321 = vmatprep.subr.mxu0 0.0
      %1322 = vmatpush1.msra.mxu0 0.0
      %1323 = vmatprep.subr.mxu0 0.0
      %1324 = vmatpush1.msra.mxu0 0.0
      %1325 = vmatprep.subr.mxu0 0.0
      %1326 = vmatpush1.msra.mxu0 0.0
      %1327 = vmatprep.subr.mxu0 0.0
      %1328 = vmatpush1.msra.mxu0 0.0
      %1329 = vmatprep.subr.mxu0 0.0
      %1330 = vmatpush1.msra.mxu0 0.0
      %1331 = vmatprep.subr.mxu0 0.0
      %1332 = vmatpush1.msra.mxu0 0.0
      %1333 = vmatprep.subr.mxu0 0.0
      %1334 = vmatpush1.msra.mxu0 0.0
      %1335 = vmatprep.subr.mxu0 0.0
      %1336 = vmatpush1.msra.mxu0 0.0
      %1337 = vmatprep.subr.mxu0 0.0
      %1338 = vmatpush1.msra.mxu0 0.0
      %1339 = vmatprep.subr.mxu0 0.0
      %1340 = vmatpush1.msra.mxu0 0.0
      %1341 = vmatprep.subr.mxu0 0.0
      %1342 = vmatpush1.msra.mxu0 0.0
      %1343 = vmatprep.subr.mxu0 0.0
      %1344 = vmatpush1.msra.mxu0 0.0
      %1345 = vmatprep.subr.mxu0 0.0
      %1346 = vmatpush1.msra.mxu0 0.0
      %1347 = vmatprep.subr.mxu0 0.0
      %1348 = vmatpush1.msra.mxu0 0.0
      %1349 = vmatprep.subr.mxu0 0.0
      %1350 = vmatpush1.msra.mxu0 0.0
      %1351 = vmatprep.subr.mxu0 0.0
      %1352 = vmatpush1.msra.mxu0 0.0
      %1353 = vmatprep.subr.mxu0 0.0
      %1354 = vmatpush1.msra.mxu0 0.0
      %1355 = vmatprep.subr.mxu0 0.0
      %1356 = vmatpush1.msra.mxu0 0.0
      %1357 = vmatprep.mubr.f32.mxu0 0.0
      %1358 = vmatmul.mubr.f32.gmra.mrb[0].mxu0 %v1291
      %v1359 = vpop.f32.mrb[0].mxu0
      %v1360 = vadd.f32 0.0, %v1359
      %v1361 = vpop.f32.mrb[0].mxu0
      %1362 = vdwg.mxu0
      %1363 = vrot.lane.b32.xlu0 %v1019, 112
      %v1364 = vpop.permute.xlu0 %1363
      %1365 = vrot.lane.b32.xlu0 %v1019, 48
      %v1366 = vpop.permute.xlu0 %1365
      %v1367 = vsel %vm1030, %v1364, 0
      %v1369 = vsel %vm1030, %v1366, 0
      %1371 = vmatprep.subr.mxu0 0.0
      %1372 = vmatpush1.xpose.msra.mxu0 %v1369
      %1373 = vmatprep.subr.mxu0 0.0
      %1374 = vmatpush1.xpose.msra.mxu0 0.0
      %1375 = vmatprep.subr.mxu0 0.0
      %1376 = vmatpush1.xpose.msra.mxu0 0.0
      %1377 = vmatprep.subr.mxu0 0.0
      %1378 = vmatpush1.xpose.msra.mxu0 0.0
      %1379 = vmatprep.subr.mxu0 0.0
      %1380 = vmatpush1.xpose.msra.mxu0 0.0
      %1381 = vmatprep.subr.mxu0 0.0
      %1382 = vmatpush1.xpose.msra.mxu0 0.0
      %1383 = vmatprep.subr.mxu0 0.0
      %1384 = vmatpush1.xpose.msra.mxu0 0.0
      %1385 = vmatprep.subr.mxu0 0.0
      %1386 = vmatpush1.xpose.msra.mxu0 0.0
      %1387 = vmatprep.subr.mxu0 0.0
      %1388 = vmatpush1.xpose.msra.mxu0 0.0
      %1389 = vmatprep.subr.mxu0 0.0
      %1390 = vmatpush1.xpose.msra.mxu0 0.0
      %1391 = vmatprep.subr.mxu0 0.0
      %1392 = vmatpush1.xpose.msra.mxu0 0.0
      %1393 = vmatprep.subr.mxu0 0.0
      %1394 = vmatpush1.xpose.msra.mxu0 0.0
      %1395 = vmatprep.subr.mxu0 0.0
      %1396 = vmatpush1.xpose.msra.mxu0 0.0
      %1397 = vmatprep.subr.mxu0 0.0
      %1398 = vmatpush1.xpose.msra.mxu0 0.0
      %1399 = vmatprep.subr.mxu0 0.0
      %1400 = vmatpush1.xpose.msra.mxu0 0.0
      %1401 = vmatprep.subr.mxu0 0.0
      %1402 = vmatpush1.xpose.msra.mxu0 0.0
      %1403 = vmatprep.subr.mxu0 0.0
      %1404 = vmatpush1.xpose.msra.mxu0 0.0
      %1405 = vmatprep.subr.mxu0 0.0
      %1406 = vmatpush1.xpose.msra.mxu0 0.0
      %1407 = vmatprep.subr.mxu0 0.0
      %1408 = vmatpush1.xpose.msra.mxu0 0.0
      %1409 = vmatprep.subr.mxu0 0.0
      %1410 = vmatpush1.xpose.msra.mxu0 0.0
      %1411 = vmatprep.subr.mxu0 0.0
      %1412 = vmatpush1.xpose.msra.mxu0 0.0
      %1413 = vmatprep.subr.mxu0 0.0
      %1414 = vmatpush1.xpose.msra.mxu0 0.0
      %1415 = vmatprep.subr.mxu0 0.0
      %1416 = vmatpush1.xpose.msra.mxu0 0.0
      %1417 = vmatprep.subr.mxu0 0.0
      %1418 = vmatpush1.xpose.msra.mxu0 0.0
      %1419 = vmatprep.subr.mxu0 0.0
      %1420 = vmatpush1.xpose.msra.mxu0 0.0
      %1421 = vmatprep.subr.mxu0 0.0
      %1422 = vmatpush1.xpose.msra.mxu0 0.0
      %1423 = vmatprep.subr.mxu0 0.0
      %1424 = vmatpush1.xpose.msra.mxu0 0.0
      %1425 = vmatprep.subr.mxu0 0.0
      %1426 = vmatpush1.xpose.msra.mxu0 0.0
      %1427 = vmatprep.subr.mxu0 0.0
      %1428 = vmatpush1.xpose.msra.mxu0 0.0
      %1429 = vmatprep.subr.mxu0 0.0
      %1430 = vmatpush1.xpose.msra.mxu0 0.0
      %1431 = vmatprep.subr.mxu0 0.0
      %1432 = vmatpush1.xpose.msra.mxu0 0.0
      %1433 = vmatprep.subr.mxu0 0.0
      %1434 = vmatpush1.xpose.msra.mxu0 0.0
      %1435 = vmatprep.mubr.f32.mxu0 0.0
      %1436 = vmatmul.mubr.f32.gmra.mrb[0].mxu0 %v1367
      %v1437 = vpop.f32.mrb[0].mxu0
      %v1438 = vadd.f32 0.0, %v1437
      %v1439 = vpop.f32.mrb[0].mxu0
      %1440 = vdwg.mxu0
      %v1441 = vmul.f32 %v1438, 0.25
      %v1442 = vadd.f32 %v1441, %v1109
      %v1443 = vsel %vm1111, %v1442, -inf
      %1444 = vmax.xlane.f32.xlu0 %v1443
      %v1445 = vpop.xlane.xlu0 %1444
      %v1446 = vsub.f32 %v1442, %v1445
      %v1447 = vmul.f32 %v1446, 1.442695
      %v1448 = vpow.pop %v1447
      %v1449 = vsel %vm1111, %v1448, 0.0
      %1450 = vadd.xlane.f32.xlu0 %v1449
      %v1451 = vpop.xlane.xlu0 %1450
      %v1452 = vrcp.pop %v1451
      %v1453 = vmul.f32 %v1448, %v1452
      %1455 = vrot.lane.b32.xlu0 %v1021, 112
      %v1456 = vpop.permute.xlu0 %1455
      %v1459 = vsel %vm1111, %v1453, 0
      %1461 = vmatprep.subr.mxu0 0.0
      %1462 = vmatpush1.msra.mxu0 %v1456
      %1463 = vmatprep.subr.mxu0 0.0
      %1464 = vmatpush1.msra.mxu0 0.0
      %1465 = vmatprep.subr.mxu0 0.0
      %1466 = vmatpush1.msra.mxu0 0.0
      %1467 = vmatprep.subr.mxu0 0.0
      %1468 = vmatpush1.msra.mxu0 0.0
      %1469 = vmatprep.subr.mxu0 0.0
      %1470 = vmatpush1.msra.mxu0 0.0
      %1471 = vmatprep.subr.mxu0 0.0
      %1472 = vmatpush1.msra.mxu0 0.0
      %1473 = vmatprep.subr.mxu0 0.0
      %1474 = vmatpush1.msra.mxu0 0.0
      %1475 = vmatprep.subr.mxu0 0.0
      %1476 = vmatpush1.msra.mxu0 0.0
      %1477 = vmatprep.subr.mxu0 0.0
      %1478 = vmatpush1.msra.mxu0 0.0
      %1479 = vmatprep.subr.mxu0 0.0
      %1480 = vmatpush1.msra.mxu0 0.0
      %1481 = vmatprep.subr.mxu0 0.0
      %1482 = vmatpush1.msra.mxu0 0.0
      %1483 = vmatprep.subr.mxu0 0.0
      %1484 = vmatpush1.msra.mxu0 0.0
      %1485 = vmatprep.subr.mxu0 0.0
      %1486 = vmatpush1.msra.mxu0 0.0
      %1487 = vmatprep.subr.mxu0 0.0
      %1488 = vmatpush1.msra.mxu0 0.0
      %1489 = vmatprep.subr.mxu0 0.0
      %1490 = vmatpush1.msra.mxu0 0.0
      %1491 = vmatprep.subr.mxu0 0.0
      %1492 = vmatpush1.msra.mxu0 0.0
      %1493 = vmatprep.subr.mxu0 0.0
      %1494 = vmatpush1.msra.mxu0 0.0
      %1495 = vmatprep.subr.mxu0 0.0
      %1496 = vmatpush1.msra.mxu0 0.0
      %1497 = vmatprep.subr.mxu0 0.0
      %1498 = vmatpush1.msra.mxu0 0.0
      %1499 = vmatprep.subr.mxu0 0.0
      %1500 = vmatpush1.msra.mxu0 0.0
      %1501 = vmatprep.subr.mxu0 0.0
      %1502 = vmatpush1.msra.mxu0 0.0
      %1503 = vmatprep.subr.mxu0 0.0
      %1504 = vmatpush1.msra.mxu0 0.0
      %1505 = vmatprep.subr.mxu0 0.0
      %1506 = vmatpush1.msra.mxu0 0.0
      %1507 = vmatprep.subr.mxu0 0.0
      %1508 = vmatpush1.msra.mxu0 0.0
      %1509 = vmatprep.subr.mxu0 0.0
      %1510 = vmatpush1.msra.mxu0 0.0
      %1511 = vmatprep.subr.mxu0 0.0
      %1512 = vmatpush1.msra.mxu0 0.0
      %1513 = vmatprep.subr.mxu0 0.0
      %1514 = vmatpush1.msra.mxu0 0.0
      %1515 = vmatprep.subr.mxu0 0.0
      %1516 = vmatpush1.msra.mxu0 0.0
      %1517 = vmatprep.subr.mxu0 0.0
      %1518 = vmatpush1.msra.mxu0 0.0
      %1519 = vmatprep.subr.mxu0 0.0
      %1520 = vmatpush1.msra.mxu0 0.0
      %1521 = vmatprep.subr.mxu0 0.0
      %1522 = vmatpush1.msra.mxu0 0.0
      %1523 = vmatprep.subr.mxu0 0.0
      %1524 = vmatpush1.msra.mxu0 0.0
      %1525 = vmatprep.mubr.f32.mxu0 0.0
      %1526 = vmatmul.mubr.f32.gmra.mrb[0].mxu0 %v1459
      %v1527 = vpop.f32.mrb[0].mxu0
      %v1528 = vadd.f32 0.0, %v1527
      %v1529 = vpop.f32.mrb[0].mxu0
      %1530 = vdwg.mxu0
      %1531 = vrot.lane.b32.xlu0 %v1023, 112
      %v1532 = vpop.permute.xlu0 %1531
      %1533 = vrot.lane.b32.xlu0 %v1023, 48
      %v1534 = vpop.permute.xlu0 %1533
      %v1535 = vsel %vm1030, %v1532, 0
      %v1537 = vsel %vm1030, %v1534, 0
      %1539 = vmatprep.subr.mxu0 0.0
      %1540 = vmatpush1.xpose.msra.mxu0 %v1537
      %1541 = vmatprep.subr.mxu0 0.0
      %1542 = vmatpush1.xpose.msra.mxu0 0.0
      %1543 = vmatprep.subr.mxu0 0.0
      %1544 = vmatpush1.xpose.msra.mxu0 0.0
      %1545 = vmatprep.subr.mxu0 0.0
      %1546 = vmatpush1.xpose.msra.mxu0 0.0
      %1547 = vmatprep.subr.mxu0 0.0
      %1548 = vmatpush1.xpose.msra.mxu0 0.0
      %1549 = vmatprep.subr.mxu0 0.0
      %1550 = vmatpush1.xpose.msra.mxu0 0.0
      %1551 = vmatprep.subr.mxu0 0.0
      %1552 = vmatpush1.xpose.msra.mxu0 0.0
      %1553 = vmatprep.subr.mxu0 0.0
      %1554 = vmatpush1.xpose.msra.mxu0 0.0
      %1555 = vmatprep.subr.mxu0 0.0
      %1556 = vmatpush1.xpose.msra.mxu0 0.0
      %1557 = vmatprep.subr.mxu0 0.0
      %1558 = vmatpush1.xpose.msra.mxu0 0.0
      %1559 = vmatprep.subr.mxu0 0.0
      %1560 = vmatpush1.xpose.msra.mxu0 0.0
      %1561 = vmatprep.subr.mxu0 0.0
      %1562 = vmatpush1.xpose.msra.mxu0 0.0
      %1563 = vmatprep.subr.mxu0 0.0
      %1564 = vmatpush1.xpose.msra.mxu0 0.0
      %1565 = vmatprep.subr.mxu0 0.0
      %1566 = vmatpush1.xpose.msra.mxu0 0.0
      %1567 = vmatprep.subr.mxu0 0.0
      %1568 = vmatpush1.xpose.msra.mxu0 0.0
      %1569 = vmatprep.subr.mxu0 0.0
      %1570 = vmatpush1.xpose.msra.mxu0 0.0
      %1571 = vmatprep.subr.mxu0 0.0
      %1572 = vmatpush1.xpose.msra.mxu0 0.0
      %1573 = vmatprep.subr.mxu0 0.0
      %1574 = vmatpush1.xpose.msra.mxu0 0.0
      %1575 = vmatprep.subr.mxu0 0.0
      %1576 = vmatpush1.xpose.msra.mxu0 0.0
      %1577 = vmatprep.subr.mxu0 0.0
      %1578 = vmatpush1.xpose.msra.mxu0 0.0
      %1579 = vmatprep.subr.mxu0 0.0
      %1580 = vmatpush1.xpose.msra.mxu0 0.0
      %1581 = vmatprep.subr.mxu0 0.0
      %1582 = vmatpush1.xpose.msra.mxu0 0.0
      %1583 = vmatprep.subr.mxu0 0.0
      %1584 = vmatpush1.xpose.msra.mxu0 0.0
      %1585 = vmatprep.subr.mxu0 0.0
      %1586 = vmatpush1.xpose.msra.mxu0 0.0
      %1587 = vmatprep.subr.mxu0 0.0
      %1588 = vmatpush1.xpose.msra.mxu0 0.0
      %1589 = vmatprep.subr.mxu0 0.0
      %1590 = vmatpush1.xpose.msra.mxu0 0.0
      %1591 = vmatprep.subr.mxu0 0.0
      %1592 = vmatpush1.xpose.msra.mxu0 0.0
      %1593 = vmatprep.subr.mxu0 0.0
      %1594 = vmatpush1.xpose.msra.mxu0 0.0
      %1595 = vmatprep.subr.mxu0 0.0
      %1596 = vmatpush1.xpose.msra.mxu0 0.0
      %1597 = vmatprep.subr.mxu0 0.0
      %1598 = vmatpush1.xpose.msra.mxu0 0.0
      %1599 = vmatprep.subr.mxu0 0.0
      %1600 = vmatpush1.xpose.msra.mxu0 0.0
      %1601 = vmatprep.subr.mxu0 0.0
      %1602 = vmatpush1.xpose.msra.mxu0 0.0
      %1603 = vmatprep.mubr.f32.mxu0 0.0
      %1604 = vmatmul.mubr.f32.gmra.mrb[0].mxu0 %v1535
      %v1605 = vpop.f32.mrb[0].mxu0
      %v1606 = vadd.f32 0.0, %v1605
      %v1607 = vpop.f32.mrb[0].mxu0
      %1608 = vdwg.mxu0
      %v1609 = vmul.f32 %v1606, 0.25
      %v1610 = vadd.f32 %v1609, %v1277
      %v1611 = vsel %vm1111, %v1610, -inf
      %1612 = vmax.xlane.f32.xlu0 %v1611
      %v1613 = vpop.xlane.xlu0 %1612
      %v1614 = vsub.f32 %v1610, %v1613
      %v1615 = vmul.f32 %v1614, 1.442695
      %v1616 = vpow.pop %v1615
      %v1617 = vsel %vm1111, %v1616, 0.0
      %1618 = vadd.xlane.f32.xlu0 %v1617
      %v1619 = vpop.xlane.xlu0 %1618
      %v1620 = vrcp.pop %v1619
      %v1621 = vmul.f32 %v1616, %v1620
      %1623 = vrot.lane.b32.xlu0 %v1025, 112
      %v1624 = vpop.permute.xlu0 %1623
      %v1627 = vsel %vm1111, %v1621, 0
      %1629 = vmatprep.subr.mxu0 0.0
      %1630 = vmatpush1.msra.mxu0 %v1624
      %1631 = vmatprep.subr.mxu0 0.0
      %1632 = vmatpush1.msra.mxu0 0.0
      %1633 = vmatprep.subr.mxu0 0.0
      %1634 = vmatpush1.msra.mxu0 0.0
      %1635 = vmatprep.subr.mxu0 0.0
      %1636 = vmatpush1.msra.mxu0 0.0
      %1637 = vmatprep.subr.mxu0 0.0
      %1638 = vmatpush1.msra.mxu0 0.0
      %1639 = vmatprep.subr.mxu0 0.0
      %1640 = vmatpush1.msra.mxu0 0.0
      %1641 = vmatprep.subr.mxu0 0.0
      %1642 = vmatpush1.msra.mxu0 0.0
      %1643 = vmatprep.subr.mxu0 0.0
      %1644 = vmatpush1.msra.mxu0 0.0
      %1645 = vmatprep.subr.mxu0 0.0
      %1646 = vmatpush1.msra.mxu0 0.0
      %1647 = vmatprep.subr.mxu0 0.0
      %1648 = vmatpush1.msra.mxu0 0.0
      %1649 = vmatprep.subr.mxu0 0.0
      %1650 = vmatpush1.msra.mxu0 0.0
      %1651 = vmatprep.subr.mxu0 0.0
      %1652 = vmatpush1.msra.mxu0 0.0
      %1653 = vmatprep.subr.mxu0 0.0
      %1654 = vmatpush1.msra.mxu0 0.0
      %1655 = vmatprep.subr.mxu0 0.0
      %1656 = vmatpush1.msra.mxu0 0.0
      %1657 = vmatprep.subr.mxu0 0.0
      %1658 = vmatpush1.msra.mxu0 0.0
      %1659 = vmatprep.subr.mxu0 0.0
      %1660 = vmatpush1.msra.mxu0 0.0
      %1661 = vmatprep.subr.mxu0 0.0
      %1662 = vmatpush1.msra.mxu0 0.0
      %1663 = vmatprep.subr.mxu0 0.0
      %1664 = vmatpush1.msra.mxu0 0.0
      %1665 = vmatprep.subr.mxu0 0.0
      %1666 = vmatpush1.msra.mxu0 0.0
      %1667 = vmatprep.subr.mxu0 0.0
      %1668 = vmatpush1.msra.mxu0 0.0
      %1669 = vmatprep.subr.mxu0 0.0
      %1670 = vmatpush1.msra.mxu0 0.0
      %1671 = vmatprep.subr.mxu0 0.0
      %1672 = vmatpush1.msra.mxu0 0.0
      %1673 = vmatprep.subr.mxu0 0.0
      %1674 = vmatpush1.msra.mxu0 0.0
      %1675 = vmatprep.subr.mxu0 0.0
      %1676 = vmatpush1.msra.mxu0 0.0
      %1677 = vmatprep.subr.mxu0 0.0
      %1678 = vmatpush1.msra.mxu0 0.0
      %1679 = vmatprep.subr.mxu0 0.0
      %1680 = vmatpush1.msra.mxu0 0.0
      %1681 = vmatprep.subr.mxu0 0.0
      %1682 = vmatpush1.msra.mxu0 0.0
      %1683 = vmatprep.subr.mxu0 0.0
      %1684 = vmatpush1.msra.mxu0 0.0
      %1685 = vmatprep.subr.mxu0 0.0
      %1686 = vmatpush1.msra.mxu0 0.0
      %1687 = vmatprep.subr.mxu0 0.0
      %1688 = vmatpush1.msra.mxu0 0.0
      %1689 = vmatprep.subr.mxu0 0.0
      %1690 = vmatpush1.msra.mxu0 0.0
      %1691 = vmatprep.subr.mxu0 0.0
      %1692 = vmatpush1.msra.mxu0 0.0
      %1693 = vmatprep.mubr.f32.mxu0 0.0
      %1694 = vmatmul.mubr.f32.gmra.mrb[0].mxu0 %v1627
      %v1695 = vpop.f32.mrb[0].mxu0
      %v1696 = vadd.f32 0.0, %v1695
      %v1697 = vpop.f32.mrb[0].mxu0
      %1698 = vdwg.mxu0
      %1699 = vrot.lane.b32.xlu0 %v1019, 96
      %v1700 = vpop.permute.xlu0 %1699
      %1701 = vrot.lane.b32.xlu0 %v1019, 32
      %v1702 = vpop.permute.xlu0 %1701
      %v1703 = vsel %vm1030, %v1700, 0
      %v1705 = vsel %vm1030, %v1702, 0
      %1707 = vmatprep.subr.mxu0 0.0
      %1708 = vmatpush1.xpose.msra.mxu0 %v1705
      %1709 = vmatprep.subr.mxu0 0.0
      %1710 = vmatpush1.xpose.msra.mxu0 0.0
      %1711 = vmatprep.subr.mxu0 0.0
      %1712 = vmatpush1.xpose.msra.mxu0 0.0
      %1713 = vmatprep.subr.mxu0 0.0
      %1714 = vmatpush1.xpose.msra.mxu0 0.0
      %1715 = vmatprep.subr.mxu0 0.0
      %1716 = vmatpush1.xpose.msra.mxu0 0.0
      %1717 = vmatprep.subr.mxu0 0.0
      %1718 = vmatpush1.xpose.msra.mxu0 0.0
      %1719 = vmatprep.subr.mxu0 0.0
      %1720 = vmatpush1.xpose.msra.mxu0 0.0
      %1721 = vmatprep.subr.mxu0 0.0
      %1722 = vmatpush1.xpose.msra.mxu0 0.0
      %1723 = vmatprep.subr.mxu0 0.0
      %1724 = vmatpush1.xpose.msra.mxu0 0.0
      %1725 = vmatprep.subr.mxu0 0.0
      %1726 = vmatpush1.xpose.msra.mxu0 0.0
      %1727 = vmatprep.subr.mxu0 0.0
      %1728 = vmatpush1.xpose.msra.mxu0 0.0
      %1729 = vmatprep.subr.mxu0 0.0
      %1730 = vmatpush1.xpose.msra.mxu0 0.0
      %1731 = vmatprep.subr.mxu0 0.0
      %1732 = vmatpush1.xpose.msra.mxu0 0.0
      %1733 = vmatprep.subr.mxu0 0.0
      %1734 = vmatpush1.xpose.msra.mxu0 0.0
      %1735 = vmatprep.subr.mxu0 0.0
      %1736 = vmatpush1.xpose.msra.mxu0 0.0
      %1737 = vmatprep.subr.mxu0 0.0
      %1738 = vmatpush1.xpose.msra.mxu0 0.0
      %1739 = vmatprep.subr.mxu0 0.0
      %1740 = vmatpush1.xpose.msra.mxu0 0.0
      %1741 = vmatprep.subr.mxu0 0.0
      %1742 = vmatpush1.xpose.msra.mxu0 0.0
      %1743 = vmatprep.subr.mxu0 0.0
      %1744 = vmatpush1.xpose.msra.mxu0 0.0
      %1745 = vmatprep.subr.mxu0 0.0
      %1746 = vmatpush1.xpose.msra.mxu0 0.0
      %1747 = vmatprep.subr.mxu0 0.0
      %1748 = vmatpush1.xpose.msra.mxu0 0.0
      %1749 = vmatprep.subr.mxu0 0.0
      %1750 = vmatpush1.xpose.msra.mxu0 0.0
      %1751 = vmatprep.subr.mxu0 0.0
      %1752 = vmatpush1.xpose.msra.mxu0 0.0
      %1753 = vmatprep.subr.mxu0 0.0
      %1754 = vmatpush1.xpose.msra.mxu0 0.0
      %1755 = vmatprep.subr.mxu0 0.0
      %1756 = vmatpush1.xpose.msra.mxu0 0.0
      %1757 = vmatprep.subr.mxu0 0.0
      %1758 = vmatpush1.xpose.msra.mxu0 0.0
      %1759 = vmatprep.subr.mxu0 0.0
      %1760 = vmatpush1.xpose.msra.mxu0 0.0
      %1761 = vmatprep.subr.mxu0 0.0
      %1762 = vmatpush1.xpose.msra.mxu0 0.0
      %1763 = vmatprep.subr.mxu0 0.0
      %1764 = vmatpush1.xpose.msra.mxu0 0.0
      %1765 = vmatprep.subr.mxu0 0.0
      %1766 = vmatpush1.xpose.msra.mxu0 0.0
      %1767 = vmatprep.subr.mxu0 0.0
      %1768 = vmatpush1.xpose.msra.mxu0 0.0
      %1769 = vmatprep.subr.mxu0 0.0
      %1770 = vmatpush1.xpose.msra.mxu0 0.0
      %1771 = vmatprep.mubr.f32.mxu0 0.0
      %1772 = vmatmul.mubr.f32.gmra.mrb[0].mxu0 %v1703
      %v1773 = vpop.f32.mrb[0].mxu0
      %v1774 = vadd.f32 0.0, %v1773
      %v1775 = vpop.f32.mrb[0].mxu0
      %1776 = vdwg.mxu0
      %v1777 = vmul.f32 %v1774, 0.25
      %v1778 = vadd.f32 %v1777, %v1109
      %v1779 = vsel %vm1111, %v1778, -inf
      %1780 = vmax.xlane.f32.xlu0 %v1779
      %v1781 = vpop.xlane.xlu0 %1780
      %v1782 = vsub.f32 %v1778, %v1781
      %v1783 = vmul.f32 %v1782, 1.442695
      %v1784 = vpow.pop %v1783
      %v1785 = vsel %vm1111, %v1784, 0.0
      %1786 = vadd.xlane.f32.xlu0 %v1785
      %v1787 = vpop.xlane.xlu0 %1786
      %v1788 = vrcp.pop %v1787
      %v1789 = vmul.f32 %v1784, %v1788
      %1790 = vrot.lane.b32.xlu0 %v1021, 96
      %v1791 = vpop.permute.xlu0 %1790
      %v1794 = vsel %vm1111, %v1789, 0
      %1796 = vmatprep.subr.mxu0 0.0
      %1797 = vmatpush1.msra.mxu0 %v1791
      %1798 = vmatprep.subr.mxu0 0.0
      %1799 = vmatpush1.msra.mxu0 0.0
      %1800 = vmatprep.subr.mxu0 0.0
      %1801 = vmatpush1.msra.mxu0 0.0
      %1802 = vmatprep.subr.mxu0 0.0
      %1803 = vmatpush1.msra.mxu0 0.0
      %1804 = vmatprep.subr.mxu0 0.0
      %1805 = vmatpush1.msra.mxu0 0.0
      %1806 = vmatprep.subr.mxu0 0.0
      %1807 = vmatpush1.msra.mxu0 0.0
      %1808 = vmatprep.subr.mxu0 0.0
      %1809 = vmatpush1.msra.mxu0 0.0
      %1810 = vmatprep.subr.mxu0 0.0
      %1811 = vmatpush1.msra.mxu0 0.0
      %1812 = vmatprep.subr.mxu0 0.0
      %1813 = vmatpush1.msra.mxu0 0.0
      %1814 = vmatprep.subr.mxu0 0.0
      %1815 = vmatpush1.msra.mxu0 0.0
      %1816 = vmatprep.subr.mxu0 0.0
      %1817 = vmatpush1.msra.mxu0 0.0
      %1818 = vmatprep.subr.mxu0 0.0
      %1819 = vmatpush1.msra.mxu0 0.0
      %1820 = vmatprep.subr.mxu0 0.0
      %1821 = vmatpush1.msra.mxu0 0.0
      %1822 = vmatprep.subr.mxu0 0.0
      %1823 = vmatpush1.msra.mxu0 0.0
      %1824 = vmatprep.subr.mxu0 0.0
      %1825 = vmatpush1.msra.mxu0 0.0
      %1826 = vmatprep.subr.mxu0 0.0
      %1827 = vmatpush1.msra.mxu0 0.0
      %1828 = vmatprep.subr.mxu0 0.0
      %1829 = vmatpush1.msra.mxu0 0.0
      %1830 = vmatprep.subr.mxu0 0.0
      %1831 = vmatpush1.msra.mxu0 0.0
      %1832 = vmatprep.subr.mxu0 0.0
      %1833 = vmatpush1.msra.mxu0 0.0
      %1834 = vmatprep.subr.mxu0 0.0
      %1835 = vmatpush1.msra.mxu0 0.0
      %1836 = vmatprep.subr.mxu0 0.0
      %1837 = vmatpush1.msra.mxu0 0.0
      %1838 = vmatprep.subr.mxu0 0.0
      %1839 = vmatpush1.msra.mxu0 0.0
      %1840 = vmatprep.subr.mxu0 0.0
      %1841 = vmatpush1.msra.mxu0 0.0
      %1842 = vmatprep.subr.mxu0 0.0
      %1843 = vmatpush1.msra.mxu0 0.0
      %1844 = vmatprep.subr.mxu0 0.0
      %1845 = vmatpush1.msra.mxu0 0.0
      %1846 = vmatprep.subr.mxu0 0.0
      %1847 = vmatpush1.msra.mxu0 0.0
      %1848 = vmatprep.subr.mxu0 0.0
      %1849 = vmatpush1.msra.mxu0 0.0
      %1850 = vmatprep.subr.mxu0 0.0
      %1851 = vmatpush1.msra.mxu0 0.0
      %1852 = vmatprep.subr.mxu0 0.0
      %1853 = vmatpush1.msra.mxu0 0.0
      %1854 = vmatprep.subr.mxu0 0.0
      %1855 = vmatpush1.msra.mxu0 0.0
      %1856 = vmatprep.subr.mxu0 0.0
      %1857 = vmatpush1.msra.mxu0 0.0
      %1858 = vmatprep.subr.mxu0 0.0
      %1859 = vmatpush1.msra.mxu0 0.0
      %1860 = vmatprep.mubr.f32.mxu0 0.0
      %1861 = vmatmul.mubr.f32.gmra.mrb[0].mxu0 %v1794
      %v1862 = vpop.f32.mrb[0].mxu0
      %v1863 = vadd.f32 0.0, %v1862
      %v1864 = vpop.f32.mrb[0].mxu0
      %1865 = vdwg.mxu0
      %1866 = vrot.lane.b32.xlu0 %v1023, 96
      %v1867 = vpop.permute.xlu0 %1866
      %1868 = vrot.lane.b32.xlu0 %v1023, 32
      %v1869 = vpop.permute.xlu0 %1868
      %v1870 = vsel %vm1030, %v1867, 0
      %v1872 = vsel %vm1030, %v1869, 0
      %1874 = vmatprep.subr.mxu0 0.0
      %1875 = vmatpush1.xpose.msra.mxu0 %v1872
      %1876 = vmatprep.subr.mxu0 0.0
      %1877 = vmatpush1.xpose.msra.mxu0 0.0
      %1878 = vmatprep.subr.mxu0 0.0
      %1879 = vmatpush1.xpose.msra.mxu0 0.0
      %1880 = vmatprep.subr.mxu0 0.0
      %1881 = vmatpush1.xpose.msra.mxu0 0.0
      %1882 = vmatprep.subr.mxu0 0.0
      %1883 = vmatpush1.xpose.msra.mxu0 0.0
      %1884 = vmatprep.subr.mxu0 0.0
      %1885 = vmatpush1.xpose.msra.mxu0 0.0
      %1886 = vmatprep.subr.mxu0 0.0
      %1887 = vmatpush1.xpose.msra.mxu0 0.0
      %1888 = vmatprep.subr.mxu0 0.0
      %1889 = vmatpush1.xpose.msra.mxu0 0.0
      %1890 = vmatprep.subr.mxu0 0.0
      %1891 = vmatpush1.xpose.msra.mxu0 0.0
      %1892 = vmatprep.subr.mxu0 0.0
      %1893 = vmatpush1.xpose.msra.mxu0 0.0
      %1894 = vmatprep.subr.mxu0 0.0
      %1895 = vmatpush1.xpose.msra.mxu0 0.0
      %1896 = vmatprep.subr.mxu0 0.0
      %1897 = vmatpush1.xpose.msra.mxu0 0.0
      %1898 = vmatprep.subr.mxu0 0.0
      %1899 = vmatpush1.xpose.msra.mxu0 0.0
      %1900 = vmatprep.subr.mxu0 0.0
      %1901 = vmatpush1.xpose.msra.mxu0 0.0
      %1902 = vmatprep.subr.mxu0 0.0
      %1903 = vmatpush1.xpose.msra.mxu0 0.0
      %1904 = vmatprep.subr.mxu0 0.0
      %1905 = vmatpush1.xpose.msra.mxu0 0.0
      %1906 = vmatprep.subr.mxu0 0.0
      %1907 = vmatpush1.xpose.msra.mxu0 0.0
      %1908 = vmatprep.subr.mxu0 0.0
      %1909 = vmatpush1.xpose.msra.mxu0 0.0
      %1910 = vmatprep.subr.mxu0 0.0
      %1911 = vmatpush1.xpose.msra.mxu0 0.0
      %1912 = vmatprep.subr.mxu0 0.0
      %1913 = vmatpush1.xpose.msra.mxu0 0.0
      %1914 = vmatprep.subr.mxu0 0.0
      %1915 = vmatpush1.xpose.msra.mxu0 0.0
      %1916 = vmatprep.subr.mxu0 0.0
      %1917 = vmatpush1.xpose.msra.mxu0 0.0
      %1918 = vmatprep.subr.mxu0 0.0
      %1919 = vmatpush1.xpose.msra.mxu0 0.0
      %1920 = vmatprep.subr.mxu0 0.0
      %1921 = vmatpush1.xpose.msra.mxu0 0.0
      %1922 = vmatprep.subr.mxu0 0.0
      %1923 = vmatpush1.xpose.msra.mxu0 0.0
      %1924 = vmatprep.subr.mxu0 0.0
      %1925 = vmatpush1.xpose.msra.mxu0 0.0
      %1926 = vmatprep.subr.mxu0 0.0
      %1927 = vmatpush1.xpose.msra.mxu0 0.0
      %1928 = vmatprep.subr.mxu0 0.0
      %1929 = vmatpush1.xpose.msra.mxu0 0.0
      %1930 = vmatprep.subr.mxu0 0.0
      %1931 = vmatpush1.xpose.msra.mxu0 0.0
      %1932 = vmatprep.subr.mxu0 0.0
      %1933 = vmatpush1.xpose.msra.mxu0 0.0
      %1934 = vmatprep.subr.mxu0 0.0
      %1935 = vmatpush1.xpose.msra.mxu0 0.0
      %1936 = vmatprep.subr.mxu0 0.0
      %1937 = vmatpush1.xpose.msra.mxu0 0.0
      %1938 = vmatprep.mubr.f32.mxu0 0.0
      %1939 = vmatmul.mubr.f32.gmra.mrb[0].mxu0 %v1870
      %v1940 = vpop.f32.mrb[0].mxu0
      %v1941 = vadd.f32 0.0, %v1940
      %v1942 = vpop.f32.mrb[0].mxu0
      %1943 = vdwg.mxu0
      %v1944 = vmul.f32 %v1941, 0.25
      %v1945 = vadd.f32 %v1944, %v1277
      %v1946 = vsel %vm1111, %v1945, -inf
      %1947 = vmax.xlane.f32.xlu0 %v1946
      %v1948 = vpop.xlane.xlu0 %1947
      %v1949 = vsub.f32 %v1945, %v1948
      %v1950 = vmul.f32 %v1949, 1.442695
      %v1951 = vpow.pop %v1950
      %v1952 = vsel %vm1111, %v1951, 0.0
      %1953 = vadd.xlane.f32.xlu0 %v1952
      %v1954 = vpop.xlane.xlu0 %1953
      %v1955 = vrcp.pop %v1954
      %v1956 = vmul.f32 %v1951, %v1955
      %1957 = vrot.lane.b32.xlu0 %v1025, 96
      %v1958 = vpop.permute.xlu0 %1957
      %v1961 = vsel %vm1111, %v1956, 0
      %1963 = vmatprep.subr.mxu0 0.0
      %1964 = vmatpush1.msra.mxu0 %v1958
      %1965 = vmatprep.subr.mxu0 0.0
      %1966 = vmatpush1.msra.mxu0 0.0
      %1967 = vmatprep.subr.mxu0 0.0
      %1968 = vmatpush1.msra.mxu0 0.0
      %1969 = vmatprep.subr.mxu0 0.0
      %1970 = vmatpush1.msra.mxu0 0.0
      %1971 = vmatprep.subr.mxu0 0.0
      %1972 = vmatpush1.msra.mxu0 0.0
      %1973 = vmatprep.subr.mxu0 0.0
      %1974 = vmatpush1.msra.mxu0 0.0
      %1975 = vmatprep.subr.mxu0 0.0
      %1976 = vmatpush1.msra.mxu0 0.0
      %1977 = vmatprep.subr.mxu0 0.0
      %1978 = vmatpush1.msra.mxu0 0.0
      %1979 = vmatprep.subr.mxu0 0.0
      %1980 = vmatpush1.msra.mxu0 0.0
      %1981 = vmatprep.subr.mxu0 0.0
      %1982 = vmatpush1.msra.mxu0 0.0
      %1983 = vmatprep.subr.mxu0 0.0
      %1984 = vmatpush1.msra.mxu0 0.0
      %1985 = vmatprep.subr.mxu0 0.0
      %1986 = vmatpush1.msra.mxu0 0.0
      %1987 = vmatprep.subr.mxu0 0.0
      %1988 = vmatpush1.msra.mxu0 0.0
      %1989 = vmatprep.subr.mxu0 0.0
      %1990 = vmatpush1.msra.mxu0 0.0
      %1991 = vmatprep.subr.mxu0 0.0
      %1992 = vmatpush1.msra.mxu0 0.0
      %1993 = vmatprep.subr.mxu0 0.0
      %1994 = vmatpush1.msra.mxu0 0.0
      %1995 = vmatprep.subr.mxu0 0.0
      %1996 = vmatpush1.msra.mxu0 0.0
      %1997 = vmatprep.subr.mxu0 0.0
      %1998 = vmatpush1.msra.mxu0 0.0
      %1999 = vmatprep.subr.mxu0 0.0
      %2000 = vmatpush1.msra.mxu0 0.0
      %2001 = vmatprep.subr.mxu0 0.0
      %2002 = vmatpush1.msra.mxu0 0.0
      %2003 = vmatprep.subr.mxu0 0.0
      %2004 = vmatpush1.msra.mxu0 0.0
      %2005 = vmatprep.subr.mxu0 0.0
      %2006 = vmatpush1.msra.mxu0 0.0
      %2007 = vmatprep.subr.mxu0 0.0
      %2008 = vmatpush1.msra.mxu0 0.0
      %2009 = vmatprep.subr.mxu0 0.0
      %2010 = vmatpush1.msra.mxu0 0.0
      %2011 = vmatprep.subr.mxu0 0.0
      %2012 = vmatpush1.msra.mxu0 0.0
      %2013 = vmatprep.subr.mxu0 0.0
      %2014 = vmatpush1.msra.mxu0 0.0
      %2015 = vmatprep.subr.mxu0 0.0
      %2016 = vmatpush1.msra.mxu0 0.0
      %2017 = vmatprep.subr.mxu0 0.0
      %2018 = vmatpush1.msra.mxu0 0.0
      %2019 = vmatprep.subr.mxu0 0.0
      %2020 = vmatpush1.msra.mxu0 0.0
      %2021 = vmatprep.subr.mxu0 0.0
      %2022 = vmatpush1.msra.mxu0 0.0
      %2023 = vmatprep.subr.mxu0 0.0
      %2024 = vmatpush1.msra.mxu0 0.0
      %2025 = vmatprep.subr.mxu0 0.0
      %2026 = vmatpush1.msra.mxu0 0.0
      %2027 = vmatprep.mubr.f32.mxu0 0.0
      %2028 = vmatmul.mubr.f32.gmra.mrb[0].mxu0 %v1961
      %v2029 = vpop.f32.mrb[0].mxu0
      %v2030 = vadd.f32 0.0, %v2029
      %v2031 = vpop.f32.mrb[0].mxu0
      %2032 = vdwg.mxu0
      %2033 = vrot.lane.b32.xlu0 %v1019, 80
      %v2034 = vpop.permute.xlu0 %2033
      %2035 = vrot.lane.b32.xlu0 %v1019, 16
      %v2036 = vpop.permute.xlu0 %2035
      %v2037 = vsel %vm1030, %v2034, 0
      %v2039 = vsel %vm1030, %v2036, 0
      %2041 = vmatprep.subr.mxu0 0.0
      %2042 = vmatpush1.xpose.msra.mxu0 %v2039
      %2043 = vmatprep.subr.mxu0 0.0
      %2044 = vmatpush1.xpose.msra.mxu0 0.0
      %2045 = vmatprep.subr.mxu0 0.0
      %2046 = vmatpush1.xpose.msra.mxu0 0.0
      %2047 = vmatprep.subr.mxu0 0.0
      %2048 = vmatpush1.xpose.msra.mxu0 0.0
      %2049 = vmatprep.subr.mxu0 0.0
      %2050 = vmatpush1.xpose.msra.mxu0 0.0
      %2051 = vmatprep.subr.mxu0 0.0
      %2052 = vmatpush1.xpose.msra.mxu0 0.0
      %2053 = vmatprep.subr.mxu0 0.0
      %2054 = vmatpush1.xpose.msra.mxu0 0.0
      %2055 = vmatprep.subr.mxu0 0.0
      %2056 = vmatpush1.xpose.msra.mxu0 0.0
      %2057 = vmatprep.subr.mxu0 0.0
      %2058 = vmatpush1.xpose.msra.mxu0 0.0
      %2059 = vmatprep.subr.mxu0 0.0
      %2060 = vmatpush1.xpose.msra.mxu0 0.0
      %2061 = vmatprep.subr.mxu0 0.0
      %2062 = vmatpush1.xpose.msra.mxu0 0.0
      %2063 = vmatprep.subr.mxu0 0.0
      %2064 = vmatpush1.xpose.msra.mxu0 0.0
      %2065 = vmatprep.subr.mxu0 0.0
      %2066 = vmatpush1.xpose.msra.mxu0 0.0
      %2067 = vmatprep.subr.mxu0 0.0
      %2068 = vmatpush1.xpose.msra.mxu0 0.0
      %2069 = vmatprep.subr.mxu0 0.0
      %2070 = vmatpush1.xpose.msra.mxu0 0.0
      %2071 = vmatprep.subr.mxu0 0.0
      %2072 = vmatpush1.xpose.msra.mxu0 0.0
      %2073 = vmatprep.subr.mxu0 0.0
      %2074 = vmatpush1.xpose.msra.mxu0 0.0
      %2075 = vmatprep.subr.mxu0 0.0
      %2076 = vmatpush1.xpose.msra.mxu0 0.0
      %2077 = vmatprep.subr.mxu0 0.0
      %2078 = vmatpush1.xpose.msra.mxu0 0.0
      %2079 = vmatprep.subr.mxu0 0.0
      %2080 = vmatpush1.xpose.msra.mxu0 0.0
      %2081 = vmatprep.subr.mxu0 0.0
      %2082 = vmatpush1.xpose.msra.mxu0 0.0
      %2083 = vmatprep.subr.mxu0 0.0
      %2084 = vmatpush1.xpose.msra.mxu0 0.0
      %2085 = vmatprep.subr.mxu0 0.0
      %2086 = vmatpush1.xpose.msra.mxu0 0.0
      %2087 = vmatprep.subr.mxu0 0.0
      %2088 = vmatpush1.xpose.msra.mxu0 0.0
      %2089 = vmatprep.subr.mxu0 0.0
      %2090 = vmatpush1.xpose.msra.mxu0 0.0
      %2091 = vmatprep.subr.mxu0 0.0
      %2092 = vmatpush1.xpose.msra.mxu0 0.0
      %2093 = vmatprep.subr.mxu0 0.0
      %2094 = vmatpush1.xpose.msra.mxu0 0.0
      %2095 = vmatprep.subr.mxu0 0.0
      %2096 = vmatpush1.xpose.msra.mxu0 0.0
      %2097 = vmatprep.subr.mxu0 0.0
      %2098 = vmatpush1.xpose.msra.mxu0 0.0
      %2099 = vmatprep.subr.mxu0 0.0
      %2100 = vmatpush1.xpose.msra.mxu0 0.0
      %2101 = vmatprep.subr.mxu0 0.0
      %2102 = vmatpush1.xpose.msra.mxu0 0.0
      %2103 = vmatprep.subr.mxu0 0.0
      %2104 = vmatpush1.xpose.msra.mxu0 0.0
      %2105 = vmatprep.mubr.f32.mxu0 0.0
      %2106 = vmatmul.mubr.f32.gmra.mrb[0].mxu0 %v2037
      %v2107 = vpop.f32.mrb[0].mxu0
      %v2108 = vadd.f32 0.0, %v2107
      %v2109 = vpop.f32.mrb[0].mxu0
      %2110 = vdwg.mxu0
      %v2111 = vmul.f32 %v2108, 0.25
      %v2112 = vadd.f32 %v2111, %v1109
      %v2113 = vsel %vm1111, %v2112, -inf
      %2114 = vmax.xlane.f32.xlu0 %v2113
      %v2115 = vpop.xlane.xlu0 %2114
      %v2116 = vsub.f32 %v2112, %v2115
      %v2117 = vmul.f32 %v2116, 1.442695
      %v2118 = vpow.pop %v2117
      %v2119 = vsel %vm1111, %v2118, 0.0
      %2120 = vadd.xlane.f32.xlu0 %v2119
      %v2121 = vpop.xlane.xlu0 %2120
      %v2122 = vrcp.pop %v2121
      %v2123 = vmul.f32 %v2118, %v2122
      %2124 = vrot.lane.b32.xlu0 %v1021, 80
      %v2125 = vpop.permute.xlu0 %2124
      %v2128 = vsel %vm1111, %v2123, 0
      %2130 = vmatprep.subr.mxu0 0.0
      %2131 = vmatpush1.msra.mxu0 %v2125
      %2132 = vmatprep.subr.mxu0 0.0
      %2133 = vmatpush1.msra.mxu0 0.0
      %2134 = vmatprep.subr.mxu0 0.0
      %2135 = vmatpush1.msra.mxu0 0.0
      %2136 = vmatprep.subr.mxu0 0.0
      %2137 = vmatpush1.msra.mxu0 0.0
      %2138 = vmatprep.subr.mxu0 0.0
      %2139 = vmatpush1.msra.mxu0 0.0
      %2140 = vmatprep.subr.mxu0 0.0
      %2141 = vmatpush1.msra.mxu0 0.0
      %2142 = vmatprep.subr.mxu0 0.0
      %2143 = vmatpush1.msra.mxu0 0.0
      %2144 = vmatprep.subr.mxu0 0.0
      %2145 = vmatpush1.msra.mxu0 0.0
      %2146 = vmatprep.subr.mxu0 0.0
      %2147 = vmatpush1.msra.mxu0 0.0
      %2148 = vmatprep.subr.mxu0 0.0
      %2149 = vmatpush1.msra.mxu0 0.0
      %2150 = vmatprep.subr.mxu0 0.0
      %2151 = vmatpush1.msra.mxu0 0.0
      %2152 = vmatprep.subr.mxu0 0.0
      %2153 = vmatpush1.msra.mxu0 0.0
      %2154 = vmatprep.subr.mxu0 0.0
      %2155 = vmatpush1.msra.mxu0 0.0
      %2156 = vmatprep.subr.mxu0 0.0
      %2157 = vmatpush1.msra.mxu0 0.0
      %2158 = vmatprep.subr.mxu0 0.0
      %2159 = vmatpush1.msra.mxu0 0.0
      %2160 = vmatprep.subr.mxu0 0.0
      %2161 = vmatpush1.msra.mxu0 0.0
      %2162 = vmatprep.subr.mxu0 0.0
      %2163 = vmatpush1.msra.mxu0 0.0
      %2164 = vmatprep.subr.mxu0 0.0
      %2165 = vmatpush1.msra.mxu0 0.0
      %2166 = vmatprep.subr.mxu0 0.0
      %2167 = vmatpush1.msra.mxu0 0.0
      %2168 = vmatprep.subr.mxu0 0.0
      %2169 = vmatpush1.msra.mxu0 0.0
      %2170 = vmatprep.subr.mxu0 0.0
      %2171 = vmatpush1.msra.mxu0 0.0
      %2172 = vmatprep.subr.mxu0 0.0
      %2173 = vmatpush1.msra.mxu0 0.0
      %2174 = vmatprep.subr.mxu0 0.0
      %2175 = vmatpush1.msra.mxu0 0.0
      %2176 = vmatprep.subr.mxu0 0.0
      %2177 = vmatpush1.msra.mxu0 0.0
      %2178 = vmatprep.subr.mxu0 0.0
      %2179 = vmatpush1.msra.mxu0 0.0
      %2180 = vmatprep.subr.mxu0 0.0
      %2181 = vmatpush1.msra.mxu0 0.0
      %2182 = vmatprep.subr.mxu0 0.0
      %2183 = vmatpush1.msra.mxu0 0.0
      %2184 = vmatprep.subr.mxu0 0.0
      %2185 = vmatpush1.msra.mxu0 0.0
      %2186 = vmatprep.subr.mxu0 0.0
      %2187 = vmatpush1.msra.mxu0 0.0
      %2188 = vmatprep.subr.mxu0 0.0
      %2189 = vmatpush1.msra.mxu0 0.0
      %2190 = vmatprep.subr.mxu0 0.0
      %2191 = vmatpush1.msra.mxu0 0.0
      %2192 = vmatprep.subr.mxu0 0.0
      %2193 = vmatpush1.msra.mxu0 0.0
      %2194 = vmatprep.mubr.f32.mxu0 0.0
      %2195 = vmatmul.mubr.f32.gmra.mrb[0].mxu0 %v2128
      %v2196 = vpop.f32.mrb[0].mxu0
      %v2197 = vadd.f32 0.0, %v2196
      %v2198 = vpop.f32.mrb[0].mxu0
      %2199 = vdwg.mxu0
      %2200 = vrot.lane.b32.xlu0 %v1023, 80
      %v2201 = vpop.permute.xlu0 %2200
      %2202 = vrot.lane.b32.xlu0 %v1023, 16
      %v2203 = vpop.permute.xlu0 %2202
      %v2204 = vsel %vm1030, %v2201, 0
      %v2206 = vsel %vm1030, %v2203, 0
      %2208 = vmatprep.subr.mxu0 0.0
      %2209 = vmatpush1.xpose.msra.mxu0 %v2206
      %2210 = vmatprep.subr.mxu0 0.0
      %2211 = vmatpush1.xpose.msra.mxu0 0.0
      %2212 = vmatprep.subr.mxu0 0.0
      %2213 = vmatpush1.xpose.msra.mxu0 0.0
      %2214 = vmatprep.subr.mxu0 0.0
      %2215 = vmatpush1.xpose.msra.mxu0 0.0
      %2216 = vmatprep.subr.mxu0 0.0
      %2217 = vmatpush1.xpose.msra.mxu0 0.0
      %2218 = vmatprep.subr.mxu0 0.0
      %2219 = vmatpush1.xpose.msra.mxu0 0.0
      %2220 = vmatprep.subr.mxu0 0.0
      %2221 = vmatpush1.xpose.msra.mxu0 0.0
      %2222 = vmatprep.subr.mxu0 0.0
      %2223 = vmatpush1.xpose.msra.mxu0 0.0
      %2224 = vmatprep.subr.mxu0 0.0
      %2225 = vmatpush1.xpose.msra.mxu0 0.0
      %2226 = vmatprep.subr.mxu0 0.0
      %2227 = vmatpush1.xpose.msra.mxu0 0.0
      %2228 = vmatprep.subr.mxu0 0.0
      %2229 = vmatpush1.xpose.msra.mxu0 0.0
      %2230 = vmatprep.subr.mxu0 0.0
      %2231 = vmatpush1.xpose.msra.mxu0 0.0
      %2232 = vmatprep.subr.mxu0 0.0
      %2233 = vmatpush1.xpose.msra.mxu0 0.0
      %2234 = vmatprep.subr.mxu0 0.0
      %2235 = vmatpush1.xpose.msra.mxu0 0.0
      %2236 = vmatprep.subr.mxu0 0.0
      %2237 = vmatpush1.xpose.msra.mxu0 0.0
      %2238 = vmatprep.subr.mxu0 0.0
      %2239 = vmatpush1.xpose.msra.mxu0 0.0
      %2240 = vmatprep.subr.mxu0 0.0
      %2241 = vmatpush1.xpose.msra.mxu0 0.0
      %2242 = vmatprep.subr.mxu0 0.0
      %2243 = vmatpush1.xpose.msra.mxu0 0.0
      %2244 = vmatprep.subr.mxu0 0.0
      %2245 = vmatpush1.xpose.msra.mxu0 0.0
      %2246 = vmatprep.subr.mxu0 0.0
      %2247 = vmatpush1.xpose.msra.mxu0 0.0
      %2248 = vmatprep.subr.mxu0 0.0
      %2249 = vmatpush1.xpose.msra.mxu0 0.0
      %2250 = vmatprep.subr.mxu0 0.0
      %2251 = vmatpush1.xpose.msra.mxu0 0.0
      %2252 = vmatprep.subr.mxu0 0.0
      %2253 = vmatpush1.xpose.msra.mxu0 0.0
      %2254 = vmatprep.subr.mxu0 0.0
      %2255 = vmatpush1.xpose.msra.mxu0 0.0
      %2256 = vmatprep.subr.mxu0 0.0
      %2257 = vmatpush1.xpose.msra.mxu0 0.0
      %2258 = vmatprep.subr.mxu0 0.0
      %2259 = vmatpush1.xpose.msra.mxu0 0.0
      %2260 = vmatprep.subr.mxu0 0.0
      %2261 = vmatpush1.xpose.msra.mxu0 0.0
      %2262 = vmatprep.subr.mxu0 0.0
      %2263 = vmatpush1.xpose.msra.mxu0 0.0
      %2264 = vmatprep.subr.mxu0 0.0
      %2265 = vmatpush1.xpose.msra.mxu0 0.0
      %2266 = vmatprep.subr.mxu0 0.0
      %2267 = vmatpush1.xpose.msra.mxu0 0.0
      %2268 = vmatprep.subr.mxu0 0.0
      %2269 = vmatpush1.xpose.msra.mxu0 0.0
      %2270 = vmatprep.subr.mxu0 0.0
      %2271 = vmatpush1.xpose.msra.mxu0 0.0
      %2272 = vmatprep.mubr.f32.mxu0 0.0
      %2273 = vmatmul.mubr.f32.gmra.mrb[0].mxu0 %v2204
      %v2274 = vpop.f32.mrb[0].mxu0
      %v2275 = vadd.f32 0.0, %v2274
      %v2276 = vpop.f32.mrb[0].mxu0
      %2277 = vdwg.mxu0
      %v2278 = vmul.f32 %v2275, 0.25
      %v2279 = vadd.f32 %v2278, %v1277
      %v2280 = vsel %vm1111, %v2279, -inf
      %2281 = vmax.xlane.f32.xlu0 %v2280
      %v2282 = vpop.xlane.xlu0 %2281
      %v2283 = vsub.f32 %v2279, %v2282
      %v2284 = vmul.f32 %v2283, 1.442695
      %v2285 = vpow.pop %v2284
      %v2286 = vsel %vm1111, %v2285, 0.0
      %2287 = vadd.xlane.f32.xlu0 %v2286
      %v2288 = vpop.xlane.xlu0 %2287
      %v2289 = vrcp.pop %v2288
      %v2290 = vmul.f32 %v2285, %v2289
      %2291 = vrot.lane.b32.xlu0 %v1025, 80
      %v2292 = vpop.permute.xlu0 %2291
      %v2295 = vsel %vm1111, %v2290, 0
      %2297 = vmatprep.subr.mxu0 0.0
      %2298 = vmatpush1.msra.mxu0 %v2292
      %2299 = vmatprep.subr.mxu0 0.0
      %2300 = vmatpush1.msra.mxu0 0.0
      %2301 = vmatprep.subr.mxu0 0.0
      %2302 = vmatpush1.msra.mxu0 0.0
      %2303 = vmatprep.subr.mxu0 0.0
      %2304 = vmatpush1.msra.mxu0 0.0
      %2305 = vmatprep.subr.mxu0 0.0
      %2306 = vmatpush1.msra.mxu0 0.0
      %2307 = vmatprep.subr.mxu0 0.0
      %2308 = vmatpush1.msra.mxu0 0.0
      %2309 = vmatprep.subr.mxu0 0.0
      %2310 = vmatpush1.msra.mxu0 0.0
      %2311 = vmatprep.subr.mxu0 0.0
      %2312 = vmatpush1.msra.mxu0 0.0
      %2313 = vmatprep.subr.mxu0 0.0
      %2314 = vmatpush1.msra.mxu0 0.0
      %2315 = vmatprep.subr.mxu0 0.0
      %2316 = vmatpush1.msra.mxu0 0.0
      %2317 = vmatprep.subr.mxu0 0.0
      %2318 = vmatpush1.msra.mxu0 0.0
      %2319 = vmatprep.subr.mxu0 0.0
      %2320 = vmatpush1.msra.mxu0 0.0
      %2321 = vmatprep.subr.mxu0 0.0
      %2322 = vmatpush1.msra.mxu0 0.0
      %2323 = vmatprep.subr.mxu0 0.0
      %2324 = vmatpush1.msra.mxu0 0.0
      %2325 = vmatprep.subr.mxu0 0.0
      %2326 = vmatpush1.msra.mxu0 0.0
      %2327 = vmatprep.subr.mxu0 0.0
      %2328 = vmatpush1.msra.mxu0 0.0
      %2329 = vmatprep.subr.mxu0 0.0
      %2330 = vmatpush1.msra.mxu0 0.0
      %2331 = vmatprep.subr.mxu0 0.0
      %2332 = vmatpush1.msra.mxu0 0.0
      %2333 = vmatprep.subr.mxu0 0.0
      %2334 = vmatpush1.msra.mxu0 0.0
      %2335 = vmatprep.subr.mxu0 0.0
      %2336 = vmatpush1.msra.mxu0 0.0
      %2337 = vmatprep.subr.mxu0 0.0
      %2338 = vmatpush1.msra.mxu0 0.0
      %2339 = vmatprep.subr.mxu0 0.0
      %2340 = vmatpush1.msra.mxu0 0.0
      %2341 = vmatprep.subr.mxu0 0.0
      %2342 = vmatpush1.msra.mxu0 0.0
      %2343 = vmatprep.subr.mxu0 0.0
      %2344 = vmatpush1.msra.mxu0 0.0
      %2345 = vmatprep.subr.mxu0 0.0
      %2346 = vmatpush1.msra.mxu0 0.0
      %2347 = vmatprep.subr.mxu0 0.0
      %2348 = vmatpush1.msra.mxu0 0.0
      %2349 = vmatprep.subr.mxu0 0.0
      %2350 = vmatpush1.msra.mxu0 0.0
      %2351 = vmatprep.subr.mxu0 0.0
      %2352 = vmatpush1.msra.mxu0 0.0
      %2353 = vmatprep.subr.mxu0 0.0
      %2354 = vmatpush1.msra.mxu0 0.0
      %2355 = vmatprep.subr.mxu0 0.0
      %2356 = vmatpush1.msra.mxu0 0.0
      %2357 = vmatprep.subr.mxu0 0.0
      %2358 = vmatpush1.msra.mxu0 0.0
      %2359 = vmatprep.subr.mxu0 0.0
      %2360 = vmatpush1.msra.mxu0 0.0
      %2361 = vmatprep.mubr.f32.mxu0 0.0
      %2362 = vmatmul.mubr.f32.gmra.mrb[0].mxu0 %v2295
      %v2363 = vpop.f32.mrb[0].mxu0
      %v2364 = vadd.f32 0.0, %v2363
      %v2365 = vpop.f32.mrb[0].mxu0
      %2366 = vdwg.mxu0
      %2369 = vrot.lane.b32.xlu0 %v1528, 16
      %v2370 = vpop.permute.xlu0 %2369
      %2371 = vrot.lane.b32.xlu0 %v1696, 16
      %v2372 = vpop.permute.xlu0 %2371
      %2377 = vrot.lane.b32.xlu0 %v1863, 32
      %v2378 = vpop.permute.xlu0 %2377
      %2379 = vrot.lane.b32.xlu0 %v2030, 32
      %v2380 = vpop.permute.xlu0 %2379
      %2385 = vrot.lane.b32.xlu0 %v2197, 48
      %v2386 = vpop.permute.xlu0 %2385
      %2387 = vrot.lane.b32.xlu0 %v2364, 48
      %v2388 = vpop.permute.xlu0 %2387
      %v2391 = vsel %vm1030, %v1193, %v2370
      %v2392 = vsel %vm1030, %v1360, %v2372
      %vm2393 = vcmask 261120
      %v2394 = vsel %vm2393, %v2391, %v2378
      %v2395 = vsel %vm2393, %v2392, %v2380
      %vm2396 = vcmask 392192
      %v2397 = vsel %vm2396, %v2394, %v2386
      %v2398 = vsel %vm2396, %v2395, %v2388
      %v2399 = vpack.c.bf16 %v2398, %v2397
      %v2400 = vld [vmem:[%s740] sm:$0xf]
      %v2401 = vld [vmem:[%s740 + $0x4] sm:$0xf]
      %v2402 = vld [vmem:[%s740 + $0x8] sm:$0xf]
      %v2403 = vld [vmem:[%s740 + $0xc] sm:$0xf]
      %v2404 = vld [vmem:[%s740 + $0x10] sm:$0xf]
      %v2405 = vld [vmem:[%s740 + $0x14] sm:$0xf]
      %v2406 = vld [vmem:[%s740 + $0x18] sm:$0xf]
      %v2407 = vld [vmem:[%s740 + $0x1c] sm:$0xf]
      %v2408 = vld [vmem:[%s743] sm:$0x1]
      %v2410 = vlaneseq
      %v2411 = vshrl.u32 %v2410, 7
      %v2412 = vsub.s32 0, %v2411
      %v2413 = vrot.slane %v2408, %v2412
      %v2423 = vunpack.c.l.b16 %v2400
      %v2424 = vunpack.c.l.b16 %v2401
      %v2425 = vunpack.c.l.b16 %v2402
      %v2426 = vunpack.c.l.b16 %v2403
      %v2427 = vunpack.c.l.b16 %v2404
      %v2428 = vunpack.c.l.b16 %v2405
      %v2429 = vunpack.c.l.b16 %v2406
      %v2430 = vunpack.c.l.b16 %v2407
      %v2431 = vpack.c.b16 %v2424, %v2423
      %v2432 = vpack.c.b16 %v2426, %v2425
      %v2433 = vpack.c.b16 %v2428, %v2427
      %v2434 = vpack.c.b16 %v2430, %v2429
      %v2440 = vsel %vm980, %v2399, 0
      %2442 = vmatprep.subr.bf16.mxu0 0
      %2443 = vmatpush1.bf16.msra.mxu0 %v2431
      %2444 = vmatprep.subr.bf16.mxu0 0
      %2445 = vmatpush1.bf16.msra.mxu0 %v2432
      %2446 = vmatprep.subr.bf16.mxu0 0
      %2447 = vmatpush1.bf16.msra.mxu0 %v2433
      %2448 = vmatprep.subr.bf16.mxu0 0
      %2449 = vmatpush1.bf16.msra.mxu0 %v2434
      %2450 = vmatprep.subr.bf16.mxu0 0
      %2451 = vmatpush1.bf16.msra.mxu0 0
      %2452 = vmatprep.subr.bf16.mxu0 0
      %2453 = vmatpush1.bf16.msra.mxu0 0
      %2454 = vmatprep.subr.bf16.mxu0 0
      %2455 = vmatpush1.bf16.msra.mxu0 0
      %2456 = vmatprep.subr.bf16.mxu0 0
      %2457 = vmatpush1.bf16.msra.mxu0 0
      %2458 = vmatprep.subr.bf16.mxu0 0
      %2459 = vmatpush1.bf16.msra.mxu0 0
      %2460 = vmatprep.subr.bf16.mxu0 0
      %2461 = vmatpush1.bf16.msra.mxu0 0
      %2462 = vmatprep.subr.bf16.mxu0 0
      %2463 = vmatpush1.bf16.msra.mxu0 0
      %2464 = vmatprep.subr.bf16.mxu0 0
      %2465 = vmatpush1.bf16.msra.mxu0 0
      %2466 = vmatprep.subr.bf16.mxu0 0
      %2467 = vmatpush1.bf16.msra.mxu0 0
      %2468 = vmatprep.subr.bf16.mxu0 0
      %2469 = vmatpush1.bf16.msra.mxu0 0
      %2470 = vmatprep.subr.bf16.mxu0 0
      %2471 = vmatpush1.bf16.msra.mxu0 0
      %2472 = vmatprep.subr.bf16.mxu0 0
      %2473 = vmatpush1.bf16.msra.mxu0 0
      %2474 = vmatprep.mubr.bf16.mxu0 0
      %2475 = vmatmul.mubr.bf16.gmra.mrb[0].mxu0 %v2440
      %v2476 = vpop.f32.mrb[0].mxu0
      %v2477 = vadd.f32 %v2413, %v2476
      %v2478 = vpop.f32.mrb[0].mxu0
      %v2479 = vpop.f32.mrb[0].mxu0
      %v2480 = vadd.f32 %v2413, %v2479
      %v2481 = vpop.f32.mrb[0].mxu0
      %2482 = vdwg.mxu0
      %v2483 = vadd.f32 %v916, %v2477
      %v2484 = vadd.f32 %v917, %v2480
      %v2485 = vld [vmem:[%s746] sm:$0x1]
      %v2486 = vld [vmem:[%s749] sm:$0x1]
      %v2487 = vsel %vm980, %v2483, 0.0
      %2488 = vadd.xlane.f32.xlu0 %v2487
      %v2489 = vpop.xlane.xlu0 %2488
      %v2490 = vsel %vm980, %v2484, 0.0
      %2491 = vadd.xlane.f32.xlu0 %v2490
      %v2492 = vpop.xlane.xlu0 %2491
      %v2493 = vrcp.pop 64.0
      %v2494 = vmul.f32 %v2489, %v2493
      %v2495 = vmul.f32 %v2492, %v2493
      %v2496 = vsub.f32 %v2483, %v2494
      %v2497 = vsub.f32 %v2484, %v2495
      %v2498 = vmul.f32 %v2496, %v2496
      %v2499 = vmul.f32 %v2497, %v2497
      %v2500 = vsel %vm980, %v2498, 0.0
      %2501 = vadd.xlane.f32.xlu0 %v2500
      %v2502 = vpop.xlane.xlu0 %2501
      %v2503 = vsel %vm980, %v2499, 0.0
      %2504 = vadd.xlane.f32.xlu0 %v2503
      %v2505 = vpop.xlane.xlu0 %2504
      %v2506 = vmul.f32 %v2502, %v2493
      %v2507 = vmul.f32 %v2505, %v2493
      %v2508 = vadd.f32 %v2506, 1e-05
      %v2509 = vadd.f32 %v2507, 1e-05
      %v2510 = vrsqrt.pop %v2508
      %v2511 = vrsqrt.pop %v2509
      %v2512 = vmul.f32 %v2496, %v2510
      %v2513 = vmul.f32 %v2497, %v2511
      %v2515 = vlaneseq
      %v2516 = vshrl.u32 %v2515, 7
      %v2517 = vsub.s32 0, %v2516
      %v2518 = vrot.slane %v2485, %v2517
      %v2520 = vmul.f32 %v2512, %v2518
      %v2521 = vmul.f32 %v2513, %v2518
      %v2523 = vlaneseq
      %v2524 = vshrl.u32 %v2523, 7
      %v2525 = vsub.s32 0, %v2524
      %v2526 = vrot.slane %v2486, %v2525
      %v2528 = vadd.f32 %v2520, %v2526
      %v2529 = vadd.f32 %v2521, %v2526
      %v2530 = vpack.c.bf16 %v2529, %v2528
      %v2531 = vld [vmem:[%s754] sm:$0xff]
      %v2532 = vld [vmem:[%s754 + $0x8] sm:$0xff]
      %v2533 = vld [vmem:[%s754 + $0x10] sm:$0xff]
      %v2534 = vld [vmem:[%s754 + $0x18] sm:$0xff]
      %v2535 = vld [vmem:[%s754 + $0x20] sm:$0xff]
      %v2536 = vld [vmem:[%s754 + $0x28] sm:$0xff]
      %v2537 = vld [vmem:[%s754 + $0x30] sm:$0xff]
      %v2538 = vld [vmem:[%s754 + $0x38] sm:$0xff]
      %v2539 = vld [vmem:[%s754 + $0x40] sm:$0xff]
      %v2540 = vld [vmem:[%s754 + $0x48] sm:$0xff]
      %v2541 = vld [vmem:[%s754 + $0x50] sm:$0xff]
      %v2542 = vld [vmem:[%s754 + $0x58] sm:$0xff]
      %v2543 = vld [vmem:[%s754 + $0x60] sm:$0xff]
      %v2544 = vld [vmem:[%s754 + $0x68] sm:$0xff]
      %v2545 = vld [vmem:[%s754 + $0x70] sm:$0xff]
      %v2546 = vld [vmem:[%s754 + $0x78] sm:$0xff]
      %v2547 = vld [vmem:[%s754 + $0x80] sm:$0xff]
      %v2548 = vld [vmem:[%s754 + $0x88] sm:$0xff]
      %v2549 = vld [vmem:[%s754 + $0x90] sm:$0xff]
      %v2550 = vld [vmem:[%s754 + $0x98] sm:$0xff]
      %v2551 = vld [vmem:[%s754 + $0xa0] sm:$0xff]
      %v2552 = vld [vmem:[%s754 + $0xa8] sm:$0xff]
      %v2553 = vld [vmem:[%s754 + $0xb0] sm:$0xff]
      %v2554 = vld [vmem:[%s754 + $0xb8] sm:$0xff]
      %v2555 = vld [vmem:[%s754 + $0xc0] sm:$0xff]
      %v2556 = vld [vmem:[%s754 + $0xc8] sm:$0xff]
      %v2557 = vld [vmem:[%s754 + $0xd0] sm:$0xff]
      %v2558 = vld [vmem:[%s754 + $0xd8] sm:$0xff]
      %v2559 = vld [vmem:[%s754 + $0xe0] sm:$0xff]
      %v2560 = vld [vmem:[%s754 + $0xe8] sm:$0xff]
      %v2561 = vld [vmem:[%s754 + $0xf0] sm:$0xff]
      %v2562 = vld [vmem:[%s754 + $0xf8] sm:$0xff]
      %v2563 = vld [vmem:[%s754 + $0x100] sm:$0xff]
      %v2564 = vld [vmem:[%s754 + $0x108] sm:$0xff]
      %v2565 = vld [vmem:[%s754 + $0x110] sm:$0xff]
      %v2566 = vld [vmem:[%s754 + $0x118] sm:$0xff]
      %v2567 = vld [vmem:[%s754 + $0x120] sm:$0xff]
      %v2568 = vld [vmem:[%s754 + $0x128] sm:$0xff]
      %v2569 = vld [vmem:[%s754 + $0x130] sm:$0xff]
      %v2570 = vld [vmem:[%s754 + $0x138] sm:$0xff]
      %v2571 = vld [vmem:[%s754 + $0x140] sm:$0xff]
      %v2572 = vld [vmem:[%s754 + $0x148] sm:$0xff]
      %v2573 = vld [vmem:[%s754 + $0x150] sm:$0xff]
      %v2574 = vld [vmem:[%s754 + $0x158] sm:$0xff]
      %v2575 = vld [vmem:[%s754 + $0x160] sm:$0xff]
      %v2576 = vld [vmem:[%s754 + $0x168] sm:$0xff]
      %v2577 = vld [vmem:[%s754 + $0x170] sm:$0xff]
      %v2578 = vld [vmem:[%s754 + $0x178] sm:$0xff]
      %v2579 = vld [vmem:[%s754 + $0x180] sm:$0xff]
      %v2580 = vld [vmem:[%s754 + $0x188] sm:$0xff]
      %v2581 = vld [vmem:[%s754 + $0x190] sm:$0xff]
      %v2582 = vld [vmem:[%s754 + $0x198] sm:$0xff]
      %v2583 = vld [vmem:[%s754 + $0x1a0] sm:$0xff]
      %v2584 = vld [vmem:[%s754 + $0x1a8] sm:$0xff]
      %v2585 = vld [vmem:[%s754 + $0x1b0] sm:$0xff]
      %v2586 = vld [vmem:[%s754 + $0x1b8] sm:$0xff]
      %v2587 = vld [vmem:[%s754 + $0x1c0] sm:$0xff]
      %v2588 = vld [vmem:[%s754 + $0x1c8] sm:$0xff]
      %v2589 = vld [vmem:[%s754 + $0x1d0] sm:$0xff]
      %v2590 = vld [vmem:[%s754 + $0x1d8] sm:$0xff]
      %v2591 = vld [vmem:[%s754 + $0x1e0] sm:$0xff]
      %v2592 = vld [vmem:[%s754 + $0x1e8] sm:$0xff]
      %v2593 = vld [vmem:[%s754 + $0x1f0] sm:$0xff]
      %v2594 = vld [vmem:[%s754 + $0x1f8] sm:$0xff]
      %v2595 = vld [vmem:[%s758] sm:$0xff]
      %v2596 = vld [vmem:[%s758 + $0x8] sm:$0xff]
      %v2599 = vlaneseq
      %v2600 = vshrl.u32 %v2599, 7
      %v2601 = vsub.s32 0, %v2600
      %v2602 = vrot.slane %v2595, %v2601
      %v2603 = vlaneseq
      %v2604 = vshrl.u32 %v2603, 7
      %v2605 = vsub.s32 1, %v2604
      %v2606 = vrot.slane %v2595, %v2605
      %v2607 = vlaneseq
      %v2608 = vshrl.u32 %v2607, 7
      %v2609 = vsub.s32 2, %v2608
      %v2610 = vrot.slane %v2595, %v2609
      %v2611 = vlaneseq
      %v2612 = vshrl.u32 %v2611, 7
      %v2613 = vsub.s32 3, %v2612
      %v2614 = vrot.slane %v2595, %v2613
      %v2615 = vlaneseq
      %v2616 = vshrl.u32 %v2615, 7
      %v2617 = vsub.s32 4, %v2616
      %v2618 = vrot.slane %v2595, %v2617
      %v2619 = vlaneseq
      %v2620 = vshrl.u32 %v2619, 7
      %v2621 = vsub.s32 5, %v2620
      %v2622 = vrot.slane %v2595, %v2621
      %v2623 = vlaneseq
      %v2624 = vshrl.u32 %v2623, 7
      %v2625 = vsub.s32 6, %v2624
      %v2626 = vrot.slane %v2595, %v2625
      %v2627 = vlaneseq
      %v2628 = vshrl.u32 %v2627, 7
      %v2629 = vsub.s32 7, %v2628
      %v2630 = vrot.slane %v2595, %v2629
      %v2631 = vlaneseq
      %v2632 = vshrl.u32 %v2631, 7
      %v2633 = vsub.s32 0, %v2632
      %v2634 = vrot.slane %v2596, %v2633
      %v2635 = vlaneseq
      %v2636 = vshrl.u32 %v2635, 7
      %v2637 = vsub.s32 1, %v2636
      %v2638 = vrot.slane %v2596, %v2637
      %v2639 = vlaneseq
      %v2640 = vshrl.u32 %v2639, 7
      %v2641 = vsub.s32 2, %v2640
      %v2642 = vrot.slane %v2596, %v2641
      %v2643 = vlaneseq
      %v2644 = vshrl.u32 %v2643, 7
      %v2645 = vsub.s32 3, %v2644
      %v2646 = vrot.slane %v2596, %v2645
      %v2647 = vlaneseq
      %v2648 = vshrl.u32 %v2647, 7
      %v2649 = vsub.s32 4, %v2648
      %v2650 = vrot.slane %v2596, %v2649
      %v2651 = vlaneseq
      %v2652 = vshrl.u32 %v2651, 7
      %v2653 = vsub.s32 5, %v2652
      %v2654 = vrot.slane %v2596, %v2653
      %v2655 = vlaneseq
      %v2656 = vshrl.u32 %v2655, 7
      %v2657 = vsub.s32 6, %v2656
      %v2658 = vrot.slane %v2596, %v2657
      %v2659 = vlaneseq
      %v2660 = vshrl.u32 %v2659, 7
      %v2661 = vsub.s32 7, %v2660
      %v2662 = vrot.slane %v2596, %v2661
      %v2743 = vunpack.c.l.b16 %v2531
      %v2744 = vunpack.c.h.b16 %v2531
      %v2745 = vunpack.c.l.b16 %v2532
      %v2746 = vunpack.c.h.b16 %v2532
      %v2747 = vunpack.c.l.b16 %v2533
      %v2748 = vunpack.c.h.b16 %v2533
      %v2749 = vunpack.c.l.b16 %v2534
      %v2750 = vunpack.c.h.b16 %v2534
      %v2751 = vunpack.c.l.b16 %v2535
      %v2752 = vunpack.c.h.b16 %v2535
      %v2753 = vunpack.c.l.b16 %v2536
      %v2754 = vunpack.c.h.b16 %v2536
      %v2755 = vunpack.c.l.b16 %v2537
      %v2756 = vunpack.c.h.b16 %v2537
      %v2757 = vunpack.c.l.b16 %v2538
      %v2758 = vunpack.c.h.b16 %v2538
      %v2759 = vunpack.c.l.b16 %v2539
      %v2760 = vunpack.c.h.b16 %v2539
      %v2761 = vunpack.c.l.b16 %v2540
      %v2762 = vunpack.c.h.b16 %v2540
      %v2763 = vunpack.c.l.b16 %v2541
      %v2764 = vunpack.c.h.b16 %v2541
      %v2765 = vunpack.c.l.b16 %v2542
      %v2766 = vunpack.c.h.b16 %v2542
      %v2767 = vunpack.c.l.b16 %v2543
      %v2768 = vunpack.c.h.b16 %v2543
      %v2769 = vunpack.c.l.b16 %v2544
      %v2770 = vunpack.c.h.b16 %v2544
      %v2771 = vunpack.c.l.b16 %v2545
      %v2772 = vunpack.c.h.b16 %v2545
      %v2773 = vunpack.c.l.b16 %v2546
      %v2774 = vunpack.c.h.b16 %v2546
      %v2775 = vunpack.c.l.b16 %v2547
      %v2776 = vunpack.c.h.b16 %v2547
      %v2777 = vunpack.c.l.b16 %v2548
      %v2778 = vunpack.c.h.b16 %v2548
      %v2779 = vunpack.c.l.b16 %v2549
      %v2780 = vunpack.c.h.b16 %v2549
      %v2781 = vunpack.c.l.b16 %v2550
      %v2782 = vunpack.c.h.b16 %v2550
      %v2783 = vunpack.c.l.b16 %v2551
      %v2784 = vunpack.c.h.b16 %v2551
      %v2785 = vunpack.c.l.b16 %v2552
      %v2786 = vunpack.c.h.b16 %v2552
      %v2787 = vunpack.c.l.b16 %v2553
      %v2788 = vunpack.c.h.b16 %v2553
      %v2789 = vunpack.c.l.b16 %v2554
      %v2790 = vunpack.c.h.b16 %v2554
      %v2791 = vunpack.c.l.b16 %v2555
      %v2792 = vunpack.c.h.b16 %v2555
      %v2793 = vunpack.c.l.b16 %v2556
      %v2794 = vunpack.c.h.b16 %v2556
      %v2795 = vunpack.c.l.b16 %v2557
      %v2796 = vunpack.c.h.b16 %v2557
      %v2797 = vunpack.c.l.b16 %v2558
      %v2798 = vunpack.c.h.b16 %v2558
      %v2799 = vunpack.c.l.b16 %v2559
      %v2800 = vunpack.c.h.b16 %v2559
      %v2801 = vunpack.c.l.b16 %v2560
      %v2802 = vunpack.c.h.b16 %v2560
      %v2803 = vunpack.c.l.b16 %v2561
      %v2804 = vunpack.c.h.b16 %v2561
      %v2805 = vunpack.c.l.b16 %v2562
      %v2806 = vunpack.c.h.b16 %v2562
      %v2807 = vunpack.c.l.b16 %v2563
      %v2808 = vunpack.c.h.b16 %v2563
      %v2809 = vunpack.c.l.b16 %v2564
      %v2810 = vunpack.c.h.b16 %v2564
      %v2811 = vunpack.c.l.b16 %v2565
      %v2812 = vunpack.c.h.b16 %v2565
      %v2813 = vunpack.c.l.b16 %v2566
      %v2814 = vunpack.c.h.b16 %v2566
      %v2815 = vunpack.c.l.b16 %v2567
      %v2816 = vunpack.c.h.b16 %v2567
      %v2817 = vunpack.c.l.b16 %v2568
      %v2818 = vunpack.c.h.b16 %v2568
      %v2819 = vunpack.c.l.b16 %v2569
      %v2820 = vunpack.c.h.b16 %v2569
      %v2821 = vunpack.c.l.b16 %v2570
      %v2822 = vunpack.c.h.b16 %v2570
      %v2823 = vunpack.c.l.b16 %v2571
      %v2824 = vunpack.c.h.b16 %v2571
      %v2825 = vunpack.c.l.b16 %v2572
      %v2826 = vunpack.c.h.b16 %v2572
      %v2827 = vunpack.c.l.b16 %v2573
      %v2828 = vunpack.c.h.b16 %v2573
      %v2829 = vunpack.c.l.b16 %v2574
      %v2830 = vunpack.c.h.b16 %v2574
      %v2831 = vunpack.c.l.b16 %v2575
      %v2832 = vunpack.c.h.b16 %v2575
      %v2833 = vunpack.c.l.b16 %v2576
      %v2834 = vunpack.c.h.b16 %v2576
      %v2835 = vunpack.c.l.b16 %v2577
      %v2836 = vunpack.c.h.b16 %v2577
      %v2837 = vunpack.c.l.b16 %v2578
      %v2838 = vunpack.c.h.b16 %v2578
      %v2839 = vunpack.c.l.b16 %v2579
      %v2840 = vunpack.c.h.b16 %v2579
      %v2841 = vunpack.c.l.b16 %v2580
      %v2842 = vunpack.c.h.b16 %v2580
      %v2843 = vunpack.c.l.b16 %v2581
      %v2844 = vunpack.c.h.b16 %v2581
      %v2845 = vunpack.c.l.b16 %v2582
      %v2846 = vunpack.c.h.b16 %v2582
      %v2847 = vunpack.c.l.b16 %v2583
      %v2848 = vunpack.c.h.b16 %v2583
      %v2849 = vunpack.c.l.b16 %v2584
      %v2850 = vunpack.c.h.b16 %v2584
      %v2851 = vunpack.c.l.b16 %v2585
      %v2852 = vunpack.c.h.b16 %v2585
      %v2853 = vunpack.c.l.b16 %v2586
      %v2854 = vunpack.c.h.b16 %v2586
      %v2855 = vunpack.c.l.b16 %v2587
      %v2856 = vunpack.c.h.b16 %v2587
      %v2857 = vunpack.c.l.b16 %v2588
      %v2858 = vunpack.c.h.b16 %v2588
      %v2859 = vunpack.c.l.b16 %v2589
      %v2860 = vunpack.c.h.b16 %v2589
      %v2861 = vunpack.c.l.b16 %v2590
      %v2862 = vunpack.c.h.b16 %v2590
      %v2863 = vunpack.c.l.b16 %v2591
      %v2864 = vunpack.c.h.b16 %v2591
      %v2865 = vunpack.c.l.b16 %v2592
      %v2866 = vunpack.c.h.b16 %v2592
      %v2867 = vunpack.c.l.b16 %v2593
      %v2868 = vunpack.c.h.b16 %v2593
      %v2869 = vunpack.c.l.b16 %v2594
      %v2870 = vunpack.c.h.b16 %v2594
      %v2871 = vpack.c.b16 %v2759, %v2743
      %v2872 = vpack.c.b16 %v2760, %v2744
      %v2873 = vpack.c.b16 %v2761, %v2745
      %v2874 = vpack.c.b16 %v2762, %v2746
      %v2875 = vpack.c.b16 %v2763, %v2747
      %v2876 = vpack.c.b16 %v2764, %v2748
      %v2877 = vpack.c.b16 %v2765, %v2749
      %v2878 = vpack.c.b16 %v2766, %v2750
      %v2879 = vpack.c.b16 %v2767, %v2751
      %v2880 = vpack.c.b16 %v2768, %v2752
      %v2881 = vpack.c.b16 %v2769, %v2753
      %v2882 = vpack.c.b16 %v2770, %v2754
      %v2883 = vpack.c.b16 %v2771, %v2755
      %v2884 = vpack.c.b16 %v2772, %v2756
      %v2885 = vpack.c.b16 %v2773, %v2757
      %v2886 = vpack.c.b16 %v2774, %v2758
      %v2887 = vpack.c.b16 %v2791, %v2775
      %v2888 = vpack.c.b16 %v2792, %v2776
      %v2889 = vpack.c.b16 %v2793, %v2777
      %v2890 = vpack.c.b16 %v2794, %v2778
      %v2891 = vpack.c.b16 %v2795, %v2779
      %v2892 = vpack.c.b16 %v2796, %v2780
      %v2893 = vpack.c.b16 %v2797, %v2781
      %v2894 = vpack.c.b16 %v2798, %v2782
      %v2895 = vpack.c.b16 %v2799, %v2783
      %v2896 = vpack.c.b16 %v2800, %v2784
      %v2897 = vpack.c.b16 %v2801, %v2785
      %v2898 = vpack.c.b16 %v2802, %v2786
      %v2899 = vpack.c.b16 %v2803, %v2787
      %v2900 = vpack.c.b16 %v2804, %v2788
      %v2901 = vpack.c.b16 %v2805, %v2789
      %v2902 = vpack.c.b16 %v2806, %v2790
      %v2903 = vpack.c.b16 %v2823, %v2807
      %v2904 = vpack.c.b16 %v2824, %v2808
      %v2905 = vpack.c.b16 %v2825, %v2809
      %v2906 = vpack.c.b16 %v2826, %v2810
      %v2907 = vpack.c.b16 %v2827, %v2811
      %v2908 = vpack.c.b16 %v2828, %v2812
      %v2909 = vpack.c.b16 %v2829, %v2813
      %v2910 = vpack.c.b16 %v2830, %v2814
      %v2911 = vpack.c.b16 %v2831, %v2815
      %v2912 = vpack.c.b16 %v2832, %v2816
      %v2913 = vpack.c.b16 %v2833, %v2817
      %v2914 = vpack.c.b16 %v2834, %v2818
      %v2915 = vpack.c.b16 %v2835, %v2819
      %v2916 = vpack.c.b16 %v2836, %v2820
      %v2917 = vpack.c.b16 %v2837, %v2821
      %v2918 = vpack.c.b16 %v2838, %v2822
      %v2919 = vpack.c.b16 %v2855, %v2839
      %v2920 = vpack.c.b16 %v2856, %v2840
      %v2921 = vpack.c.b16 %v2857, %v2841
      %v2922 = vpack.c.b16 %v2858, %v2842
      %v2923 = vpack.c.b16 %v2859, %v2843
      %v2924 = vpack.c.b16 %v2860, %v2844
      %v2925 = vpack.c.b16 %v2861, %v2845
      %v2926 = vpack.c.b16 %v2862, %v2846
      %v2927 = vpack.c.b16 %v2863, %v2847
      %v2928 = vpack.c.b16 %v2864, %v2848
      %v2929 = vpack.c.b16 %v2865, %v2849
      %v2930 = vpack.c.b16 %v2866, %v2850
      %v2931 = vpack.c.b16 %v2867, %v2851
      %v2932 = vpack.c.b16 %v2868, %v2852
      %v2933 = vpack.c.b16 %v2869, %v2853
      %v2934 = vpack.c.b16 %v2870, %v2854
      %v3000 = vsel %vm980, %v2530, 0
      %3002 = vmatprep.subr.bf16.mxu0 %v2872
      %3003 = vmatpush1.bf16.msra.mxu0 %v2871
      %3004 = vmatprep.subr.bf16.mxu0 %v2888
      %3005 = vmatpush1.bf16.msra.mxu0 %v2887
      %3006 = vmatprep.subr.bf16.mxu0 %v2904
      %3007 = vmatpush1.bf16.msra.mxu0 %v2903
      %3008 = vmatprep.subr.bf16.mxu0 %v2920
      %3009 = vmatpush1.bf16.msra.mxu0 %v2919
      %3010 = vmatprep.subr.bf16.mxu0 0
      %3011 = vmatpush1.bf16.msra.mxu0 0
      %3012 = vmatprep.subr.bf16.mxu0 0
      %3013 = vmatpush1.bf16.msra.mxu0 0
      %3014 = vmatprep.subr.bf16.mxu0 0
      %3015 = vmatpush1.bf16.msra.mxu0 0
      %3016 = vmatprep.subr.bf16.mxu0 0
      %3017 = vmatpush1.bf16.msra.mxu0 0
      %3018 = vmatprep.subr.bf16.mxu0 0
      %3019 = vmatpush1.bf16.msra.mxu0 0
      %3020 = vmatprep.subr.bf16.mxu0 0
      %3021 = vmatpush1.bf16.msra.mxu0 0
      %3022 = vmatprep.subr.bf16.mxu0 0
      %3023 = vmatpush1.bf16.msra.mxu0 0
      %3024 = vmatprep.subr.bf16.mxu0 0
      %3025 = vmatpush1.bf16.msra.mxu0 0
      %3026 = vmatprep.subr.bf16.mxu0 0
      %3027 = vmatpush1.bf16.msra.mxu0 0
      %3028 = vmatprep.subr.bf16.mxu0 0
      %3029 = vmatpush1.bf16.msra.mxu0 0
      %3030 = vmatprep.subr.bf16.mxu0 0
      %3031 = vmatpush1.bf16.msra.mxu0 0
      %3032 = vmatprep.subr.bf16.mxu0 0
      %3033 = vmatpush1.bf16.msra.mxu0 0
      %3034 = vmatprep.mubr.bf16.mxu0 0
      %3035 = vmatmul.mubr.bf16.gmra.mrb[0].mxu0 %v3000
      %v3036 = vpop.f32.mrb[0].mxu0
      %v3037 = vadd.f32 %v2602, %v3036
      %v3038 = vpop.f32.mrb[0].mxu0
      %v3039 = vadd.f32 %v2606, %v3038
      %v3040 = vpop.f32.mrb[0].mxu0
      %v3041 = vadd.f32 %v2602, %v3040
      %v3042 = vpop.f32.mrb[0].mxu0
      %v3043 = vadd.f32 %v2606, %v3042
      %3044 = vdwg.mxu0
      %3045 = vmatprep.subr.bf16.mxu0 %v2874
      %3046 = vmatpush1.bf16.msra.mxu0 %v2873
      %3047 = vmatprep.subr.bf16.mxu0 %v2890
      %3048 = vmatpush1.bf16.msra.mxu0 %v2889
      %3049 = vmatprep.subr.bf16.mxu0 %v2906
      %3050 = vmatpush1.bf16.msra.mxu0 %v2905
      %3051 = vmatprep.subr.bf16.mxu0 %v2922
      %3052 = vmatpush1.bf16.msra.mxu0 %v2921
      %3053 = vmatprep.subr.bf16.mxu0 0
      %3054 = vmatpush1.bf16.msra.mxu0 0
      %3055 = vmatprep.subr.bf16.mxu0 0
      %3056 = vmatpush1.bf16.msra.mxu0 0
      %3057 = vmatprep.subr.bf16.mxu0 0
      %3058 = vmatpush1.bf16.msra.mxu0 0
      %3059 = vmatprep.subr.bf16.mxu0 0
      %3060 = vmatpush1.bf16.msra.mxu0 0
      %3061 = vmatprep.subr.bf16.mxu0 0
      %3062 = vmatpush1.bf16.msra.mxu0 0
      %3063 = vmatprep.subr.bf16.mxu0 0
      %3064 = vmatpush1.bf16.msra.mxu0 0
      %3065 = vmatprep.subr.bf16.mxu0 0
      %3066 = vmatpush1.bf16.msra.mxu0 0
      %3067 = vmatprep.subr.bf16.mxu0 0
      %3068 = vmatpush1.bf16.msra.mxu0 0
      %3069 = vmatprep.subr.bf16.mxu0 0
      %3070 = vmatpush1.bf16.msra.mxu0 0
      %3071 = vmatprep.subr.bf16.mxu0 0
      %3072 = vmatpush1.bf16.msra.mxu0 0
      %3073 = vmatprep.subr.bf16.mxu0 0
      %3074 = vmatpush1.bf16.msra.mxu0 0
      %3075 = vmatprep.subr.bf16.mxu0 0
      %3076 = vmatpush1.bf16.msra.mxu0 0
      %3077 = vmatprep.mubr.bf16.mxu0 0
      %3078 = vmatmul.mubr.bf16.gmra.mrb[0].mxu0 %v3000
      %v3079 = vpop.f32.mrb[0].mxu0
      %v3080 = vadd.f32 %v2610, %v3079
      %v3081 = vpop.f32.mrb[0].mxu0
      %v3082 = vadd.f32 %v2614, %v3081
      %v3083 = vpop.f32.mrb[0].mxu0
      %v3084 = vadd.f32 %v2610, %v3083
      %v3085 = vpop.f32.mrb[0].mxu0
      %v3086 = vadd.f32 %v2614, %v3085
      %3087 = vdwg.mxu0
      %3088 = vmatprep.subr.bf16.mxu0 %v2876
      %3089 = vmatpush1.bf16.msra.mxu0 %v2875
      %3090 = vmatprep.subr.bf16.mxu0 %v2892
      %3091 = vmatpush1.bf16.msra.mxu0 %v2891
      %3092 = vmatprep.subr.bf16.mxu0 %v2908
      %3093 = vmatpush1.bf16.msra.mxu0 %v2907
      %3094 = vmatprep.subr.bf16.mxu0 %v2924
      %3095 = vmatpush1.bf16.msra.mxu0 %v2923
      %3096 = vmatprep.subr.bf16.mxu0 0
      %3097 = vmatpush1.bf16.msra.mxu0 0
      %3098 = vmatprep.subr.bf16.mxu0 0
      %3099 = vmatpush1.bf16.msra.mxu0 0
      %3100 = vmatprep.subr.bf16.mxu0 0
      %3101 = vmatpush1.bf16.msra.mxu0 0
      %3102 = vmatprep.subr.bf16.mxu0 0
      %3103 = vmatpush1.bf16.msra.mxu0 0
      %3104 = vmatprep.subr.bf16.mxu0 0
      %3105 = vmatpush1.bf16.msra.mxu0 0
      %3106 = vmatprep.subr.bf16.mxu0 0
      %3107 = vmatpush1.bf16.msra.mxu0 0
      %3108 = vmatprep.subr.bf16.mxu0 0
      %3109 = vmatpush1.bf16.msra.mxu0 0
      %3110 = vmatprep.subr.bf16.mxu0 0
      %3111 = vmatpush1.bf16.msra.mxu0 0
      %3112 = vmatprep.subr.bf16.mxu0 0
      %3113 = vmatpush1.bf16.msra.mxu0 0
      %3114 = vmatprep.subr.bf16.mxu0 0
      %3115 = vmatpush1.bf16.msra.mxu0 0
      %3116 = vmatprep.subr.bf16.mxu0 0
      %3117 = vmatpush1.bf16.msra.mxu0 0
      %3118 = vmatprep.subr.bf16.mxu0 0
      %3119 = vmatpush1.bf16.msra.mxu0 0
      %3120 = vmatprep.mubr.bf16.mxu0 0
      %3121 = vmatmul.mubr.bf16.gmra.mrb[0].mxu0 %v3000
      %v3122 = vpop.f32.mrb[0].mxu0
      %v3123 = vadd.f32 %v2618, %v3122
      %v3124 = vpop.f32.mrb[0].mxu0
      %v3125 = vadd.f32 %v2622, %v3124
      %v3126 = vpop.f32.mrb[0].mxu0
      %v3127 = vadd.f32 %v2618, %v3126
      %v3128 = vpop.f32.mrb[0].mxu0
      %v3129 = vadd.f32 %v2622, %v3128
      %3130 = vdwg.mxu0
      %3131 = vmatprep.subr.bf16.mxu0 %v2878
      %3132 = vmatpush1.bf16.msra.mxu0 %v2877
      %3133 = vmatprep.subr.bf16.mxu0 %v2894
      %3134 = vmatpush1.bf16.msra.mxu0 %v2893
      %3135 = vmatprep.subr.bf16.mxu0 %v2910
      %3136 = vmatpush1.bf16.msra.mxu0 %v2909
      %3137 = vmatprep.subr.bf16.mxu0 %v2926
      %3138 = vmatpush1.bf16.msra.mxu0 %v2925
      %3139 = vmatprep.subr.bf16.mxu0 0
      %3140 = vmatpush1.bf16.msra.mxu0 0
      %3141 = vmatprep.subr.bf16.mxu0 0
      %3142 = vmatpush1.bf16.msra.mxu0 0
      %3143 = vmatprep.subr.bf16.mxu0 0
      %3144 = vmatpush1.bf16.msra.mxu0 0
      %3145 = vmatprep.subr.bf16.mxu0 0
      %3146 = vmatpush1.bf16.msra.mxu0 0
      %3147 = vmatprep.subr.bf16.mxu0 0
      %3148 = vmatpush1.bf16.msra.mxu0 0
      %3149 = vmatprep.subr.bf16.mxu0 0
      %3150 = vmatpush1.bf16.msra.mxu0 0
      %3151 = vmatprep.subr.bf16.mxu0 0
      %3152 = vmatpush1.bf16.msra.mxu0 0
      %3153 = vmatprep.subr.bf16.mxu0 0
      %3154 = vmatpush1.bf16.msra.mxu0 0
      %3155 = vmatprep.subr.bf16.mxu0 0
      %3156 = vmatpush1.bf16.msra.mxu0 0
      %3157 = vmatprep.subr.bf16.mxu0 0
      %3158 = vmatpush1.bf16.msra.mxu0 0
      %3159 = vmatprep.subr.bf16.mxu0 0
      %3160 = vmatpush1.bf16.msra.mxu0 0
      %3161 = vmatprep.subr.bf16.mxu0 0
      %3162 = vmatpush1.bf16.msra.mxu0 0
      %3163 = vmatprep.mubr.bf16.mxu0 0
      %3164 = vmatmul.mubr.bf16.gmra.mrb[0].mxu0 %v3000
      %v3165 = vpop.f32.mrb[0].mxu0
      %v3166 = vadd.f32 %v2626, %v3165
      %v3167 = vpop.f32.mrb[0].mxu0
      %v3168 = vadd.f32 %v2630, %v3167
      %v3169 = vpop.f32.mrb[0].mxu0
      %v3170 = vadd.f32 %v2626, %v3169
      %v3171 = vpop.f32.mrb[0].mxu0
      %v3172 = vadd.f32 %v2630, %v3171
      %3173 = vdwg.mxu0
      %3174 = vmatprep.subr.bf16.mxu0 %v2880
      %3175 = vmatpush1.bf16.msra.mxu0 %v2879
      %3176 = vmatprep.subr.bf16.mxu0 %v2896
      %3177 = vmatpush1.bf16.msra.mxu0 %v2895
      %3178 = vmatprep.subr.bf16.mxu0 %v2912
      %3179 = vmatpush1.bf16.msra.mxu0 %v2911
      %3180 = vmatprep.subr.bf16.mxu0 %v2928
      %3181 = vmatpush1.bf16.msra.mxu0 %v2927
      %3182 = vmatprep.subr.bf16.mxu0 0
      %3183 = vmatpush1.bf16.msra.mxu0 0
      %3184 = vmatprep.subr.bf16.mxu0 0
      %3185 = vmatpush1.bf16.msra.mxu0 0
      %3186 = vmatprep.subr.bf16.mxu0 0
      %3187 = vmatpush1.bf16.msra.mxu0 0
      %3188 = vmatprep.subr.bf16.mxu0 0
      %3189 = vmatpush1.bf16.msra.mxu0 0
      %3190 = vmatprep.subr.bf16.mxu0 0
      %3191 = vmatpush1.bf16.msra.mxu0 0
      %3192 = vmatprep.subr.bf16.mxu0 0
      %3193 = vmatpush1.bf16.msra.mxu0 0
      %3194 = vmatprep.subr.bf16.mxu0 0
      %3195 = vmatpush1.bf16.msra.mxu0 0
      %3196 = vmatprep.subr.bf16.mxu0 0
      %3197 = vmatpush1.bf16.msra.mxu0 0
      %3198 = vmatprep.subr.bf16.mxu0 0
      %3199 = vmatpush1.bf16.msra.mxu0 0
      %3200 = vmatprep.subr.bf16.mxu0 0
      %3201 = vmatpush1.bf16.msra.mxu0 0
      %3202 = vmatprep.subr.bf16.mxu0 0
      %3203 = vmatpush1.bf16.msra.mxu0 0
      %3204 = vmatprep.subr.bf16.mxu0 0
      %3205 = vmatpush1.bf16.msra.mxu0 0
      %3206 = vmatprep.mubr.bf16.mxu0 0
      %3207 = vmatmul.mubr.bf16.gmra.mrb[0].mxu0 %v3000
      %v3208 = vpop.f32.mrb[0].mxu0
      %v3209 = vadd.f32 %v2634, %v3208
      %v3210 = vpop.f32.mrb[0].mxu0
      %v3211 = vadd.f32 %v2638, %v3210
      %v3212 = vpop.f32.mrb[0].mxu0
      %v3213 = vadd.f32 %v2634, %v3212
      %v3214 = vpop.f32.mrb[0].mxu0
      %v3215 = vadd.f32 %v2638, %v3214
      %3216 = vdwg.mxu0
      %3217 = vmatprep.subr.bf16.mxu0 %v2882
      %3218 = vmatpush1.bf16.msra.mxu0 %v2881
      %3219 = vmatprep.subr.bf16.mxu0 %v2898
      %3220 = vmatpush1.bf16.msra.mxu0 %v2897
      %3221 = vmatprep.subr.bf16.mxu0 %v2914
      %3222 = vmatpush1.bf16.msra.mxu0 %v2913
      %3223 = vmatprep.subr.bf16.mxu0 %v2930
      %3224 = vmatpush1.bf16.msra.mxu0 %v2929
      %3225 = vmatprep.subr.bf16.mxu0 0
      %3226 = vmatpush1.bf16.msra.mxu0 0
      %3227 = vmatprep.subr.bf16.mxu0 0
      %3228 = vmatpush1.bf16.msra.mxu0 0
      %3229 = vmatprep.subr.bf16.mxu0 0
      %3230 = vmatpush1.bf16.msra.mxu0 0
      %3231 = vmatprep.subr.bf16.mxu0 0
      %3232 = vmatpush1.bf16.msra.mxu0 0
      %3233 = vmatprep.subr.bf16.mxu0 0
      %3234 = vmatpush1.bf16.msra.mxu0 0
      %3235 = vmatprep.subr.bf16.mxu0 0
      %3236 = vmatpush1.bf16.msra.mxu0 0
      %3237 = vmatprep.subr.bf16.mxu0 0
      %3238 = vmatpush1.bf16.msra.mxu0 0
      %3239 = vmatprep.subr.bf16.mxu0 0
      %3240 = vmatpush1.bf16.msra.mxu0 0
      %3241 = vmatprep.subr.bf16.mxu0 0
      %3242 = vmatpush1.bf16.msra.mxu0 0
      %3243 = vmatprep.subr.bf16.mxu0 0
      %3244 = vmatpush1.bf16.msra.mxu0 0
      %3245 = vmatprep.subr.bf16.mxu0 0
      %3246 = vmatpush1.bf16.msra.mxu0 0
      %3247 = vmatprep.subr.bf16.mxu0 0
      %3248 = vmatpush1.bf16.msra.mxu0 0
      %3249 = vmatprep.mubr.bf16.mxu0 0
      %3250 = vmatmul.mubr.bf16.gmra.mrb[0].mxu0 %v3000
      %v3251 = vpop.f32.mrb[0].mxu0
      %v3252 = vadd.f32 %v2642, %v3251
      %v3253 = vpop.f32.mrb[0].mxu0
      %v3254 = vadd.f32 %v2646, %v3253
      %v3255 = vpop.f32.mrb[0].mxu0
      %v3256 = vadd.f32 %v2642, %v3255
      %v3257 = vpop.f32.mrb[0].mxu0
      %v3258 = vadd.f32 %v2646, %v3257
      %3259 = vdwg.mxu0
      %3260 = vmatprep.subr.bf16.mxu0 %v2884
      %3261 = vmatpush1.bf16.msra.mxu0 %v2883
      %3262 = vmatprep.subr.bf16.mxu0 %v2900
      %3263 = vmatpush1.bf16.msra.mxu0 %v2899
      %3264 = vmatprep.subr.bf16.mxu0 %v2916
      %3265 = vmatpush1.bf16.msra.mxu0 %v2915
      %3266 = vmatprep.subr.bf16.mxu0 %v2932
      %3267 = vmatpush1.bf16.msra.mxu0 %v2931
      %3268 = vmatprep.subr.bf16.mxu0 0
      %3269 = vmatpush1.bf16.msra.mxu0 0
      %3270 = vmatprep.subr.bf16.mxu0 0
      %3271 = vmatpush1.bf16.msra.mxu0 0
      %3272 = vmatprep.subr.bf16.mxu0 0
      %3273 = vmatpush1.bf16.msra.mxu0 0
      %3274 = vmatprep.subr.bf16.mxu0 0
      %3275 = vmatpush1.bf16.msra.mxu0 0
      %3276 = vmatprep.subr.bf16.mxu0 0
      %3277 = vmatpush1.bf16.msra.mxu0 0
      %3278 = vmatprep.subr.bf16.mxu0 0
      %3279 = vmatpush1.bf16.msra.mxu0 0
      %3280 = vmatprep.subr.bf16.mxu0 0
      %3281 = vmatpush1.bf16.msra.mxu0 0
      %3282 = vmatprep.subr.bf16.mxu0 0
      %3283 = vmatpush1.bf16.msra.mxu0 0
      %3284 = vmatprep.subr.bf16.mxu0 0
      %3285 = vmatpush1.bf16.msra.mxu0 0
      %3286 = vmatprep.subr.bf16.mxu0 0
      %3287 = vmatpush1.bf16.msra.mxu0 0
      %3288 = vmatprep.subr.bf16.mxu0 0
      %3289 = vmatpush1.bf16.msra.mxu0 0
      %3290 = vmatprep.subr.bf16.mxu0 0
      %3291 = vmatpush1.bf16.msra.mxu0 0
      %3292 = vmatprep.mubr.bf16.mxu0 0
      %3293 = vmatmul.mubr.bf16.gmra.mrb[0].mxu0 %v3000
      %v3294 = vpop.f32.mrb[0].mxu0
      %v3295 = vadd.f32 %v2650, %v3294
      %v3296 = vpop.f32.mrb[0].mxu0
      %v3297 = vadd.f32 %v2654, %v3296
      %v3298 = vpop.f32.mrb[0].mxu0
      %v3299 = vadd.f32 %v2650, %v3298
      %v3300 = vpop.f32.mrb[0].mxu0
      %v3301 = vadd.f32 %v2654, %v3300
      %3302 = vdwg.mxu0
      %3303 = vmatprep.subr.bf16.mxu0 %v2886
      %3304 = vmatpush1.bf16.msra.mxu0 %v2885
      %3305 = vmatprep.subr.bf16.mxu0 %v2902
      %3306 = vmatpush1.bf16.msra.mxu0 %v2901
      %3307 = vmatprep.subr.bf16.mxu0 %v2918
      %3308 = vmatpush1.bf16.msra.mxu0 %v2917
      %3309 = vmatprep.subr.bf16.mxu0 %v2934
      %3310 = vmatpush1.bf16.msra.mxu0 %v2933
      %3311 = vmatprep.subr.bf16.mxu0 0
      %3312 = vmatpush1.bf16.msra.mxu0 0
      %3313 = vmatprep.subr.bf16.mxu0 0
      %3314 = vmatpush1.bf16.msra.mxu0 0
      %3315 = vmatprep.subr.bf16.mxu0 0
      %3316 = vmatpush1.bf16.msra.mxu0 0
      %3317 = vmatprep.subr.bf16.mxu0 0
      %3318 = vmatpush1.bf16.msra.mxu0 0
      %3319 = vmatprep.subr.bf16.mxu0 0
      %3320 = vmatpush1.bf16.msra.mxu0 0
      %3321 = vmatprep.subr.bf16.mxu0 0
      %3322 = vmatpush1.bf16.msra.mxu0 0
      %3323 = vmatprep.subr.bf16.mxu0 0
      %3324 = vmatpush1.bf16.msra.mxu0 0
      %3325 = vmatprep.subr.bf16.mxu0 0
      %3326 = vmatpush1.bf16.msra.mxu0 0
      %3327 = vmatprep.subr.bf16.mxu0 0
      %3328 = vmatpush1.bf16.msra.mxu0 0
      %3329 = vmatprep.subr.bf16.mxu0 0
      %3330 = vmatpush1.bf16.msra.mxu0 0
      %3331 = vmatprep.subr.bf16.mxu0 0
      %3332 = vmatpush1.bf16.msra.mxu0 0
      %3333 = vmatprep.subr.bf16.mxu0 0
      %3334 = vmatpush1.bf16.msra.mxu0 0
      %3335 = vmatprep.mubr.bf16.mxu0 0
      %3336 = vmatmul.mubr.bf16.gmra.mrb[0].mxu0 %v3000
      %v3337 = vpop.f32.mrb[0].mxu0
      %v3338 = vadd.f32 %v2658, %v3337
      %v3339 = vpop.f32.mrb[0].mxu0
      %v3340 = vadd.f32 %v2662, %v3339
      %v3341 = vpop.f32.mrb[0].mxu0
      %v3342 = vadd.f32 %v2658, %v3341
      %v3343 = vpop.f32.mrb[0].mxu0
      %v3344 = vadd.f32 %v2662, %v3343
      %3345 = vdwg.mxu0
      %v3346 = vmax.f32 %v3037, 0.0
      %v3347 = vmax.f32 %v3039, 0.0
      %v3348 = vmax.f32 %v3080, 0.0
      %v3349 = vmax.f32 %v3082, 0.0
      %v3350 = vmax.f32 %v3123, 0.0
      %v3351 = vmax.f32 %v3125, 0.0
      %v3352 = vmax.f32 %v3166, 0.0
      %v3353 = vmax.f32 %v3168, 0.0
      %v3354 = vmax.f32 %v3209, 0.0
      %v3355 = vmax.f32 %v3211, 0.0
      %v3356 = vmax.f32 %v3252, 0.0
      %v3357 = vmax.f32 %v3254, 0.0
      %v3358 = vmax.f32 %v3295, 0.0
      %v3359 = vmax.f32 %v3297, 0.0
      %v3360 = vmax.f32 %v3338, 0.0
      %v3361 = vmax.f32 %v3340, 0.0
      %v3362 = vmax.f32 %v3041, 0.0
      %v3363 = vmax.f32 %v3043, 0.0
      %v3364 = vmax.f32 %v3084, 0.0
      %v3365 = vmax.f32 %v3086, 0.0
      %v3366 = vmax.f32 %v3127, 0.0
      %v3367 = vmax.f32 %v3129, 0.0
      %v3368 = vmax.f32 %v3170, 0.0
      %v3369 = vmax.f32 %v3172, 0.0
      %v3370 = vmax.f32 %v3213, 0.0
      %v3371 = vmax.f32 %v3215, 0.0
      %v3372 = vmax.f32 %v3256, 0.0
      %v3373 = vmax.f32 %v3258, 0.0
      %v3374 = vmax.f32 %v3299, 0.0
      %v3375 = vmax.f32 %v3301, 0.0
      %v3376 = vmax.f32 %v3342, 0.0
      %v3377 = vmax.f32 %v3344, 0.0
      %v3378 = vpack.c.bf16 %v3362, %v3346
      %v3379 = vpack.c.bf16 %v3363, %v3347
      %v3380 = vpack.c.bf16 %v3364, %v3348
      %v3381 = vpack.c.bf16 %v3365, %v3349
      %v3382 = vpack.c.bf16 %v3366, %v3350
      %v3383 = vpack.c.bf16 %v3367, %v3351
      %v3384 = vpack.c.bf16 %v3368, %v3352
      %v3385 = vpack.c.bf16 %v3369, %v3353
      %v3386 = vpack.c.bf16 %v3370, %v3354
      %v3387 = vpack.c.bf16 %v3371, %v3355
      %v3388 = vpack.c.bf16 %v3372, %v3356
      %v3389 = vpack.c.bf16 %v3373, %v3357
      %v3390 = vpack.c.bf16 %v3374, %v3358
      %v3391 = vpack.c.bf16 %v3375, %v3359
      %v3392 = vpack.c.bf16 %v3376, %v3360
      %v3393 = vpack.c.bf16 %v3377, %v3361
      %v3394 = vld [vmem:[%s763] sm:$0xf]
      %v3395 = vld [vmem:[%s763 + $0x4] sm:$0xf]
      %v3396 = vld [vmem:[%s763 + $0x8] sm:$0xf]
      %v3397 = vld [vmem:[%s763 + $0xc] sm:$0xf]
      %v3398 = vld [vmem:[%s763 + $0x10] sm:$0xf]
      %v3399 = vld [vmem:[%s763 + $0x14] sm:$0xf]
      %v3400 = vld [vmem:[%s763 + $0x18] sm:$0xf]
      %v3401 = vld [vmem:[%s763 + $0x1c] sm:$0xf]
      %v3402 = vld [vmem:[%s763 + $0x20] sm:$0xf]
      %v3403 = vld [vmem:[%s763 + $0x24] sm:$0xf]
      %v3404 = vld [vmem:[%s763 + $0x28] sm:$0xf]
      %v3405 = vld [vmem:[%s763 + $0x2c] sm:$0xf]
      %v3406 = vld [vmem:[%s763 + $0x30] sm:$0xf]
      %v3407 = vld [vmem:[%s763 + $0x34] sm:$0xf]
      %v3408 = vld [vmem:[%s763 + $0x38] sm:$0xf]
      %v3409 = vld [vmem:[%s763 + $0x3c] sm:$0xf]
      %v3410 = vld [vmem:[%s763 + $0x40] sm:$0xf]
      %v3411 = vld [vmem:[%s763 + $0x44] sm:$0xf]
      %v3412 = vld [vmem:[%s763 + $0x48] sm:$0xf]
      %v3413 = vld [vmem:[%s763 + $0x4c] sm:$0xf]
      %v3414 = vld [vmem:[%s763 + $0x50] sm:$0xf]
      %v3415 = vld [vmem:[%s763 + $0x54] sm:$0xf]
      %v3416 = vld [vmem:[%s763 + $0x58] sm:$0xf]
      %v3417 = vld [vmem:[%s763 + $0x5c] sm:$0xf]
      %v3418 = vld [vmem:[%s763 + $0x60] sm:$0xf]
      %v3419 = vld [vmem:[%s763 + $0x64] sm:$0xf]
      %v3420 = vld [vmem:[%s763 + $0x68] sm:$0xf]
      %v3421 = vld [vmem:[%s763 + $0x6c] sm:$0xf]
      %v3422 = vld [vmem:[%s763 + $0x70] sm:$0xf]
      %v3423 = vld [vmem:[%s763 + $0x74] sm:$0xf]
      %v3424 = vld [vmem:[%s763 + $0x78] sm:$0xf]
      %v3425 = vld [vmem:[%s763 + $0x7c] sm:$0xf]
      %v3426 = vld [vmem:[%s763 + $0x80] sm:$0xf]
      %v3427 = vld [vmem:[%s763 + $0x84] sm:$0xf]
      %v3428 = vld [vmem:[%s763 + $0x88] sm:$0xf]
      %v3429 = vld [vmem:[%s763 + $0x8c] sm:$0xf]
      %v3430 = vld [vmem:[%s763 + $0x90] sm:$0xf]
      %v3431 = vld [vmem:[%s763 + $0x94] sm:$0xf]
      %v3432 = vld [vmem:[%s763 + $0x98] sm:$0xf]
      %v3433 = vld [vmem:[%s763 + $0x9c] sm:$0xf]
      %v3434 = vld [vmem:[%s763 + $0xa0] sm:$0xf]
      %v3435 = vld [vmem:[%s763 + $0xa4] sm:$0xf]
      %v3436 = vld [vmem:[%s763 + $0xa8] sm:$0xf]
      %v3437 = vld [vmem:[%s763 + $0xac] sm:$0xf]
      %v3438 = vld [vmem:[%s763 + $0xb0] sm:$0xf]
      %v3439 = vld [vmem:[%s763 + $0xb4] sm:$0xf]
      %v3440 = vld [vmem:[%s763 + $0xb8] sm:$0xf]
      %v3441 = vld [vmem:[%s763 + $0xbc] sm:$0xf]
      %v3442 = vld [vmem:[%s763 + $0xc0] sm:$0xf]
      %v3443 = vld [vmem:[%s763 + $0xc4] sm:$0xf]
      %v3444 = vld [vmem:[%s763 + $0xc8] sm:$0xf]
      %v3445 = vld [vmem:[%s763 + $0xcc] sm:$0xf]
      %v3446 = vld [vmem:[%s763 + $0xd0] sm:$0xf]
      %v3447 = vld [vmem:[%s763 + $0xd4] sm:$0xf]
      %v3448 = vld [vmem:[%s763 + $0xd8] sm:$0xf]
      %v3449 = vld [vmem:[%s763 + $0xdc] sm:$0xf]
      %v3450 = vld [vmem:[%s763 + $0xe0] sm:$0xf]
      %v3451 = vld [vmem:[%s763 + $0xe4] sm:$0xf]
      %v3452 = vld [vmem:[%s763 + $0xe8] sm:$0xf]
      %v3453 = vld [vmem:[%s763 + $0xec] sm:$0xf]
      %v3454 = vld [vmem:[%s763 + $0xf0] sm:$0xf]
      %v3455 = vld [vmem:[%s763 + $0xf4] sm:$0xf]
      %v3456 = vld [vmem:[%s763 + $0xf8] sm:$0xf]
      %v3457 = vld [vmem:[%s763 + $0xfc] sm:$0xf]
      %v3458 = vld [vmem:[%s763 + $0x100] sm:$0xf]
      %v3459 = vld [vmem:[%s763 + $0x104] sm:$0xf]
      %v3460 = vld [vmem:[%s763 + $0x108] sm:$0xf]
      %v3461 = vld [vmem:[%s763 + $0x10c] sm:$0xf]
      %v3462 = vld [vmem:[%s763 + $0x110] sm:$0xf]
      %v3463 = vld [vmem:[%s763 + $0x114] sm:$0xf]
      %v3464 = vld [vmem:[%s763 + $0x118] sm:$0xf]
      %v3465 = vld [vmem:[%s763 + $0x11c] sm:$0xf]
      %v3466 = vld [vmem:[%s763 + $0x120] sm:$0xf]
      %v3467 = vld [vmem:[%s763 + $0x124] sm:$0xf]
      %v3468 = vld [vmem:[%s763 + $0x128] sm:$0xf]
      %v3469 = vld [vmem:[%s763 + $0x12c] sm:$0xf]
      %v3470 = vld [vmem:[%s763 + $0x130] sm:$0xf]
      %v3471 = vld [vmem:[%s763 + $0x134] sm:$0xf]
      %v3472 = vld [vmem:[%s763 + $0x138] sm:$0xf]
      %v3473 = vld [vmem:[%s763 + $0x13c] sm:$0xf]
      %v3474 = vld [vmem:[%s763 + $0x140] sm:$0xf]
      %v3475 = vld [vmem:[%s763 + $0x144] sm:$0xf]
      %v3476 = vld [vmem:[%s763 + $0x148] sm:$0xf]
      %v3477 = vld [vmem:[%s763 + $0x14c] sm:$0xf]
      %v3478 = vld [vmem:[%s763 + $0x150] sm:$0xf]
      %v3479 = vld [vmem:[%s763 + $0x154] sm:$0xf]
      %v3480 = vld [vmem:[%s763 + $0x158] sm:$0xf]
      %v3481 = vld [vmem:[%s763 + $0x15c] sm:$0xf]
      %v3482 = vld [vmem:[%s763 + $0x160] sm:$0xf]
      %v3483 = vld [vmem:[%s763 + $0x164] sm:$0xf]
      %v3484 = vld [vmem:[%s763 + $0x168] sm:$0xf]
      %v3485 = vld [vmem:[%s763 + $0x16c] sm:$0xf]
      %v3486 = vld [vmem:[%s763 + $0x170] sm:$0xf]
      %v3487 = vld [vmem:[%s763 + $0x174] sm:$0xf]
      %v3488 = vld [vmem:[%s763 + $0x178] sm:$0xf]
      %v3489 = vld [vmem:[%s763 + $0x17c] sm:$0xf]
      %v3490 = vld [vmem:[%s763 + $0x180] sm:$0xf]
      %v3491 = vld [vmem:[%s763 + $0x184] sm:$0xf]
      %v3492 = vld [vmem:[%s763 + $0x188] sm:$0xf]
      %v3493 = vld [vmem:[%s763 + $0x18c] sm:$0xf]
      %v3494 = vld [vmem:[%s763 + $0x190] sm:$0xf]
      %v3495 = vld [vmem:[%s763 + $0x194] sm:$0xf]
      %v3496 = vld [vmem:[%s763 + $0x198] sm:$0xf]
      %v3497 = vld [vmem:[%s763 + $0x19c] sm:$0xf]
      %v3498 = vld [vmem:[%s763 + $0x1a0] sm:$0xf]
      %v3499 = vld [vmem:[%s763 + $0x1a4] sm:$0xf]
      %v3500 = vld [vmem:[%s763 + $0x1a8] sm:$0xf]
      %v3501 = vld [vmem:[%s763 + $0x1ac] sm:$0xf]
      %v3502 = vld [vmem:[%s763 + $0x1b0] sm:$0xf]
      %v3503 = vld [vmem:[%s763 + $0x1b4] sm:$0xf]
      %v3504 = vld [vmem:[%s763 + $0x1b8] sm:$0xf]
      %v3505 = vld [vmem:[%s763 + $0x1bc] sm:$0xf]
      %v3506 = vld [vmem:[%s763 + $0x1c0] sm:$0xf]
      %v3507 = vld [vmem:[%s763 + $0x1c4] sm:$0xf]
      %v3508 = vld [vmem:[%s763 + $0x1c8] sm:$0xf]
      %v3509 = vld [vmem:[%s763 + $0x1cc] sm:$0xf]
      %v3510 = vld [vmem:[%s763 + $0x1d0] sm:$0xf]
      %v3511 = vld [vmem:[%s763 + $0x1d4] sm:$0xf]
      %v3512 = vld [vmem:[%s763 + $0x1d8] sm:$0xf]
      %v3513 = vld [vmem:[%s763 + $0x1dc] sm:$0xf]
      %v3514 = vld [vmem:[%s763 + $0x1e0] sm:$0xf]
      %v3515 = vld [vmem:[%s763 + $0x1e4] sm:$0xf]
      %v3516 = vld [vmem:[%s763 + $0x1e8] sm:$0xf]
      %v3517 = vld [vmem:[%s763 + $0x1ec] sm:$0xf]
      %v3518 = vld [vmem:[%s763 + $0x1f0] sm:$0xf]
      %v3519 = vld [vmem:[%s763 + $0x1f4] sm:$0xf]
      %v3520 = vld [vmem:[%s763 + $0x1f8] sm:$0xf]
      %v3521 = vld [vmem:[%s763 + $0x1fc] sm:$0xf]
      %v3522 = vld [vmem:[%s763 + $0x200] sm:$0xf]
      %v3523 = vld [vmem:[%s763 + $0x204] sm:$0xf]
      %v3524 = vld [vmem:[%s763 + $0x208] sm:$0xf]
      %v3525 = vld [vmem:[%s763 + $0x20c] sm:$0xf]
      %v3526 = vld [vmem:[%s763 + $0x210] sm:$0xf]
      %v3527 = vld [vmem:[%s763 + $0x214] sm:$0xf]
      %v3528 = vld [vmem:[%s763 + $0x218] sm:$0xf]
      %v3529 = vld [vmem:[%s763 + $0x21c] sm:$0xf]
      %v3530 = vld [vmem:[%s763 + $0x220] sm:$0xf]
      %v3531 = vld [vmem:[%s763 + $0x224] sm:$0xf]
      %v3532 = vld [vmem:[%s763 + $0x228] sm:$0xf]
      %v3533 = vld [vmem:[%s763 + $0x22c] sm:$0xf]
      %v3534 = vld [vmem:[%s763 + $0x230] sm:$0xf]
      %v3535 = vld [vmem:[%s763 + $0x234] sm:$0xf]
      %v3536 = vld [vmem:[%s763 + $0x238] sm:$0xf]
      %v3537 = vld [vmem:[%s763 + $0x23c] sm:$0xf]
      %v3538 = vld [vmem:[%s763 + $0x240] sm:$0xf]
      %v3539 = vld [vmem:[%s763 + $0x244] sm:$0xf]
      %v3540 = vld [vmem:[%s763 + $0x248] sm:$0xf]
      %v3541 = vld [vmem:[%s763 + $0x24c] sm:$0xf]
      %v3542 = vld [vmem:[%s763 + $0x250] sm:$0xf]
      %v3543 = vld [vmem:[%s763 + $0x254] sm:$0xf]
      %v3544 = vld [vmem:[%s763 + $0x258] sm:$0xf]
      %v3545 = vld [vmem:[%s763 + $0x25c] sm:$0xf]
      %v3546 = vld [vmem:[%s763 + $0x260] sm:$0xf]
      %v3547 = vld [vmem:[%s763 + $0x264] sm:$0xf]
      %v3548 = vld [vmem:[%s763 + $0x268] sm:$0xf]
      %v3549 = vld [vmem:[%s763 + $0x26c] sm:$0xf]
      %v3550 = vld [vmem:[%s763 + $0x270] sm:$0xf]
      %v3551 = vld [vmem:[%s763 + $0x274] sm:$0xf]
      %v3552 = vld [vmem:[%s763 + $0x278] sm:$0xf]
      %v3553 = vld [vmem:[%s763 + $0x27c] sm:$0xf]
      %v3554 = vld [vmem:[%s763 + $0x280] sm:$0xf]
      %v3555 = vld [vmem:[%s763 + $0x284] sm:$0xf]
      %v3556 = vld [vmem:[%s763 + $0x288] sm:$0xf]
      %v3557 = vld [vmem:[%s763 + $0x28c] sm:$0xf]
      %v3558 = vld [vmem:[%s763 + $0x290] sm:$0xf]
      %v3559 = vld [vmem:[%s763 + $0x294] sm:$0xf]
      %v3560 = vld [vmem:[%s763 + $0x298] sm:$0xf]
      %v3561 = vld [vmem:[%s763 + $0x29c] sm:$0xf]
      %v3562 = vld [vmem:[%s763 + $0x2a0] sm:$0xf]
      %v3563 = vld [vmem:[%s763 + $0x2a4] sm:$0xf]
      %v3564 = vld [vmem:[%s763 + $0x2a8] sm:$0xf]
      %v3565 = vld [vmem:[%s763 + $0x2ac] sm:$0xf]
      %v3566 = vld [vmem:[%s763 + $0x2b0] sm:$0xf]
      %v3567 = vld [vmem:[%s763 + $0x2b4] sm:$0xf]
      %v3568 = vld [vmem:[%s763 + $0x2b8] sm:$0xf]
      %v3569 = vld [vmem:[%s763 + $0x2bc] sm:$0xf]
      %v3570 = vld [vmem:[%s763 + $0x2c0] sm:$0xf]
      %v3571 = vld [vmem:[%s763 + $0x2c4] sm:$0xf]
      %v3572 = vld [vmem:[%s763 + $0x2c8] sm:$0xf]
      %v3573 = vld [vmem:[%s763 + $0x2cc] sm:$0xf]
      %v3574 = vld [vmem:[%s763 + $0x2d0] sm:$0xf]
      %v3575 = vld [vmem:[%s763 + $0x2d4] sm:$0xf]
      %v3576 = vld [vmem:[%s763 + $0x2d8] sm:$0xf]
      %v3577 = vld [vmem:[%s763 + $0x2dc] sm:$0xf]
      %v3578 = vld [vmem:[%s763 + $0x2e0] sm:$0xf]
      %v3579 = vld [vmem:[%s763 + $0x2e4] sm:$0xf]
      %v3580 = vld [vmem:[%s763 + $0x2e8] sm:$0xf]
      %v3581 = vld [vmem:[%s763 + $0x2ec] sm:$0xf]
      %v3582 = vld [vmem:[%s763 + $0x2f0] sm:$0xf]
      %v3583 = vld [vmem:[%s763 + $0x2f4] sm:$0xf]
      %v3584 = vld [vmem:[%s763 + $0x2f8] sm:$0xf]
      %v3585 = vld [vmem:[%s763 + $0x2fc] sm:$0xf]
      %v3586 = vld [vmem:[%s763 + $0x300] sm:$0xf]
      %v3587 = vld [vmem:[%s763 + $0x304] sm:$0xf]
      %v3588 = vld [vmem:[%s763 + $0x308] sm:$0xf]
      %v3589 = vld [vmem:[%s763 + $0x30c] sm:$0xf]
      %v3590 = vld [vmem:[%s763 + $0x310] sm:$0xf]
      %v3591 = vld [vmem:[%s763 + $0x314] sm:$0xf]
      %v3592 = vld [vmem:[%s763 + $0x318] sm:$0xf]
      %v3593 = vld [vmem:[%s763 + $0x31c] sm:$0xf]
      %v3594 = vld [vmem:[%s763 + $0x320] sm:$0xf]
      %v3595 = vld [vmem:[%s763 + $0x324] sm:$0xf]
      %v3596 = vld [vmem:[%s763 + $0x328] sm:$0xf]
      %v3597 = vld [vmem:[%s763 + $0x32c] sm:$0xf]
      %v3598 = vld [vmem:[%s763 + $0x330] sm:$0xf]
      %v3599 = vld [vmem:[%s763 + $0x334] sm:$0xf]
      %v3600 = vld [vmem:[%s763 + $0x338] sm:$0xf]
      %v3601 = vld [vmem:[%s763 + $0x33c] sm:$0xf]
      %v3602 = vld [vmem:[%s763 + $0x340] sm:$0xf]
      %v3603 = vld [vmem:[%s763 + $0x344] sm:$0xf]
      %v3604 = vld [vmem:[%s763 + $0x348] sm:$0xf]
      %v3605 = vld [vmem:[%s763 + $0x34c] sm:$0xf]
      %v3606 = vld [vmem:[%s763 + $0x350] sm:$0xf]
      %v3607 = vld [vmem:[%s763 + $0x354] sm:$0xf]
      %v3608 = vld [vmem:[%s763 + $0x358] sm:$0xf]
      %v3609 = vld [vmem:[%s763 + $0x35c] sm:$0xf]
      %v3610 = vld [vmem:[%s763 + $0x360] sm:$0xf]
      %v3611 = vld [vmem:[%s763 + $0x364] sm:$0xf]
      %v3612 = vld [vmem:[%s763 + $0x368] sm:$0xf]
      %v3613 = vld [vmem:[%s763 + $0x36c] sm:$0xf]
      %v3614 = vld [vmem:[%s763 + $0x370] sm:$0xf]
      %v3615 = vld [vmem:[%s763 + $0x374] sm:$0xf]
      %v3616 = vld [vmem:[%s763 + $0x378] sm:$0xf]
      %v3617 = vld [vmem:[%s763 + $0x37c] sm:$0xf]
      %v3618 = vld [vmem:[%s763 + $0x380] sm:$0xf]
      %v3619 = vld [vmem:[%s763 + $0x384] sm:$0xf]
      %v3620 = vld [vmem:[%s763 + $0x388] sm:$0xf]
      %v3621 = vld [vmem:[%s763 + $0x38c] sm:$0xf]
      %v3622 = vld [vmem:[%s763 + $0x390] sm:$0xf]
      %v3623 = vld [vmem:[%s763 + $0x394] sm:$0xf]
      %v3624 = vld [vmem:[%s763 + $0x398] sm:$0xf]
      %v3625 = vld [vmem:[%s763 + $0x39c] sm:$0xf]
      %v3626 = vld [vmem:[%s763 + $0x3a0] sm:$0xf]
      %v3627 = vld [vmem:[%s763 + $0x3a4] sm:$0xf]
      %v3628 = vld [vmem:[%s763 + $0x3a8] sm:$0xf]
      %v3629 = vld [vmem:[%s763 + $0x3ac] sm:$0xf]
      %v3630 = vld [vmem:[%s763 + $0x3b0] sm:$0xf]
      %v3631 = vld [vmem:[%s763 + $0x3b4] sm:$0xf]
      %v3632 = vld [vmem:[%s763 + $0x3b8] sm:$0xf]
      %v3633 = vld [vmem:[%s763 + $0x3bc] sm:$0xf]
      %v3634 = vld [vmem:[%s763 + $0x3c0] sm:$0xf]
      %v3635 = vld [vmem:[%s763 + $0x3c4] sm:$0xf]
      %v3636 = vld [vmem:[%s763 + $0x3c8] sm:$0xf]
      %v3637 = vld [vmem:[%s763 + $0x3cc] sm:$0xf]
      %v3638 = vld [vmem:[%s763 + $0x3d0] sm:$0xf]
      %v3639 = vld [vmem:[%s763 + $0x3d4] sm:$0xf]
      %v3640 = vld [vmem:[%s763 + $0x3d8] sm:$0xf]
      %v3641 = vld [vmem:[%s763 + $0x3dc] sm:$0xf]
      %v3642 = vld [vmem:[%s763 + $0x3e0] sm:$0xf]
      %v3643 = vld [vmem:[%s763 + $0x3e4] sm:$0xf]
      %v3644 = vld [vmem:[%s763 + $0x3e8] sm:$0xf]
      %v3645 = vld [vmem:[%s763 + $0x3ec] sm:$0xf]
      %v3646 = vld [vmem:[%s763 + $0x3f0] sm:$0xf]
      %v3647 = vld [vmem:[%s763 + $0x3f4] sm:$0xf]
      %v3648 = vld [vmem:[%s763 + $0x3f8] sm:$0xf]
      %v3649 = vld [vmem:[%s763 + $0x3fc] sm:$0xf]
      %v3650 = vld [vmem:[%s766] sm:$0x1]
      %v3652 = vlaneseq
      %v3653 = vshrl.u32 %v3652, 7
      %v3654 = vsub.s32 0, %v3653
      %v3655 = vrot.slane %v3650, %v3654
      %v3913 = vunpack.c.l.b16 %v3394
      %v3914 = vunpack.c.l.b16 %v3395
      %v3915 = vunpack.c.l.b16 %v3396
      %v3916 = vunpack.c.l.b16 %v3397
      %v3917 = vunpack.c.l.b16 %v3398
      %v3918 = vunpack.c.l.b16 %v3399
      %v3919 = vunpack.c.l.b16 %v3400
      %v3920 = vunpack.c.l.b16 %v3401
      %v3921 = vunpack.c.l.b16 %v3402
      %v3922 = vunpack.c.l.b16 %v3403
      %v3923 = vunpack.c.l.b16 %v3404
      %v3924 = vunpack.c.l.b16 %v3405
      %v3925 = vunpack.c.l.b16 %v3406
      %v3926 = vunpack.c.l.b16 %v3407
      %v3927 = vunpack.c.l.b16 %v3408
      %v3928 = vunpack.c.l.b16 %v3409
      %v3929 = vunpack.c.l.b16 %v3410
      %v3930 = vunpack.c.l.b16 %v3411
      %v3931 = vunpack.c.l.b16 %v3412
      %v3932 = vunpack.c.l.b16 %v3413
      %v3933 = vunpack.c.l.b16 %v3414
      %v3934 = vunpack.c.l.b16 %v3415
      %v3935 = vunpack.c.l.b16 %v3416
      %v3936 = vunpack.c.l.b16 %v3417
      %v3937 = vunpack.c.l.b16 %v3418
      %v3938 = vunpack.c.l.b16 %v3419
      %v3939 = vunpack.c.l.b16 %v3420
      %v3940 = vunpack.c.l.b16 %v3421
      %v3941 = vunpack.c.l.b16 %v3422
      %v3942 = vunpack.c.l.b16 %v3423
      %v3943 = vunpack.c.l.b16 %v3424
      %v3944 = vunpack.c.l.b16 %v3425
      %v3945 = vunpack.c.l.b16 %v3426
      %v3946 = vunpack.c.l.b16 %v3427
      %v3947 = vunpack.c.l.b16 %v3428
      %v3948 = vunpack.c.l.b16 %v3429
      %v3949 = vunpack.c.l.b16 %v3430
      %v3950 = vunpack.c.l.b16 %v3431
      %v3951 = vunpack.c.l.b16 %v3432
      %v3952 = vunpack.c.l.b16 %v3433
      %v3953 = vunpack.c.l.b16 %v3434
      %v3954 = vunpack.c.l.b16 %v3435
      %v3955 = vunpack.c.l.b16 %v3436
      %v3956 = vunpack.c.l.b16 %v3437
      %v3957 = vunpack.c.l.b16 %v3438
      %v3958 = vunpack.c.l.b16 %v3439
      %v3959 = vunpack.c.l.b16 %v3440
      %v3960 = vunpack.c.l.b16 %v3441
      %v3961 = vunpack.c.l.b16 %v3442
      %v3962 = vunpack.c.l.b16 %v3443
      %v3963 = vunpack.c.l.b16 %v3444
      %v3964 = vunpack.c.l.b16 %v3445
      %v3965 = vunpack.c.l.b16 %v3446
      %v3966 = vunpack.c.l.b16 %v3447
      %v3967 = vunpack.c.l.b16 %v3448
      %v3968 = vunpack.c.l.b16 %v3449
      %v3969 = vunpack.c.l.b16 %v3450
      %v3970 = vunpack.c.l.b16 %v3451
      %v3971 = vunpack.c.l.b16 %v3452
      %v3972 = vunpack.c.l.b16 %v3453
      %v3973 = vunpack.c.l.b16 %v3454
      %v3974 = vunpack.c.l.b16 %v3455
      %v3975 = vunpack.c.l.b16 %v3456
      %v3976 = vunpack.c.l.b16 %v3457
      %v3977 = vunpack.c.l.b16 %v3458
      %v3978 = vunpack.c.l.b16 %v3459
      %v3979 = vunpack.c.l.b16 %v3460
      %v3980 = vunpack.c.l.b16 %v3461
      %v3981 = vunpack.c.l.b16 %v3462
      %v3982 = vunpack.c.l.b16 %v3463
      %v3983 = vunpack.c.l.b16 %v3464
      %v3984 = vunpack.c.l.b16 %v3465
      %v3985 = vunpack.c.l.b16 %v3466
      %v3986 = vunpack.c.l.b16 %v3467
      %v3987 = vunpack.c.l.b16 %v3468
      %v3988 = vunpack.c.l.b16 %v3469
      %v3989 = vunpack.c.l.b16 %v3470
      %v3990 = vunpack.c.l.b16 %v3471
      %v3991 = vunpack.c.l.b16 %v3472
      %v3992 = vunpack.c.l.b16 %v3473
      %v3993 = vunpack.c.l.b16 %v3474
      %v3994 = vunpack.c.l.b16 %v3475
      %v3995 = vunpack.c.l.b16 %v3476
      %v3996 = vunpack.c.l.b16 %v3477
      %v3997 = vunpack.c.l.b16 %v3478
      %v3998 = vunpack.c.l.b16 %v3479
      %v3999 = vunpack.c.l.b16 %v3480
      %v4000 = vunpack.c.l.b16 %v3481
      %v4001 = vunpack.c.l.b16 %v3482
      %v4002 = vunpack.c.l.b16 %v3483
      %v4003 = vunpack.c.l.b16 %v3484
      %v4004 = vunpack.c.l.b16 %v3485
      %v4005 = vunpack.c.l.b16 %v3486
      %v4006 = vunpack.c.l.b16 %v3487
      %v4007 = vunpack.c.l.b16 %v3488
      %v4008 = vunpack.c.l.b16 %v3489
      %v4009 = vunpack.c.l.b16 %v3490
      %v4010 = vunpack.c.l.b16 %v3491
      %v4011 = vunpack.c.l.b16 %v3492
      %v4012 = vunpack.c.l.b16 %v3493
      %v4013 = vunpack.c.l.b16 %v3494
      %v4014 = vunpack.c.l.b16 %v3495
      %v4015 = vunpack.c.l.b16 %v3496
      %v4016 = vunpack.c.l.b16 %v3497
      %v4017 = vunpack.c.l.b16 %v3498
      %v4018 = vunpack.c.l.b16 %v3499
      %v4019 = vunpack.c.l.b16 %v3500
      %v4020 = vunpack.c.l.b16 %v3501
      %v4021 = vunpack.c.l.b16 %v3502
      %v4022 = vunpack.c.l.b16 %v3503
      %v4023 = vunpack.c.l.b16 %v3504
      %v4024 = vunpack.c.l.b16 %v3505
      %v4025 = vunpack.c.l.b16 %v3506
      %v4026 = vunpack.c.l.b16 %v3507
      %v4027 = vunpack.c.l.b16 %v3508
      %v4028 = vunpack.c.l.b16 %v3509
      %v4029 = vunpack.c.l.b16 %v3510
      %v4030 = vunpack.c.l.b16 %v3511
      %v4031 = vunpack.c.l.b16 %v3512
      %v4032 = vunpack.c.l.b16 %v3513
      %v4033 = vunpack.c.l.b16 %v3514
      %v4034 = vunpack.c.l.b16 %v3515
      %v4035 = vunpack.c.l.b16 %v3516
      %v4036 = vunpack.c.l.b16 %v3517
      %v4037 = vunpack.c.l.b16 %v3518
      %v4038 = vunpack.c.l.b16 %v3519
      %v4039 = vunpack.c.l.b16 %v3520
      %v4040 = vunpack.c.l.b16 %v3521
      %v4041 = vunpack.c.l.b16 %v3522
      %v4042 = vunpack.c.l.b16 %v3523
      %v4043 = vunpack.c.l.b16 %v3524
      %v4044 = vunpack.c.l.b16 %v3525
      %v4045 = vunpack.c.l.b16 %v3526
      %v4046 = vunpack.c.l.b16 %v3527
      %v4047 = vunpack.c.l.b16 %v3528
      %v4048 = vunpack.c.l.b16 %v3529
      %v4049 = vunpack.c.l.b16 %v3530
      %v4050 = vunpack.c.l.b16 %v3531
      %v4051 = vunpack.c.l.b16 %v3532
      %v4052 = vunpack.c.l.b16 %v3533
      %v4053 = vunpack.c.l.b16 %v3534
      %v4054 = vunpack.c.l.b16 %v3535
      %v4055 = vunpack.c.l.b16 %v3536
      %v4056 = vunpack.c.l.b16 %v3537
      %v4057 = vunpack.c.l.b16 %v3538
      %v4058 = vunpack.c.l.b16 %v3539
      %v4059 = vunpack.c.l.b16 %v3540
      %v4060 = vunpack.c.l.b16 %v3541
      %v4061 = vunpack.c.l.b16 %v3542
      %v4062 = vunpack.c.l.b16 %v3543
      %v4063 = vunpack.c.l.b16 %v3544
      %v4064 = vunpack.c.l.b16 %v3545
      %v4065 = vunpack.c.l.b16 %v3546
      %v4066 = vunpack.c.l.b16 %v3547
      %v4067 = vunpack.c.l.b16 %v3548
      %v4068 = vunpack.c.l.b16 %v3549
      %v4069 = vunpack.c.l.b16 %v3550
      %v4070 = vunpack.c.l.b16 %v3551
      %v4071 = vunpack.c.l.b16 %v3552
      %v4072 = vunpack.c.l.b16 %v3553
      %v4073 = vunpack.c.l.b16 %v3554
      %v4074 = vunpack.c.l.b16 %v3555
      %v4075 = vunpack.c.l.b16 %v3556
      %v4076 = vunpack.c.l.b16 %v3557
      %v4077 = vunpack.c.l.b16 %v3558
      %v4078 = vunpack.c.l.b16 %v3559
      %v4079 = vunpack.c.l.b16 %v3560
      %v4080 = vunpack.c.l.b16 %v3561
      %v4081 = vunpack.c.l.b16 %v3562
      %v4082 = vunpack.c.l.b16 %v3563
      %v4083 = vunpack.c.l.b16 %v3564
      %v4084 = vunpack.c.l.b16 %v3565
      %v4085 = vunpack.c.l.b16 %v3566
      %v4086 = vunpack.c.l.b16 %v3567
      %v4087 = vunpack.c.l.b16 %v3568
      %v4088 = vunpack.c.l.b16 %v3569
      %v4089 = vunpack.c.l.b16 %v3570
      %v4090 = vunpack.c.l.b16 %v3571
      %v4091 = vunpack.c.l.b16 %v3572
      %v4092 = vunpack.c.l.b16 %v3573
      %v4093 = vunpack.c.l.b16 %v3574
      %v4094 = vunpack.c.l.b16 %v3575
      %v4095 = vunpack.c.l.b16 %v3576
      %v4096 = vunpack.c.l.b16 %v3577
      %v4097 = vunpack.c.l.b16 %v3578
      %v4098 = vunpack.c.l.b16 %v3579
      %v4099 = vunpack.c.l.b16 %v3580
      %v4100 = vunpack.c.l.b16 %v3581
      %v4101 = vunpack.c.l.b16 %v3582
      %v4102 = vunpack.c.l.b16 %v3583
      %v4103 = vunpack.c.l.b16 %v3584
      %v4104 = vunpack.c.l.b16 %v3585
      %v4105 = vunpack.c.l.b16 %v3586
      %v4106 = vunpack.c.l.b16 %v3587
      %v4107 = vunpack.c.l.b16 %v3588
      %v4108 = vunpack.c.l.b16 %v3589
      %v4109 = vunpack.c.l.b16 %v3590
      %v4110 = vunpack.c.l.b16 %v3591
      %v4111 = vunpack.c.l.b16 %v3592
      %v4112 = vunpack.c.l.b16 %v3593
      %v4113 = vunpack.c.l.b16 %v3594
      %v4114 = vunpack.c.l.b16 %v3595
      %v4115 = vunpack.c.l.b16 %v3596
      %v4116 = vunpack.c.l.b16 %v3597
      %v4117 = vunpack.c.l.b16 %v3598
      %v4118 = vunpack.c.l.b16 %v3599
      %v4119 = vunpack.c.l.b16 %v3600
      %v4120 = vunpack.c.l.b16 %v3601
      %v4121 = vunpack.c.l.b16 %v3602
      %v4122 = vunpack.c.l.b16 %v3603
      %v4123 = vunpack.c.l.b16 %v3604
      %v4124 = vunpack.c.l.b16 %v3605
      %v4125 = vunpack.c.l.b16 %v3606
      %v4126 = vunpack.c.l.b16 %v3607
      %v4127 = vunpack.c.l.b16 %v3608
      %v4128 = vunpack.c.l.b16 %v3609
      %v4129 = vunpack.c.l.b16 %v3610
      %v4130 = vunpack.c.l.b16 %v3611
      %v4131 = vunpack.c.l.b16 %v3612
      %v4132 = vunpack.c.l.b16 %v3613
      %v4133 = vunpack.c.l.b16 %v3614
      %v4134 = vunpack.c.l.b16 %v3615
      %v4135 = vunpack.c.l.b16 %v3616
      %v4136 = vunpack.c.l.b16 %v3617
      %v4137 = vunpack.c.l.b16 %v3618
      %v4138 = vunpack.c.l.b16 %v3619
      %v4139 = vunpack.c.l.b16 %v3620
      %v4140 = vunpack.c.l.b16 %v3621
      %v4141 = vunpack.c.l.b16 %v3622
      %v4142 = vunpack.c.l.b16 %v3623
      %v4143 = vunpack.c.l.b16 %v3624
      %v4144 = vunpack.c.l.b16 %v3625
      %v4145 = vunpack.c.l.b16 %v3626
      %v4146 = vunpack.c.l.b16 %v3627
      %v4147 = vunpack.c.l.b16 %v3628
      %v4148 = vunpack.c.l.b16 %v3629
      %v4149 = vunpack.c.l.b16 %v3630
      %v4150 = vunpack.c.l.b16 %v3631
      %v4151 = vunpack.c.l.b16 %v3632
      %v4152 = vunpack.c.l.b16 %v3633
      %v4153 = vunpack.c.l.b16 %v3634
      %v4154 = vunpack.c.l.b16 %v3635
      %v4155 = vunpack.c.l.b16 %v3636
      %v4156 = vunpack.c.l.b16 %v3637
      %v4157 = vunpack.c.l.b16 %v3638
      %v4158 = vunpack.c.l.b16 %v3639
      %v4159 = vunpack.c.l.b16 %v3640
      %v4160 = vunpack.c.l.b16 %v3641
      %v4161 = vunpack.c.l.b16 %v3642
      %v4162 = vunpack.c.l.b16 %v3643
      %v4163 = vunpack.c.l.b16 %v3644
      %v4164 = vunpack.c.l.b16 %v3645
      %v4165 = vunpack.c.l.b16 %v3646
      %v4166 = vunpack.c.l.b16 %v3647
      %v4167 = vunpack.c.l.b16 %v3648
      %v4168 = vunpack.c.l.b16 %v3649
      %v4169 = vpack.c.b16 %v3914, %v3913
      %v4170 = vpack.c.b16 %v3916, %v3915
      %v4171 = vpack.c.b16 %v3918, %v3917
      %v4172 = vpack.c.b16 %v3920, %v3919
      %v4173 = vpack.c.b16 %v3922, %v3921
      %v4174 = vpack.c.b16 %v3924, %v3923
      %v4175 = vpack.c.b16 %v3926, %v3925
      %v4176 = vpack.c.b16 %v3928, %v3927
      %v4177 = vpack.c.b16 %v3930, %v3929
      %v4178 = vpack.c.b16 %v3932, %v3931
      %v4179 = vpack.c.b16 %v3934, %v3933
      %v4180 = vpack.c.b16 %v3936, %v3935
      %v4181 = vpack.c.b16 %v3938, %v3937
      %v4182 = vpack.c.b16 %v3940, %v3939
      %v4183 = vpack.c.b16 %v3942, %v3941
      %v4184 = vpack.c.b16 %v3944, %v3943
      %v4185 = vpack.c.b16 %v3946, %v3945
      %v4186 = vpack.c.b16 %v3948, %v3947
      %v4187 = vpack.c.b16 %v3950, %v3949
      %v4188 = vpack.c.b16 %v3952, %v3951
      %v4189 = vpack.c.b16 %v3954, %v3953
      %v4190 = vpack.c.b16 %v3956, %v3955
      %v4191 = vpack.c.b16 %v3958, %v3957
      %v4192 = vpack.c.b16 %v3960, %v3959
      %v4193 = vpack.c.b16 %v3962, %v3961
      %v4194 = vpack.c.b16 %v3964, %v3963
      %v4195 = vpack.c.b16 %v3966, %v3965
      %v4196 = vpack.c.b16 %v3968, %v3967
      %v4197 = vpack.c.b16 %v3970, %v3969
      %v4198 = vpack.c.b16 %v3972, %v3971
      %v4199 = vpack.c.b16 %v3974, %v3973
      %v4200 = vpack.c.b16 %v3976, %v3975
      %v4201 = vpack.c.b16 %v3978, %v3977
      %v4202 = vpack.c.b16 %v3980, %v3979
      %v4203 = vpack.c.b16 %v3982, %v3981
      %v4204 = vpack.c.b16 %v3984, %v3983
      %v4205 = vpack.c.b16 %v3986, %v3985
      %v4206 = vpack.c.b16 %v3988, %v3987
      %v4207 = vpack.c.b16 %v3990, %v3989
      %v4208 = vpack.c.b16 %v3992, %v3991
      %v4209 = vpack.c.b16 %v3994, %v3993
      %v4210 = vpack.c.b16 %v3996, %v3995
      %v4211 = vpack.c.b16 %v3998, %v3997
      %v4212 = vpack.c.b16 %v4000, %v3999
      %v4213 = vpack.c.b16 %v4002, %v4001
      %v4214 = vpack.c.b16 %v4004, %v4003
      %v4215 = vpack.c.b16 %v4006, %v4005
      %v4216 = vpack.c.b16 %v4008, %v4007
      %v4217 = vpack.c.b16 %v4010, %v4009
      %v4218 = vpack.c.b16 %v4012, %v4011
      %v4219 = vpack.c.b16 %v4014, %v4013
      %v4220 = vpack.c.b16 %v4016, %v4015
      %v4221 = vpack.c.b16 %v4018, %v4017
      %v4222 = vpack.c.b16 %v4020, %v4019
      %v4223 = vpack.c.b16 %v4022, %v4021
      %v4224 = vpack.c.b16 %v4024, %v4023
      %v4225 = vpack.c.b16 %v4026, %v4025
      %v4226 = vpack.c.b16 %v4028, %v4027
      %v4227 = vpack.c.b16 %v4030, %v4029
      %v4228 = vpack.c.b16 %v4032, %v4031
      %v4229 = vpack.c.b16 %v4034, %v4033
      %v4230 = vpack.c.b16 %v4036, %v4035
      %v4231 = vpack.c.b16 %v4038, %v4037
      %v4232 = vpack.c.b16 %v4040, %v4039
      %v4233 = vpack.c.b16 %v4042, %v4041
      %v4234 = vpack.c.b16 %v4044, %v4043
      %v4235 = vpack.c.b16 %v4046, %v4045
      %v4236 = vpack.c.b16 %v4048, %v4047
      %v4237 = vpack.c.b16 %v4050, %v4049
      %v4238 = vpack.c.b16 %v4052, %v4051
      %v4239 = vpack.c.b16 %v4054, %v4053
      %v4240 = vpack.c.b16 %v4056, %v4055
      %v4241 = vpack.c.b16 %v4058, %v4057
      %v4242 = vpack.c.b16 %v4060, %v4059
      %v4243 = vpack.c.b16 %v4062, %v4061
      %v4244 = vpack.c.b16 %v4064, %v4063
      %v4245 = vpack.c.b16 %v4066, %v4065
      %v4246 = vpack.c.b16 %v4068, %v4067
      %v4247 = vpack.c.b16 %v4070, %v4069
      %v4248 = vpack.c.b16 %v4072, %v4071
      %v4249 = vpack.c.b16 %v4074, %v4073
      %v4250 = vpack.c.b16 %v4076, %v4075
      %v4251 = vpack.c.b16 %v4078, %v4077
      %v4252 = vpack.c.b16 %v4080, %v4079
      %v4253 = vpack.c.b16 %v4082, %v4081
      %v4254 = vpack.c.b16 %v4084, %v4083
      %v4255 = vpack.c.b16 %v4086, %v4085
      %v4256 = vpack.c.b16 %v4088, %v4087
      %v4257 = vpack.c.b16 %v4090, %v4089
      %v4258 = vpack.c.b16 %v4092, %v4091
      %v4259 = vpack.c.b16 %v4094, %v4093
      %v4260 = vpack.c.b16 %v4096, %v4095
      %v4261 = vpack.c.b16 %v4098, %v4097
      %v4262 = vpack.c.b16 %v4100, %v4099
      %v4263 = vpack.c.b16 %v4102, %v4101
      %v4264 = vpack.c.b16 %v4104, %v4103
      %v4265 = vpack.c.b16 %v4106, %v4105
      %v4266 = vpack.c.b16 %v4108, %v4107
      %v4267 = vpack.c.b16 %v4110, %v4109
      %v4268 = vpack.c.b16 %v4112, %v4111
      %v4269 = vpack.c.b16 %v4114, %v4113
      %v4270 = vpack.c.b16 %v4116, %v4115
      %v4271 = vpack.c.b16 %v4118, %v4117
      %v4272 = vpack.c.b16 %v4120, %v4119
      %v4273 = vpack.c.b16 %v4122, %v4121
      %v4274 = vpack.c.b16 %v4124, %v4123
      %v4275 = vpack.c.b16 %v4126, %v4125
      %v4276 = vpack.c.b16 %v4128, %v4127
      %v4277 = vpack.c.b16 %v4130, %v4129
      %v4278 = vpack.c.b16 %v4132, %v4131
      %v4279 = vpack.c.b16 %v4134, %v4133
      %v4280 = vpack.c.b16 %v4136, %v4135
      %v4281 = vpack.c.b16 %v4138, %v4137
      %v4282 = vpack.c.b16 %v4140, %v4139
      %v4283 = vpack.c.b16 %v4142, %v4141
      %v4284 = vpack.c.b16 %v4144, %v4143
      %v4285 = vpack.c.b16 %v4146, %v4145
      %v4286 = vpack.c.b16 %v4148, %v4147
      %v4287 = vpack.c.b16 %v4150, %v4149
      %v4288 = vpack.c.b16 %v4152, %v4151
      %v4289 = vpack.c.b16 %v4154, %v4153
      %v4290 = vpack.c.b16 %v4156, %v4155
      %v4291 = vpack.c.b16 %v4158, %v4157
      %v4292 = vpack.c.b16 %v4160, %v4159
      %v4293 = vpack.c.b16 %v4162, %v4161
      %v4294 = vpack.c.b16 %v4164, %v4163
      %v4295 = vpack.c.b16 %v4166, %v4165
      %v4296 = vpack.c.b16 %v4168, %v4167
      %4425 = vmatprep.subr.bf16.mxu0 0
      %4426 = vmatpush1.bf16.msra.mxu0 %v4169
      %4427 = vmatprep.subr.bf16.mxu0 0
      %4428 = vmatpush1.bf16.msra.mxu0 %v4170
      %4429 = vmatprep.subr.bf16.mxu0 0
      %4430 = vmatpush1.bf16.msra.mxu0 %v4171
      %4431 = vmatprep.subr.bf16.mxu0 0
      %4432 = vmatpush1.bf16.msra.mxu0 %v4172
      %4433 = vmatprep.subr.bf16.mxu0 0
      %4434 = vmatpush1.bf16.msra.mxu0 %v4173
      %4435 = vmatprep.subr.bf16.mxu0 0
      %4436 = vmatpush1.bf16.msra.mxu0 %v4174
      %4437 = vmatprep.subr.bf16.mxu0 0
      %4438 = vmatpush1.bf16.msra.mxu0 %v4175
      %4439 = vmatprep.subr.bf16.mxu0 0
      %4440 = vmatpush1.bf16.msra.mxu0 %v4176
      %4441 = vmatprep.subr.bf16.mxu0 0
      %4442 = vmatpush1.bf16.msra.mxu0 %v4177
      %4443 = vmatprep.subr.bf16.mxu0 0
      %4444 = vmatpush1.bf16.msra.mxu0 %v4178
      %4445 = vmatprep.subr.bf16.mxu0 0
      %4446 = vmatpush1.bf16.msra.mxu0 %v4179
      %4447 = vmatprep.subr.bf16.mxu0 0
      %4448 = vmatpush1.bf16.msra.mxu0 %v4180
      %4449 = vmatprep.subr.bf16.mxu0 0
      %4450 = vmatpush1.bf16.msra.mxu0 %v4181
      %4451 = vmatprep.subr.bf16.mxu0 0
      %4452 = vmatpush1.bf16.msra.mxu0 %v4182
      %4453 = vmatprep.subr.bf16.mxu0 0
      %4454 = vmatpush1.bf16.msra.mxu0 %v4183
      %4455 = vmatprep.subr.bf16.mxu0 0
      %4456 = vmatpush1.bf16.msra.mxu0 %v4184
      %4457 = vmatprep.mubr.bf16.mxu0 %v3379
      %4458 = vmatmul.mubr.bf16.gmra.mrb[0].mxu0 %v3378
      %v4459 = vpop.f32.mrb[0].mxu0
      %v4460 = vadd.f32 %v3655, %v4459
      %v4461 = vpop.f32.mrb[0].mxu0
      %v4462 = vpop.f32.mrb[0].mxu0
      %v4463 = vadd.f32 %v3655, %v4462
      %v4464 = vpop.f32.mrb[0].mxu0
      %4465 = vdwg.mxu0
      %4466 = vmatprep.subr.bf16.mxu0 0
      %4467 = vmatpush1.bf16.msra.mxu0 %v4185
      %4468 = vmatprep.subr.bf16.mxu0 0
      %4469 = vmatpush1.bf16.msra.mxu0 %v4186
      %4470 = vmatprep.subr.bf16.mxu0 0
      %4471 = vmatpush1.bf16.msra.mxu0 %v4187
      %4472 = vmatprep.subr.bf16.mxu0 0
      %4473 = vmatpush1.bf16.msra.mxu0 %v4188
      %4474 = vmatprep.subr.bf16.mxu0 0
      %4475 = vmatpush1.bf16.msra.mxu0 %v4189
      %4476 = vmatprep.subr.bf16.mxu0 0
      %4477 = vmatpush1.bf16.msra.mxu0 %v4190
      %4478 = vmatprep.subr.bf16.mxu0 0
      %4479 = vmatpush1.bf16.msra.mxu0 %v4191
      %4480 = vmatprep.subr.bf16.mxu0 0
      %4481 = vmatpush1.bf16.msra.mxu0 %v4192
      %4482 = vmatprep.subr.bf16.mxu0 0
      %4483 = vmatpush1.bf16.msra.mxu0 %v4193
      %4484 = vmatprep.subr.bf16.mxu0 0
      %4485 = vmatpush1.bf16.msra.mxu0 %v4194
      %4486 = vmatprep.subr.bf16.mxu0 0
      %4487 = vmatpush1.bf16.msra.mxu0 %v4195
      %4488 = vmatprep.subr.bf16.mxu0 0
      %4489 = vmatpush1.bf16.msra.mxu0 %v4196
      %4490 = vmatprep.subr.bf16.mxu0 0
      %4491 = vmatpush1.bf16.msra.mxu0 %v4197
      %4492 = vmatprep.subr.bf16.mxu0 0
      %4493 = vmatpush1.bf16.msra.mxu0 %v4198
      %4494 = vmatprep.subr.bf16.mxu0 0
      %4495 = vmatpush1.bf16.msra.mxu0 %v4199
      %4496 = vmatprep.subr.bf16.mxu0 0
      %4497 = vmatpush1.bf16.msra.mxu0 %v4200
      %4498 = vmatprep.mubr.bf16.mxu0 %v3381
      %4499 = vmatmul.mubr.bf16.gmra.mrb[0].mxu0 %v3380
      %v4500 = vpop.f32.mrb[0].mxu0
      %v4501 = vadd.f32 %v4460, %v4500
      %v4502 = vpop.f32.mrb[0].mxu0
      %v4503 = vpop.f32.mrb[0].mxu0
      %v4504 = vadd.f32 %v4463, %v4503
      %v4505 = vpop.f32.mrb[0].mxu0
      %4506 = vdwg.mxu0
      %4507 = vmatprep.subr.bf16.mxu0 0
      %4508 = vmatpush1.bf16.msra.mxu0 %v4201
      %4509 = vmatprep.subr.bf16.mxu0 0
      %4510 = vmatpush1.bf16.msra.mxu0 %v4202
      %4511 = vmatprep.subr.bf16.mxu0 0
      %4512 = vmatpush1.bf16.msra.mxu0 %v4203
      %4513 = vmatprep.subr.bf16.mxu0 0
      %4514 = vmatpush1.bf16.msra.mxu0 %v4204
      %4515 = vmatprep.subr.bf16.mxu0 0
      %4516 = vmatpush1.bf16.msra.mxu0 %v4205
      %4517 = vmatprep.subr.bf16.mxu0 0
      %4518 = vmatpush1.bf16.msra.mxu0 %v4206
      %4519 = vmatprep.subr.bf16.mxu0 0
      %4520 = vmatpush1.bf16.msra.mxu0 %v4207
      %4521 = vmatprep.subr.bf16.mxu0 0
      %4522 = vmatpush1.bf16.msra.mxu0 %v4208
      %4523 = vmatprep.subr.bf16.mxu0 0
      %4524 = vmatpush1.bf16.msra.mxu0 %v4209
      %4525 = vmatprep.subr.bf16.mxu0 0
      %4526 = vmatpush1.bf16.msra.mxu0 %v4210
      %4527 = vmatprep.subr.bf16.mxu0 0
      %4528 = vmatpush1.bf16.msra.mxu0 %v4211
      %4529 = vmatprep.subr.bf16.mxu0 0
      %4530 = vmatpush1.bf16.msra.mxu0 %v4212
      %4531 = vmatprep.subr.bf16.mxu0 0
      %4532 = vmatpush1.bf16.msra.mxu0 %v4213
      %4533 = vmatprep.subr.bf16.mxu0 0
      %4534 = vmatpush1.bf16.msra.mxu0 %v4214
      %4535 = vmatprep.subr.bf16.mxu0 0
      %4536 = vmatpush1.bf16.msra.mxu0 %v4215
      %4537 = vmatprep.subr.bf16.mxu0 0
      %4538 = vmatpush1.bf16.msra.mxu0 %v4216
      %4539 = vmatprep.mubr.bf16.mxu0 %v3383
      %4540 = vmatmul.mubr.bf16.gmra.mrb[0].mxu0 %v3382
      %v4541 = vpop.f32.mrb[0].mxu0
      %v4542 = vadd.f32 %v4501, %v4541
      %v4543 = vpop.f32.mrb[0].mxu0
      %v4544 = vpop.f32.mrb[0].mxu0
      %v4545 = vadd.f32 %v4504, %v4544
      %v4546 = vpop.f32.mrb[0].mxu0
      %4547 = vdwg.mxu0
      %4548 = vmatprep.subr.bf16.mxu0 0
      %4549 = vmatpush1.bf16.msra.mxu0 %v4217
      %4550 = vmatprep.subr.bf16.mxu0 0
      %4551 = vmatpush1.bf16.msra.mxu0 %v4218
      %4552 = vmatprep.subr.bf16.mxu0 0
      %4553 = vmatpush1.bf16.msra.mxu0 %v4219
      %4554 = vmatprep.subr.bf16.mxu0 0
      %4555 = vmatpush1.bf16.msra.mxu0 %v4220
      %4556 = vmatprep.subr.bf16.mxu0 0
      %4557 = vmatpush1.bf16.msra.mxu0 %v4221
      %4558 = vmatprep.subr.bf16.mxu0 0
      %4559 = vmatpush1.bf16.msra.mxu0 %v4222
      %4560 = vmatprep.subr.bf16.mxu0 0
      %4561 = vmatpush1.bf16.msra.mxu0 %v4223
      %4562 = vmatprep.subr.bf16.mxu0 0
      %4563 = vmatpush1.bf16.msra.mxu0 %v4224
      %4564 = vmatprep.subr.bf16.mxu0 0
      %4565 = vmatpush1.bf16.msra.mxu0 %v4225
      %4566 = vmatprep.subr.bf16.mxu0 0
      %4567 = vmatpush1.bf16.msra.mxu0 %v4226
      %4568 = vmatprep.subr.bf16.mxu0 0
      %4569 = vmatpush1.bf16.msra.mxu0 %v4227
      %4570 = vmatprep.subr.bf16.mxu0 0
      %4571 = vmatpush1.bf16.msra.mxu0 %v4228
      %4572 = vmatprep.subr.bf16.mxu0 0
      %4573 = vmatpush1.bf16.msra.mxu0 %v4229
      %4574 = vmatprep.subr.bf16.mxu0 0
      %4575 = vmatpush1.bf16.msra.mxu0 %v4230
      %4576 = vmatprep.subr.bf16.mxu0 0
      %4577 = vmatpush1.bf16.msra.mxu0 %v4231
      %4578 = vmatprep.subr.bf16.mxu0 0
      %4579 = vmatpush1.bf16.msra.mxu0 %v4232
      %4580 = vmatprep.mubr.bf16.mxu0 %v3385
      %4581 = vmatmul.mubr.bf16.gmra.mrb[0].mxu0 %v3384
      %v4582 = vpop.f32.mrb[0].mxu0
      %v4583 = vadd.f32 %v4542, %v4582
      %v4584 = vpop.f32.mrb[0].mxu0
      %v4585 = vpop.f32.mrb[0].mxu0
      %v4586 = vadd.f32 %v4545, %v4585
      %v4587 = vpop.f32.mrb[0].mxu0
      %4588 = vdwg.mxu0
      %4589 = vmatprep.subr.bf16.mxu0 0
      %4590 = vmatpush1.bf16.msra.mxu0 %v4233
      %4591 = vmatprep.subr.bf16.mxu0 0
      %4592 = vmatpush1.bf16.msra.mxu0 %v4234
      %4593 = vmatprep.subr.bf16.mxu0 0
      %4594 = vmatpush1.bf16.msra.mxu0 %v4235
      %4595 = vmatprep.subr.bf16.mxu0 0
      %4596 = vmatpush1.bf16.msra.mxu0 %v4236
      %4597 = vmatprep.subr.bf16.mxu0 0
      %4598 = vmatpush1.bf16.msra.mxu0 %v4237
      %4599 = vmatprep.subr.bf16.mxu0 0
      %4600 = vmatpush1.bf16.msra.mxu0 %v4238
      %4601 = vmatprep.subr.bf16.mxu0 0
      %4602 = vmatpush1.bf16.msra.mxu0 %v4239
      %4603 = vmatprep.subr.bf16.mxu0 0
      %4604 = vmatpush1.bf16.msra.mxu0 %v4240
      %4605 = vmatprep.subr.bf16.mxu0 0
      %4606 = vmatpush1.bf16.msra.mxu0 %v4241
      %4607 = vmatprep.subr.bf16.mxu0 0
      %4608 = vmatpush1.bf16.msra.mxu0 %v4242
      %4609 = vmatprep.subr.bf16.mxu0 0
      %4610 = vmatpush1.bf16.msra.mxu0 %v4243
      %4611 = vmatprep.subr.bf16.mxu0 0
      %4612 = vmatpush1.bf16.msra.mxu0 %v4244
      %4613 = vmatprep.subr.bf16.mxu0 0
      %4614 = vmatpush1.bf16.msra.mxu0 %v4245
      %4615 = vmatprep.subr.bf16.mxu0 0
      %4616 = vmatpush1.bf16.msra.mxu0 %v4246
      %4617 = vmatprep.subr.bf16.mxu0 0
      %4618 = vmatpush1.bf16.msra.mxu0 %v4247
      %4619 = vmatprep.subr.bf16.mxu0 0
      %4620 = vmatpush1.bf16.msra.mxu0 %v4248
      %4621 = vmatprep.mubr.bf16.mxu0 %v3387
      %4622 = vmatmul.mubr.bf16.gmra.mrb[0].mxu0 %v3386
      %v4623 = vpop.f32.mrb[0].mxu0
      %v4624 = vadd.f32 %v4583, %v4623
      %v4625 = vpop.f32.mrb[0].mxu0
      %v4626 = vpop.f32.mrb[0].mxu0
      %v4627 = vadd.f32 %v4586, %v4626
      %v4628 = vpop.f32.mrb[0].mxu0
      %4629 = vdwg.mxu0
      %4630 = vmatprep.subr.bf16.mxu0 0
      %4631 = vmatpush1.bf16.msra.mxu0 %v4249
      %4632 = vmatprep.subr.bf16.mxu0 0
      %4633 = vmatpush1.bf16.msra.mxu0 %v4250
      %4634 = vmatprep.subr.bf16.mxu0 0
      %4635 = vmatpush1.bf16.msra.mxu0 %v4251
      %4636 = vmatprep.subr.bf16.mxu0 0
      %4637 = vmatpush1.bf16.msra.mxu0 %v4252
      %4638 = vmatprep.subr.bf16.mxu0 0
      %4639 = vmatpush1.bf16.msra.mxu0 %v4253
      %4640 = vmatprep.subr.bf16.mxu0 0
      %4641 = vmatpush1.bf16.msra.mxu0 %v4254
      %4642 = vmatprep.subr.bf16.mxu0 0
      %4643 = vmatpush1.bf16.msra.mxu0 %v4255
      %4644 = vmatprep.subr.bf16.mxu0 0
      %4645 = vmatpush1.bf16.msra.mxu0 %v4256
      %4646 = vmatprep.subr.bf16.mxu0 0
      %4647 = vmatpush1.bf16.msra.mxu0 %v4257
      %4648 = vmatprep.subr.bf16.mxu0 0
      %4649 = vmatpush1.bf16.msra.mxu0 %v4258
      %4650 = vmatprep.subr.bf16.mxu0 0
      %4651 = vmatpush1.bf16.msra.mxu0 %v4259
      %4652 = vmatprep.subr.bf16.mxu0 0
      %4653 = vmatpush1.bf16.msra.mxu0 %v4260
      %4654 = vmatprep.subr.bf16.mxu0 0
      %4655 = vmatpush1.bf16.msra.mxu0 %v4261
      %4656 = vmatprep.subr.bf16.mxu0 0
      %4657 = vmatpush1.bf16.msra.mxu0 %v4262
      %4658 = vmatprep.subr.bf16.mxu0 0
      %4659 = vmatpush1.bf16.msra.mxu0 %v4263
      %4660 = vmatprep.subr.bf16.mxu0 0
      %4661 = vmatpush1.bf16.msra.mxu0 %v4264
      %4662 = vmatprep.mubr.bf16.mxu0 %v3389
      %4663 = vmatmul.mubr.bf16.gmra.mrb[0].mxu0 %v3388
      %v4664 = vpop.f32.mrb[0].mxu0
      %v4665 = vadd.f32 %v4624, %v4664
      %v4666 = vpop.f32.mrb[0].mxu0
      %v4667 = vpop.f32.mrb[0].mxu0
      %v4668 = vadd.f32 %v4627, %v4667
      %v4669 = vpop.f32.mrb[0].mxu0
      %4670 = vdwg.mxu0
      %4671 = vmatprep.subr.bf16.mxu0 0
      %4672 = vmatpush1.bf16.msra.mxu0 %v4265
      %4673 = vmatprep.subr.bf16.mxu0 0
      %4674 = vmatpush1.bf16.msra.mxu0 %v4266
      %4675 = vmatprep.subr.bf16.mxu0 0
      %4676 = vmatpush1.bf16.msra.mxu0 %v4267
      %4677 = vmatprep.subr.bf16.mxu0 0
      %4678 = vmatpush1.bf16.msra.mxu0 %v4268
      %4679 = vmatprep.subr.bf16.mxu0 0
      %4680 = vmatpush1.bf16.msra.mxu0 %v4269
      %4681 = vmatprep.subr.bf16.mxu0 0
      %4682 = vmatpush1.bf16.msra.mxu0 %v4270
      %4683 = vmatprep.subr.bf16.mxu0 0
      %4684 = vmatpush1.bf16.msra.mxu0 %v4271
      %4685 = vmatprep.subr.bf16.mxu0 0
      %4686 = vmatpush1.bf16.msra.mxu0 %v4272
      %4687 = vmatprep.subr.bf16.mxu0 0
      %4688 = vmatpush1.bf16.msra.mxu0 %v4273
      %4689 = vmatprep.subr.bf16.mxu0 0
      %4690 = vmatpush1.bf16.msra.mxu0 %v4274
      %4691 = vmatprep.subr.bf16.mxu0 0
      %4692 = vmatpush1.bf16.msra.mxu0 %v4275
      %4693 = vmatprep.subr.bf16.mxu0 0
      %4694 = vmatpush1.bf16.msra.mxu0 %v4276
      %4695 = vmatprep.subr.bf16.mxu0 0
      %4696 = vmatpush1.bf16.msra.mxu0 %v4277
      %4697 = vmatprep.subr.bf16.mxu0 0
      %4698 = vmatpush1.bf16.msra.mxu0 %v4278
      %4699 = vmatprep.subr.bf16.mxu0 0
      %4700 = vmatpush1.bf16.msra.mxu0 %v4279
      %4701 = vmatprep.subr.bf16.mxu0 0
      %4702 = vmatpush1.bf16.msra.mxu0 %v4280
      %4703 = vmatprep.mubr.bf16.mxu0 %v3391
      %4704 = vmatmul.mubr.bf16.gmra.mrb[0].mxu0 %v3390
      %v4705 = vpop.f32.mrb[0].mxu0
      %v4706 = vadd.f32 %v4665, %v4705
      %v4707 = vpop.f32.mrb[0].mxu0
      %v4708 = vpop.f32.mrb[0].mxu0
      %v4709 = vadd.f32 %v4668, %v4708
      %v4710 = vpop.f32.mrb[0].mxu0
      %4711 = vdwg.mxu0
      %4712 = vmatprep.subr.bf16.mxu0 0
      %4713 = vmatpush1.bf16.msra.mxu0 %v4281
      %4714 = vmatprep.subr.bf16.mxu0 0
      %4715 = vmatpush1.bf16.msra.mxu0 %v4282
      %4716 = vmatprep.subr.bf16.mxu0 0
      %4717 = vmatpush1.bf16.msra.mxu0 %v4283
      %4718 = vmatprep.subr.bf16.mxu0 0
      %4719 = vmatpush1.bf16.msra.mxu0 %v4284
      %4720 = vmatprep.subr.bf16.mxu0 0
      %4721 = vmatpush1.bf16.msra.mxu0 %v4285
      %4722 = vmatprep.subr.bf16.mxu0 0
      %4723 = vmatpush1.bf16.msra.mxu0 %v4286
      %4724 = vmatprep.subr.bf16.mxu0 0
      %4725 = vmatpush1.bf16.msra.mxu0 %v4287
      %4726 = vmatprep.subr.bf16.mxu0 0
      %4727 = vmatpush1.bf16.msra.mxu0 %v4288
      %4728 = vmatprep.subr.bf16.mxu0 0
      %4729 = vmatpush1.bf16.msra.mxu0 %v4289
      %4730 = vmatprep.subr.bf16.mxu0 0
      %4731 = vmatpush1.bf16.msra.mxu0 %v4290
      %4732 = vmatprep.subr.bf16.mxu0 0
      %4733 = vmatpush1.bf16.msra.mxu0 %v4291
      %4734 = vmatprep.subr.bf16.mxu0 0
      %4735 = vmatpush1.bf16.msra.mxu0 %v4292
      %4736 = vmatprep.subr.bf16.mxu0 0
      %4737 = vmatpush1.bf16.msra.mxu0 %v4293
      %4738 = vmatprep.subr.bf16.mxu0 0
      %4739 = vmatpush1.bf16.msra.mxu0 %v4294
      %4740 = vmatprep.subr.bf16.mxu0 0
      %4741 = vmatpush1.bf16.msra.mxu0 %v4295
      %4742 = vmatprep.subr.bf16.mxu0 0
      %4743 = vmatpush1.bf16.msra.mxu0 %v4296
      %4744 = vmatprep.mubr.bf16.mxu0 %v3393
      %4745 = vmatmul.mubr.bf16.gmra.mrb[0].mxu0 %v3392
      %v4746 = vpop.f32.mrb[0].mxu0
      %v4747 = vadd.f32 %v4706, %v4746
      %v4748 = vpop.f32.mrb[0].mxu0
      %v4749 = vpop.f32.mrb[0].mxu0
      %v4750 = vadd.f32 %v4709, %v4749
      %v4751 = vpop.f32.mrb[0].mxu0
      %4752 = vdwg.mxu0
      %v4753 = vadd.f32 %v2528, %v4747
      %v4754 = vadd.f32 %v2529, %v4750
      %v4755 = vld [vmem:[%s769] sm:$0x1]
      %v4756 = vld [vmem:[%s772] sm:$0x1]
      %v4757 = vsel %vm980, %v4753, 0.0
      %4758 = vadd.xlane.f32.xlu0 %v4757
      %v4759 = vpop.xlane.xlu0 %4758
      %v4760 = vsel %vm980, %v4754, 0.0
      %4761 = vadd.xlane.f32.xlu0 %v4760
      %v4762 = vpop.xlane.xlu0 %4761
      %v4763 = vmul.f32 %v4759, %v2493
      %v4764 = vmul.f32 %v4762, %v2493
      %v4765 = vsub.f32 %v4753, %v4763
      %v4766 = vsub.f32 %v4754, %v4764
      %v4767 = vmul.f32 %v4765, %v4765
      %v4768 = vmul.f32 %v4766, %v4766
      %v4769 = vsel %vm980, %v4767, 0.0
      %4770 = vadd.xlane.f32.xlu0 %v4769
      %v4771 = vpop.xlane.xlu0 %4770
      %v4772 = vsel %vm980, %v4768, 0.0
      %4773 = vadd.xlane.f32.xlu0 %v4772
      %v4774 = vpop.xlane.xlu0 %4773
      %v4775 = vmul.f32 %v4771, %v2493
      %v4776 = vmul.f32 %v4774, %v2493
      %v4777 = vadd.f32 %v4775, 1e-05
      %v4778 = vadd.f32 %v4776, 1e-05
      %v4779 = vrsqrt.pop %v4777
      %v4780 = vrsqrt.pop %v4778
      %v4781 = vmul.f32 %v4765, %v4779
      %v4782 = vmul.f32 %v4766, %v4780
      %v4784 = vlaneseq
      %v4785 = vshrl.u32 %v4784, 7
      %v4786 = vsub.s32 0, %v4785
      %v4787 = vrot.slane %v4755, %v4786
      %v4789 = vmul.f32 %v4781, %v4787
      %v4790 = vmul.f32 %v4782, %v4787
      %v4792 = vlaneseq
      %v4793 = vshrl.u32 %v4792, 7
      %v4794 = vsub.s32 0, %v4793
      %v4795 = vrot.slane %v4756, %v4794
      %v4797 = vadd.f32 %v4789, %v4795
      %v4798 = vadd.f32 %v4790, %v4795
      %4799 = vst.msk [vmem:[#allocation2] sm:$0xff] %vm980, %v4797
      %4800 = vst.msk [vmem:[#allocation2 + $0x8] sm:$0xff] %vm980, %v4798
      %p4801 = scmp.eq.s32.totalorder %s37, 1
      // Predicated region
      $region101: #{transformer_forward.1} parent=95 // pred_check
        %p4802 = pneg %p4801
      $region102: #{transformer_forward.1} parent=95 // pred_check_branch
        %4804 = sbr.rel (%p4802) target = $region104
      $region103: #{transformer_forward.1} parent=95 // pred_region
        %v4805 = vpack.c.bf16 %v4798, %v4797
        %v4806 = vld [vmem:[%s16] sm:$0xf]
        %v4807 = vld [vmem:[%s16 + $0x4] sm:$0xf]
        %v4808 = vld [vmem:[%s16 + $0x8] sm:$0xf]
        %v4809 = vld [vmem:[%s16 + $0xc] sm:$0xf]
        %v4810 = vld [vmem:[%s16 + $0x10] sm:$0xf]
        %v4811 = vld [vmem:[%s16 + $0x14] sm:$0xf]
        %v4812 = vld [vmem:[%s16 + $0x18] sm:$0xf]
        %v4813 = vld [vmem:[%s16 + $0x1c] sm:$0xf]
        %v4814 = vld [vmem:[%s17] sm:$0x1]
        %v4816 = vlaneseq
        %v4817 = vshrl.u32 %v4816, 7
        %v4818 = vsub.s32 0, %v4817
        %v4819 = vrot.slane %v4814, %v4818
        %v4829 = vunpack.c.l.b16 %v4806
        %v4830 = vunpack.c.l.b16 %v4807
        %v4831 = vunpack.c.l.b16 %v4808
        %v4832 = vunpack.c.l.b16 %v4809
        %v4833 = vunpack.c.l.b16 %v4810
        %v4834 = vunpack.c.l.b16 %v4811
        %v4835 = vunpack.c.l.b16 %v4812
        %v4836 = vunpack.c.l.b16 %v4813
        %v4837 = vpack.c.b16 %v4830, %v4829
        %v4838 = vpack.c.b16 %v4832, %v4831
        %v4839 = vpack.c.b16 %v4834, %v4833
        %v4840 = vpack.c.b16 %v4836, %v4835
        %v4846 = vsel %vm980, %v4805, 0
        %4848 = vmatprep.subr.bf16.mxu0 0
        %4849 = vmatpush1.bf16.msra.mxu0 %v4837
        %4850 = vmatprep.subr.bf16.mxu0 0
        %4851 = vmatpush1.bf16.msra.mxu0 %v4838
        %4852 = vmatprep.subr.bf16.mxu0 0
        %4853 = vmatpush1.bf16.msra.mxu0 %v4839
        %4854 = vmatprep.subr.bf16.mxu0 0
        %4855 = vmatpush1.bf16.msra.mxu0 %v4840
        %4856 = vmatprep.subr.bf16.mxu0 0
        %4857 = vmatpush1.bf16.msra.mxu0 0
        %4858 = vmatprep.subr.bf16.mxu0 0
        %4859 = vmatpush1.bf16.msra.mxu0 0
        %4860 = vmatprep.subr.bf16.mxu0 0
        %4861 = vmatpush1.bf16.msra.mxu0 0
        %4862 = vmatprep.subr.bf16.mxu0 0
        %4863 = vmatpush1.bf16.msra.mxu0 0
        %4864 = vmatprep.subr.bf16.mxu0 0
        %4865 = vmatpush1.bf16.msra.mxu0 0
        %4866 = vmatprep.subr.bf16.mxu0 0
        %4867 = vmatpush1.bf16.msra.mxu0 0
        %4868 = vmatprep.subr.bf16.mxu0 0
        %4869 = vmatpush1.bf16.msra.mxu0 0
        %4870 = vmatprep.subr.bf16.mxu0 0
        %4871 = vmatpush1.bf16.msra.mxu0 0
        %4872 = vmatprep.subr.bf16.mxu0 0
        %4873 = vmatpush1.bf16.msra.mxu0 0
        %4874 = vmatprep.subr.bf16.mxu0 0
        %4875 = vmatpush1.bf16.msra.mxu0 0
        %4876 = vmatprep.subr.bf16.mxu0 0
        %4877 = vmatpush1.bf16.msra.mxu0 0
        %4878 = vmatprep.subr.bf16.mxu0 0
        %4879 = vmatpush1.bf16.msra.mxu0 0
        %4880 = vmatprep.mubr.bf16.mxu0 0
        %4881 = vmatmul.mubr.bf16.gmra.mrb[0].mxu0 %v4846
        %v4882 = vpop.f32.mrb[0].mxu0
        %v4883 = vadd.f32 %v4819, %v4882
        %v4884 = vpop.f32.mrb[0].mxu0
        %v4885 = vpop.f32.mrb[0].mxu0
        %v4886 = vadd.f32 %v4819, %v4885
        %v4887 = vpop.f32.mrb[0].mxu0
        %4888 = vdwg.mxu0
        %v4889 = vmul.f32 %v4883, 0.5
        %v4890 = vmul.f32 %v4886, 0.5
        %v4891 = vmul.f32 %v4883, 0.70710677
        %v4892 = vmul.f32 %v4886, 0.70710677
        %v4893 = verf.f32.pop %v4891
        %v4894 = verf.f32.pop %v4892
        %v4895 = vadd.f32 %v4893, 1.0
        %v4896 = vadd.f32 %v4894, 1.0
        %v4897 = vmul.f32 %v4889, %v4895
        %v4898 = vmul.f32 %v4890, %v4896
        %v4899 = vpack.c.bf16 %v4898, %v4897
        %v4900 = vld [vmem:[%s18] sm:$0xf]
        %v4901 = vld [vmem:[%s18 + $0x4] sm:$0xf]
        %v4902 = vld [vmem:[%s18 + $0x8] sm:$0xf]
        %v4903 = vld [vmem:[%s18 + $0xc] sm:$0xf]
        %v4904 = vld [vmem:[%s18 + $0x10] sm:$0xf]
        %v4905 = vld [vmem:[%s18 + $0x14] sm:$0xf]
        %v4906 = vld [vmem:[%s18 + $0x18] sm:$0xf]
        %v4907 = vld [vmem:[%s18 + $0x1c] sm:$0xf]
        %v4908 = vld [vmem:[%s19] sm:$0x1]
        %v4910 = vlaneseq
        %v4911 = vshrl.u32 %v4910, 7
        %v4912 = vsub.s32 0, %v4911
        %v4913 = vrot.slane %v4908, %v4912
        %v4923 = vunpack.c.l.b16 %v4900
        %v4924 = vunpack.c.l.b16 %v4901
        %v4925 = vunpack.c.l.b16 %v4902
        %v4926 = vunpack.c.l.b16 %v4903
        %v4927 = vunpack.c.l.b16 %v4904
        %v4928 = vunpack.c.l.b16 %v4905
        %v4929 = vunpack.c.l.b16 %v4906
        %v4930 = vunpack.c.l.b16 %v4907
        %v4931 = vpack.c.b16 %v4924, %v4923
        %v4932 = vpack.c.b16 %v4926, %v4925
        %v4933 = vpack.c.b16 %v4928, %v4927
        %v4934 = vpack.c.b16 %v4930, %v4929
        %v4940 = vsel %vm980, %v4899, 0
        %4942 = vmatprep.subr.bf16.mxu0 0
        %4943 = vmatpush1.bf16.msra.mxu0 %v4931
        %4944 = vmatprep.subr.bf16.mxu0 0
        %4945 = vmatpush1.bf16.msra.mxu0 %v4932
        %4946 = vmatprep.subr.bf16.mxu0 0
        %4947 = vmatpush1.bf16.msra.mxu0 %v4933
        %4948 = vmatprep.subr.bf16.mxu0 0
        %4949 = vmatpush1.bf16.msra.mxu0 %v4934
        %4950 = vmatprep.subr.bf16.mxu0 0
        %4951 = vmatpush1.bf16.msra.mxu0 0
        %4952 = vmatprep.subr.bf16.mxu0 0
        %4953 = vmatpush1.bf16.msra.mxu0 0
        %4954 = vmatprep.subr.bf16.mxu0 0
        %4955 = vmatpush1.bf16.msra.mxu0 0
        %4956 = vmatprep.subr.bf16.mxu0 0
        %4957 = vmatpush1.bf16.msra.mxu0 0
        %4958 = vmatprep.subr.bf16.mxu0 0
        %4959 = vmatpush1.bf16.msra.mxu0 0
        %4960 = vmatprep.subr.bf16.mxu0 0
        %4961 = vmatpush1.bf16.msra.mxu0 0
        %4962 = vmatprep.subr.bf16.mxu0 0
        %4963 = vmatpush1.bf16.msra.mxu0 0
        %4964 = vmatprep.subr.bf16.mxu0 0
        %4965 = vmatpush1.bf16.msra.mxu0 0
        %4966 = vmatprep.subr.bf16.mxu0 0
        %4967 = vmatpush1.bf16.msra.mxu0 0
        %4968 = vmatprep.subr.bf16.mxu0 0
        %4969 = vmatpush1.bf16.msra.mxu0 0
        %4970 = vmatprep.subr.bf16.mxu0 0
        %4971 = vmatpush1.bf16.msra.mxu0 0
        %4972 = vmatprep.subr.bf16.mxu0 0
        %4973 = vmatpush1.bf16.msra.mxu0 0
        %4974 = vmatprep.mubr.bf16.mxu0 0
        %4975 = vmatmul.mubr.bf16.gmra.mrb[0].mxu0 %v4940
        %v4976 = vpop.f32.mrb[0].mxu0
        %v4977 = vadd.f32 %v4913, %v4976
        %v4978 = vpop.f32.mrb[0].mxu0
        %v4979 = vpop.f32.mrb[0].mxu0
        %v4980 = vadd.f32 %v4913, %v4979
        %v4981 = vpop.f32.mrb[0].mxu0
        %4982 = vdwg.mxu0
        %4983 = vmax.xlane.f32.xlu0 %v4977
        %v4984 = vpop.xlane.xlu0 %4983
        %4985 = vmax.xlane.f32.xlu0 %v4980
        %v4986 = vpop.xlane.xlu0 %4985
        %v4987 = vsub.f32 %v4977, %v4984
        %v4988 = vsub.f32 %v4980, %v4986
        %v4989 = vmul.f32 %v4987, 1.442695
        %v4990 = vpow.pop %v4989
        %v4991 = vmul.f32 %v4988, 1.442695
        %v4992 = vpow.pop %v4991
        %4993 = vadd.xlane.f32.xlu0 %v4990
        %v4994 = vpop.xlane.xlu0 %4993
        %4995 = vadd.xlane.f32.xlu0 %v4992
        %v4996 = vpop.xlane.xlu0 %4995
        %v4997 = vrcp.pop %v4994
        %v4998 = vmul.f32 %v4990, %v4997
        %v4999 = vrcp.pop %v4996
        %v5000 = vmul.f32 %v4992, %v4999
        %5001 = vst [vmem:[%s20] sm:$0xff] %v4998
        %5002 = vst [vmem:[%s20 + $0x8] sm:$0xff] %v5000
      $region104: #{transformer_forward.1} parent=95 // pred_fallthru
        _
      // Predicated region
      $region105: #{transformer_forward.1} parent=95 // pred_check
        %p5003 = pneg %p509
      $region106: #{transformer_forward.1} parent=95 // pred_check_branch
        %5005 = sbr.rel (%p5003) target = $region108
      $region107: #{transformer_forward.1} parent=95 // pred_region
        _
      $region108: #{transformer_forward.1} parent=95 // pred_fallthru
        _
      // Predicated region
      $region109: #{transformer_forward.1} parent=95 // pred_check
        %p5006 = pneg %p509
      $region110: #{transformer_forward.1} parent=95 // pred_check_branch
        %5008 = sbr.rel (%p5006) target = $region112
      $region111: #{transformer_forward.1} parent=95 // pred_region
        _
      $region112: #{transformer_forward.1} parent=95 // pred_fallthru
        _
    $region96: #{transformer_forward.1} parent=5 // pred_fallthru
      _
    %p5009 = scmp.le.s32.totalorder 2, %s32
    // Predicated region
    $region113: #{transformer_forward.1} parent=5 // pred_check
      %p5010 = pneg %p5009
    $region114: #{transformer_forward.1} parent=5 // pred_check_branch
      %5012 = sbr.rel (%p5010) target = $region116
    $region115: #{transformer_forward.1} parent=5 // pred_region
      %s5013 = ssub.s32 %s32, 2
    $region116: #{transformer_forward.1} parent=5 // pred_fallthru
      _
  $region6: #{transformer_forward.1} parent=0 // loop_footer
    %s36 = sadd.s32 1, %s32
  $region7: #{transformer_forward.1} parent=0 // loop_footer_branch
    %31 = sbr.rel target = $region3
  $region8: #{transformer_forward.1} parent=0 // loop_exit
    _

</llo_original>
